<compile_context>
chip_gen: v7x
topology: tpu7x:2x2x1
jax: 0.10.0
libtpu: 0.0.40
codegen_flags: <defaults>
</compile_context>

<pallas_src>
import functools

import jax
import jax.numpy as jnp
from jax.experimental import pallas as pl
from jax.experimental.pallas import tpu as pltpu


# ------------------------------- helpers -------------------------------------

def _round_up(x, m):
    return ((x + m - 1) // m) * m


def _c8(c):
    """Channel storage size: multiple of 8 (sublane), NOT 128 (no lane pad)."""
    return _round_up(c, 8)


_VMEM_BUDGET = 20 * 1024 * 1024              # safe on v5e/v6e/v7x
_TM_CANDIDATES = (512, 256, 128, 64, 32, 16, 8)


def _vmem_bytes(tm, k, n):
    # bf16 A tile (double-buffered) + resident bf16 B + f32 residual + f32 raw
    # + bf16 act outputs (double-buffered) + BN vectors.
    return 2 * (tm * k + k * n) * 2 + 2 * tm * n * (4 + 4 + 2) + 4 * n * 4


def _choose_tm(m, k, n):
    """M tile: fits the VMEM budget, divides M, prefers >=2 blocks (v7x 2 TCs)."""
    fitting = [c for c in _TM_CANDIDATES if _vmem_bytes(c, k, n) <= _VMEM_BUDGET]
    if not fitting:
        # TODO(synk): K-tiled fallback for extremely large K*N; not hit here.
        fitting = [_TM_CANDIDATES[-1]]
    for c in fitting:                       # largest tile with >= 2 M blocks
        if m % c == 0 and m // c >= 2:
            return c, 0
    for c in fitting:                       # otherwise largest divisor
        if m % c == 0:
            return c, 0
    tm = min(fitting[0], 128)               # ragged M: single small pad
    return tm, _round_up(m, tm) - m


def _compiler_params(est_bytes):
    kwargs = dict(dimension_semantics=("parallel",))
    if est_bytes > 12 * 1024 * 1024:        # only raise the limit when needed
        kwargs["vmem_limit_bytes"] = min(2 * est_bytes, 48 * 1024 * 1024)
    return pltpu.CompilerParams(**kwargs)


# --------------------------- fused matmul kernels -----------------------------
# Each kernel sees the FULL K and FULL N of its matmul; the grid is only over M.

def _mm_plain_kernel(a_ref, b_ref, o_ref):
    o_ref[...] = jnp.dot(a_ref[...], b_ref[...],
                         preferred_element_type=jnp.float32).astype(o_ref.dtype)


def _mm_bn_relu_kernel(a_ref, b_ref, scale_ref, shift_ref, o_ref):
    acc = jnp.dot(a_ref[...], b_ref[...], preferred_element_type=jnp.float32)
    o_ref[...] = jnp.maximum(acc * scale_ref[...] + shift_ref[...],
                             0.0).astype(o_ref.dtype)


def _mm_dual_kernel(a_ref, b_ref, scale_ref, shift_ref, raw_ref, act_ref):
    """conv (no residual); emits raw output (f32) and relu(bn(raw)) (bf16)."""
    raw = jnp.dot(a_ref[...], b_ref[...], preferred_element_type=jnp.float32)
    raw_ref[...] = raw.astype(raw_ref.dtype)
    act_ref[...] = jnp.maximum(raw * scale_ref[...] + shift_ref[...],
                               0.0).astype(act_ref.dtype)


def _mm_add_dual_kernel(a_ref, b_ref, res_ref, scale_ref, shift_ref,
                        raw_ref, act_ref):
    """conv + f32 residual add; emits raw sum (f32) and relu(bn(raw)) (bf16)."""
    raw = jnp.dot(a_ref[...], b_ref[...],
                  preferred_element_type=jnp.float32) + res_ref[...]
    raw_ref[...] = raw.astype(raw_ref.dtype)
    act_ref[...] = jnp.maximum(raw * scale_ref[...] + shift_ref[...],
                               0.0).astype(act_ref.dtype)


def _call_mm(kernel, a, b, extras, extra_specs, out_shape, out_specs, tm):
    m, k = a.shape
    n = b.shape[1]
    return pl.pallas_call(
        kernel,
        out_shape=out_shape,
        grid=(m // tm,),
        in_specs=[pl.BlockSpec((tm, k), lambda i: (i, 0)),
                  pl.BlockSpec((k, n), lambda i: (0, 0))] + list(extra_specs),
        out_specs=out_specs,
        compiler_params=_compiler_params(_vmem_bytes(tm, k, n)),
    )(a, b, *extras)


def matmul_plain(a, b, out_dtype):
    m, k = a.shape
    n = b.shape[1]
    tm, pad_m = _choose_tm(m, k, n)
    if pad_m:
        a = jnp.pad(a, ((0, pad_m), (0, 0)))
    row = pl.BlockSpec((tm, n), lambda i: (i, 0))
    out = _call_mm(_mm_plain_kernel, a, b, [], [],
                   jax.ShapeDtypeStruct((m + pad_m, n), out_dtype), row, tm)
    return out[:m] if pad_m else out


def matmul_bn_relu(a, b, scale, shift, out_dtype=jnp.bfloat16):
    m, k = a.shape
    n = b.shape[1]
    tm, pad_m = _choose_tm(m, k, n)
    if pad_m:
        a = jnp.pad(a, ((0, pad_m), (0, 0)))
    row = pl.BlockSpec((tm, n), lambda i: (i, 0))
    vec = pl.BlockSpec((1, n), lambda i: (0, 0))
    out = _call_mm(_mm_bn_relu_kernel, a, b, [scale, shift], [vec, vec],
                   jax.ShapeDtypeStruct((m + pad_m, n), out_dtype), row, tm)
    return out[:m] if pad_m else out


def matmul_dual(a, b, scale, shift):
    m, k = a.shape
    n = b.shape[1]
    tm, pad_m = _choose_tm(m, k, n)
    if pad_m:
        a = jnp.pad(a, ((0, pad_m), (0, 0)))
    mp = m + pad_m
    row = pl.BlockSpec((tm, n), lambda i: (i, 0))
    vec = pl.BlockSpec((1, n), lambda i: (0, 0))
    out_shape = (jax.ShapeDtypeStruct((mp, n), jnp.float32),    # raw (residual)
                 jax.ShapeDtypeStruct((mp, n), jnp.bfloat16))   # activated
    raw, act = _call_mm(_mm_dual_kernel, a, b, [scale, shift], [vec, vec],
                        out_shape, (row, row), tm)
    return (raw[:m], act[:m]) if pad_m else (raw, act)


def matmul_add_dual(a, b, res, scale, shift):
    m, k = a.shape
    n = b.shape[1]
    tm, pad_m = _choose_tm(m, k, n)
    if pad_m:
        a = jnp.pad(a, ((0, pad_m), (0, 0)))
        res = jnp.pad(res, ((0, pad_m), (0, 0)))
    mp = m + pad_m
    row = pl.BlockSpec((tm, n), lambda i: (i, 0))
    vec = pl.BlockSpec((1, n), lambda i: (0, 0))
    out_shape = (jax.ShapeDtypeStruct((mp, n), jnp.float32),
                 jax.ShapeDtypeStruct((mp, n), jnp.bfloat16))
    raw, act = _call_mm(_mm_add_dual_kernel, a, b, [res, scale, shift],
                        [row, vec, vec], out_shape, (row, row), tm)
    return (raw[:m], act[:m]) if pad_m else (raw, act)


# ------------------------- decoder Pallas kernels -----------------------------

def _mean_hw_kernel(x_ref, o_ref, acc_ref, *, inv_hw):
    i = pl.program_id(0)

    @pl.when(i == 0)
    def _():
        acc_ref[...] = jnp.zeros_like(acc_ref)

    acc_ref[...] += jnp.sum(x_ref[...].astype(jnp.float32), axis=1)

    @pl.when(i == pl.num_programs(0) - 1)
    def _():
        o_ref[...] = acc_ref[...] * inv_hw


def pallas_mean_hw(x3d):
    n, hw, c = x3d.shape
    chunk = hw
    if hw > 512:
        for cand in (512, 256, 128, 64, 32, 16, 8, 1):
            if hw % cand == 0:
                chunk = cand
                break
    return pl.pallas_call(
        functools.partial(_mean_hw_kernel, inv_hw=1.0 / hw),
        out_shape=jax.ShapeDtypeStruct((n, c), jnp.float32),
        grid=(hw // chunk,),
        in_specs=[pl.BlockSpec((n, chunk, c), lambda i: (0, i, 0))],
        out_specs=pl.BlockSpec((n, c), lambda i: (0, 0)),
        scratch_shapes=[pltpu.VMEM((n, c), jnp.float32)],
        compiler_params=pltpu.CompilerParams(
            dimension_semantics=("arbitrary",)),
    )(x3d)


def _linear_kernel(x_ref, w_ref, b_ref, o_ref):
    o_ref[...] = (jnp.dot(x_ref[...], w_ref[...],
                          preferred_element_type=jnp.float32) + b_ref[...])


def pallas_linear(x, w, b):
    m, k = x.shape
    n = w.shape[1]
    return pl.pallas_call(
        _linear_kernel,
        out_shape=jax.ShapeDtypeStruct((m, n), jnp.float32),
        grid=(1,),
        in_specs=[pl.BlockSpec((m, k), lambda i: (0, 0)),
                  pl.BlockSpec((k, n), lambda i: (0, 0)),
                  pl.BlockSpec((1, n), lambda i: (0, 0))],
        out_specs=pl.BlockSpec((m, n), lambda i: (0, 0)),
    )(x, w, b)


# ------------------------------ JAX glue ops ----------------------------------

def im2col(x, kh, kw, stride, pad):
    """Patch matrix with K = kh*kw*C real columns (no per-tap lane padding)."""
    n, h, w, c = x.shape
    xp = jnp.pad(x, ((0, 0), (pad, pad), (pad, pad), (0, 0)))
    ho = (h + 2 * pad - kh) // stride + 1
    wo = (w + 2 * pad - kw) // stride + 1
    cols = [xp[:, ki:ki + stride * ho:stride, kj:kj + stride * wo:stride, :]
            for ki in range(kh) for kj in range(kw)]
    col = jnp.concatenate(cols, axis=-1)          # order: (ki, kj, c)
    return col.reshape(n * ho * wo, kh * kw * c), (n, ho, wo)


def conv3x3_bn_relu(x, wb, stride, scale, shift):
    col, (n, ho, wo) = im2col(x, 3, 3, stride, 1)
    y = matmul_bn_relu(col, wb, scale, shift)
    return y.reshape(n, ho, wo, wb.shape[1])


def conv3x3_dual(x, wb, stride, scale, shift):
    col, (n, ho, wo) = im2col(x, 3, 3, stride, 1)
    cout = wb.shape[1]
    raw, act = matmul_dual(col, wb, scale, shift)
    return raw.reshape(n, ho, wo, cout), act.reshape(n, ho, wo, cout)


def conv3x3_add_dual(x, wb, stride, residual, scale, shift):
    col, (n, ho, wo) = im2col(x, 3, 3, stride, 1)
    cout = wb.shape[1]
    res2d = residual.reshape(n * ho * wo, cout)               # f32 residual
    raw, act = matmul_add_dual(col, wb, res2d, scale, shift)
    return raw.reshape(n, ho, wo, cout), act.reshape(n, ho, wo, cout)


def conv1x1(x, wb, stride):
    xs = x[:, ::stride, ::stride, :]
    n, ho, wo, cin = xs.shape
    a = xs.reshape(n * ho * wo, cin).astype(jnp.bfloat16)
    y = matmul_plain(a, wb, jnp.float32)
    return y.reshape(n, ho, wo, wb.shape[1])


# ----------------------------- model structure --------------------------------

def wide_resnet_forward(packed, x_nchw):
    # PyTorch NCHW input -> NHWC bf16 (channels stored at a multiple of 8).
    x = jnp.transpose(x_nchw, (0, 2, 3, 1)).astype(jnp.bfloat16)
    cin = x.shape[-1]
    if packed["cin_store"] > cin:
        x = jnp.pad(x, ((0, 0), (0, 0), (0, 0), (0, packed["cin_store"] - cin)))

    blocks = packed["blocks"]
    # Stem conv fused with the first block's BN1+ReLU (dual output).
    x_raw, x_act = conv3x3_dual(x, packed["stem_wb"], 1,
                                blocks[0]["bn1_scale"], blocks[0]["bn1_shift"])

    for i, blk in enumerate(blocks):
        stride = blk["stride"]
        residual = (x_raw if blk["shortcut_wb"] is None
                    else conv1x1(x_raw, blk["shortcut_wb"], stride))
        # conv1 fused with BN2+ReLU epilogue.
        h = conv3x3_bn_relu(x_act, blk["w1b"], 1,
                            blk["bn2_scale"], blk["bn2_shift"])
        # nn.Dropout(p=0.0) -> identity.
        if i + 1 < len(blocks):
            nscale, nshift = blocks[i + 1]["bn1_scale"], blocks[i + 1]["bn1_shift"]
        else:
            nscale, nshift = packed["dec_scale"], packed["dec_shift"]
        # conv2 fused with residual add + NEXT BN+ReLU (dual output).
        x_raw, x_act = conv3x3_add_dual(h, blk["w2b"], stride, residual,
                                        nscale, nshift)

    # Decoder: BN+ReLU already fused into the last conv2; mean over (h,w); Linear.
    n, ho, wo, c = x_act.shape
    feat = pallas_mean_hw(x_act.reshape(n, ho * wo, c))
    return pallas_linear(feat, packed["dec_w"], packed["dec_b"])


# --------------------------- parameter handling --------------------------------

def init_params(key, *, in_channels, in_planes, num_classes, depth,
                width_factor, num_layers):
    if (depth - 4) % 6 != 0:
        raise RuntimeError("Wide-resnet depth should be 6n+4")
    num_blocks = (depth - 4) // 6
    stages = [in_planes] + [in_planes * (2 ** n) * width_factor
                            for n in range(num_layers)]
    stage_pairs = list(zip(stages, stages[1:]))
    strides = [1] + [2] * (num_layers - 1)

    state = {"key": key}

    def nxt():
        state["key"], sub = jax.random.split(state["key"])
        return sub

    def conv_w(kh, kw, cin, cout):
        fan_in = kh * kw * cin
        return (jax.random.normal(nxt(), (kh, kw, cin, cout), jnp.float32)
                * (2.0 / fan_in) ** 0.5)

    def bn_p(c):
        return {
            "gamma": 1.0 + 0.1 * jax.random.normal(nxt(), (c,), jnp.float32),
            "beta": 0.1 * jax.random.normal(nxt(), (c,), jnp.float32),
            "mean": 0.1 * jax.random.normal(nxt(), (c,), jnp.float32),
            "var": 1.0 + 0.1 * jax.random.uniform(nxt(), (c,), jnp.float32),
        }

    params = {"stem_w": conv_w(3, 3, in_channels, in_planes)}
    layers = []
    for (cin, cout), stride in zip(stage_pairs, strides):
        block_strides = [stride] + [1] * (num_blocks - 1)
        block_planes = [(cin, cout)] + [(cout, cout)] * (num_blocks - 1)
        blocks = []
        for (bin_, bout), bstride in zip(block_planes, block_strides):
            apply_shortcut = (bstride != 1) or (bin_ != bout)
            blocks.append({
                "stride": bstride,
                "bn1": bn_p(bin_),
                "conv1_w": conv_w(3, 3, bin_, bout),
                "bn2": bn_p(bout),
                "conv2_w": conv_w(3, 3, bout, bout),
                "shortcut_w": (conv_w(1, 1, bin_, bout).reshape(bin_, bout)
                               if apply_shortcut else None),
            })
        layers.append(blocks)
    params["layers"] = layers

    last_c = stages[-1]
    params["dec_bn"] = bn_p(last_c)
    params["dec_w"] = (jax.random.normal(nxt(), (last_c, num_classes),
                                         jnp.float32) / (last_c ** 0.5))
    params["dec_b"] = 0.1 * jax.random.normal(nxt(), (num_classes,),
                                              jnp.float32)
    return params


def pack_params(params, *, in_channels, num_classes, eps=1e-5):
    """Precompute BN scale/shift, cast conv weights to bf16, pad channels to
    a multiple of 8 (sublane) only - no lane (128) padding anywhere."""

    def pack_conv(w):  # (kh,kw,cin,cout) -> (kh*kw*c8(cin), c8(cout)) bf16
        kh, kw, cin, cout = w.shape
        wp = jnp.pad(w, ((0, 0), (0, 0),
                         (0, _c8(cin) - cin), (0, _c8(cout) - cout)))
        return wp.reshape(kh * kw * _c8(cin), _c8(cout)).astype(jnp.bfloat16)

    def pack_bn(bn, c):
        scale = bn["gamma"] / jnp.sqrt(bn["var"] + eps)
        shift = bn["beta"] - bn["mean"] * scale
        cp = _c8(c)
        scale = jnp.pad(scale, (0, cp - c)).reshape(1, cp).astype(jnp.float32)
        shift = jnp.pad(shift, (0, cp - c)).reshape(1, cp).astype(jnp.float32)
        return scale, shift

    blocks = []
    for layer in params["layers"]:
        for blk in layer:
            cin, cout = blk["conv1_w"].shape[2], blk["conv1_w"].shape[3]
            bn1_scale, bn1_shift = pack_bn(blk["bn1"], cin)
            bn2_scale, bn2_shift = pack_bn(blk["bn2"], cout)
            if blk["shortcut_w"] is not None:
                sw = blk["shortcut_w"]
                swp = jnp.pad(sw, ((0, _c8(cin) - cin),
                                   (0, _c8(cout) - cout))).astype(jnp.bfloat16)
            else:
                swp = None
            blocks.append({
                "stride": blk["stride"],
                "bn1_scale": bn1_scale, "bn1_shift": bn1_shift,
                "w1b": pack_conv(blk["conv1_w"]),
                "bn2_scale": bn2_scale, "bn2_shift": bn2_shift,
                "w2b": pack_conv(blk["conv2_w"]),
                "shortcut_wb": swp,
            })

    last_c = params["dec_w"].shape[0]
    dec_scale, dec_shift = pack_bn(params["dec_bn"], last_c)
    dec_w = jnp.pad(params["dec_w"],
                    ((0, _c8(last_c) - last_c), (0, 0))).astype(jnp.float32)
    dec_b = params["dec_b"].reshape(1, -1).astype(jnp.float32)
    return {
        "cin_store": _c8(in_channels),
        "stem_wb": pack_conv(params["stem_w"]),
        "blocks": blocks,
        "dec_scale": dec_scale, "dec_shift": dec_shift,
        "dec_w": dec_w, "dec_b": dec_b,
        "num_classes": num_classes,
    }


# ----------------------------------- main --------------------------------------

if __name__ == "__main__":
    key = jax.random.PRNGKey(0)
    pkey, xkey = jax.random.split(key)

    # Small synthetic config (same code path as the PyTorch module):
    # depth=16 -> 2 blocks per layer; stages [8, 8, 16]; strides [1, 2].
    cfg = dict(in_channels=1, in_planes=8, num_classes=10, depth=16,
               width_factor=1, num_layers=2)
    params = init_params(pkey, **cfg)
    packed = pack_params(params, in_channels=cfg["in_channels"],
                         num_classes=cfg["num_classes"])

    x = jax.random.normal(xkey, (2, 1, 16, 16), jnp.float32)  # NCHW like PyTorch

    fwd = jax.jit(lambda inp: wide_resnet_forward(packed, inp))
    out = jax.block_until_ready(fwd(x))

    assert out.shape == (2, cfg["num_classes"]) and out.dtype == jnp.float32
    print("KERNEL_OK")
</pallas_src>

<mosaic_0001>
module attributes {stable_mosaic.version = 11 : i64} {
  func.func @_mm_dual_kernel(%arg0: i32, %arg1: memref<256x72xbf16, #tpu.memory_space<vmem>>, %arg2: memref<72x8xbf16, #tpu.memory_space<vmem>>, %arg3: memref<1x8xf32, #tpu.memory_space<vmem>>, %arg4: memref<1x8xf32, #tpu.memory_space<vmem>>, %arg5: memref<256x8xf32, #tpu.memory_space<vmem>>, %arg6: memref<256x8xbf16, #tpu.memory_space<vmem>>) attributes {dimension_semantics = [#tpu.dimension_semantics<parallel>], iteration_bounds = array<i64: 2>, scalar_prefetch = 0 : i64, scratch_operands = 0 : i64, tpu.core_type = #tpu.core_type<tc>, window_params = [{transform_indices = @transform_0, window_bounds = array<i64: 256, 72>}, {pipeline_mode = #tpu.pipeline_mode<synchronous>, transform_indices = @transform_1, window_bounds = array<i64: 72, 8>}, {pipeline_mode = #tpu.pipeline_mode<synchronous>, transform_indices = @transform_2, window_bounds = array<i64: 1, 8>}, {pipeline_mode = #tpu.pipeline_mode<synchronous>, transform_indices = @transform_3, window_bounds = array<i64: 1, 8>}, {transform_indices = @transform_4, window_bounds = array<i64: 256, 8>}, {transform_indices = @transform_5, window_bounds = array<i64: 256, 8>}]} {
    %c0 = arith.constant 0 : index
    %c0_0 = arith.constant 0 : index
    %0 = vector.load %arg1[%c0, %c0_0] : memref<256x72xbf16, #tpu.memory_space<vmem>>, vector<256x72xbf16>
    %c0_1 = arith.constant 0 : index
    %c0_2 = arith.constant 0 : index
    %1 = vector.load %arg2[%c0_1, %c0_2] : memref<72x8xbf16, #tpu.memory_space<vmem>>, vector<72x8xbf16>
    %cst = arith.constant dense<0.000000e+00> : vector<256x8xf32>
    %2 = tpu.matmul %0, %1, %cst {dimension_numbers = #tpu.dot_dimension_numbers<[1], [0], [0], [1], [0, 0, 1, 1], [], []>} : vector<256x72xbf16>, vector<72x8xbf16>, vector<256x8xf32> -> vector<256x8xf32>
    %c0_3 = arith.constant 0 : index
    %c0_4 = arith.constant 0 : index
    %3 = vector.load %arg5[%c0_3, %c0_4] : memref<256x8xf32, #tpu.memory_space<vmem>>, vector<256x8xf32>
    tpu.vector_store %arg5[%c0_3, %c0_4], %2 {strides = array<i32>} : memref<256x8xf32, #tpu.memory_space<vmem>>, vector<256x8xf32>,
    %c0_5 = arith.constant 0 : index
    %c0_6 = arith.constant 0 : index
    %4 = vector.load %arg3[%c0_5, %c0_6] : memref<1x8xf32, #tpu.memory_space<vmem>>, vector<1x8xf32>
    %5 = vector.broadcast %4 : vector<1x8xf32> to vector<256x8xf32>
    %6 = arith.mulf %2, %5 : vector<256x8xf32>
    %c0_7 = arith.constant 0 : index
    %c0_8 = arith.constant 0 : index
    %7 = vector.load %arg4[%c0_7, %c0_8] : memref<1x8xf32, #tpu.memory_space<vmem>>, vector<1x8xf32>
    %8 = vector.broadcast %7 : vector<1x8xf32> to vector<256x8xf32>
    %9 = arith.addf %6, %8 : vector<256x8xf32>
    %cst_9 = arith.constant 0.000000e+00 : f32
    %10 = vector.broadcast %cst_9 : f32 to vector<256x8xf32>
    %11 = arith.maximumf %9, %10 : vector<256x8xf32>
    %12 = arith.truncf %11 : vector<256x8xf32> to vector<256x8xbf16>
    %c0_10 = arith.constant 0 : index
    %c0_11 = arith.constant 0 : index
    %13 = vector.load %arg6[%c0_10, %c0_11] : memref<256x8xbf16, #tpu.memory_space<vmem>>, vector<256x8xbf16>
    tpu.vector_store %arg6[%c0_10, %c0_11], %12 {strides = array<i32>} : memref<256x8xbf16, #tpu.memory_space<vmem>>, vector<256x8xbf16>,
    return
  }
  func.func @transform_0(%arg0: i32) -> (i32, i32) {
    %c0_i32 = arith.constant 0 : i32
    %c0_i32_0 = arith.constant 0 : i32
    return %arg0, %c0_i32 : i32, i32
  }
  func.func @transform_1(%arg0: i32) -> (i32, i32) {
    %c0_i32 = arith.constant 0 : i32
    %c0_i32_0 = arith.constant 0 : i32
    %c0_i32_1 = arith.constant 0 : i32
    return %c0_i32, %c0_i32_0 : i32, i32
  }
  func.func @transform_2(%arg0: i32) -> (i32, i32) {
    %c0_i32 = arith.constant 0 : i32
    %c0_i32_0 = arith.constant 0 : i32
    %c0_i32_1 = arith.constant 0 : i32
    return %c0_i32, %c0_i32_0 : i32, i32
  }
  func.func @transform_3(%arg0: i32) -> (i32, i32) {
    %c0_i32 = arith.constant 0 : i32
    %c0_i32_0 = arith.constant 0 : i32
    %c0_i32_1 = arith.constant 0 : i32
    return %c0_i32, %c0_i32_0 : i32, i32
  }
  func.func @transform_4(%arg0: i32) -> (i32, i32) {
    %c0_i32 = arith.constant 0 : i32
    %c0_i32_0 = arith.constant 0 : i32
    return %arg0, %c0_i32 : i32, i32
  }
  func.func @transform_5(%arg0: i32) -> (i32, i32) {
    %c0_i32 = arith.constant 0 : i32
    %c0_i32_0 = arith.constant 0 : i32
    return %arg0, %c0_i32 : i32, i32
  }
}

module attributes {stable_mosaic.version = 11 : i64} {
  func.func @_mm_bn_relu_kernel(%arg0: i32, %arg1: memref<256x72xbf16, #tpu.memory_space<vmem>>, %arg2: memref<72x8xbf16, #tpu.memory_space<vmem>>, %arg3: memref<1x8xf32, #tpu.memory_space<vmem>>, %arg4: memref<1x8xf32, #tpu.memory_space<vmem>>, %arg5: memref<256x8xbf16, #tpu.memory_space<vmem>>) attributes {dimension_semantics = [#tpu.dimension_semantics<parallel>], iteration_bounds = array<i64: 2>, scalar_prefetch = 0 : i64, scratch_operands = 0 : i64, tpu.core_type = #tpu.core_type<tc>, window_params = [{transform_indices = @transform_0, window_bounds = array<i64: 256, 72>}, {pipeline_mode = #tpu.pipeline_mode<synchronous>, transform_indices = @transform_1, window_bounds = array<i64: 72, 8>}, {pipeline_mode = #tpu.pipeline_mode<synchronous>, transform_indices = @transform_2, window_bounds = array<i64: 1, 8>}, {pipeline_mode = #tpu.pipeline_mode<synchronous>, transform_indices = @transform_3, window_bounds = array<i64: 1, 8>}, {transform_indices = @transform_4, window_bounds = array<i64: 256, 8>}]} {
    %c0 = arith.constant 0 : index
    %c0_0 = arith.constant 0 : index
    %0 = vector.load %arg1[%c0, %c0_0] : memref<256x72xbf16, #tpu.memory_space<vmem>>, vector<256x72xbf16>
    %c0_1 = arith.constant 0 : index
    %c0_2 = arith.constant 0 : index
    %1 = vector.load %arg2[%c0_1, %c0_2] : memref<72x8xbf16, #tpu.memory_space<vmem>>, vector<72x8xbf16>
    %cst = arith.constant dense<0.000000e+00> : vector<256x8xf32>
    %2 = tpu.matmul %0, %1, %cst {dimension_numbers = #tpu.dot_dimension_numbers<[1], [0], [0], [1], [0, 0, 1, 1], [], []>} : vector<256x72xbf16>, vector<72x8xbf16>, vector<256x8xf32> -> vector<256x8xf32>
    %c0_3 = arith.constant 0 : index
    %c0_4 = arith.constant 0 : index
    %3 = vector.load %arg3[%c0_3, %c0_4] : memref<1x8xf32, #tpu.memory_space<vmem>>, vector<1x8xf32>
    %4 = vector.broadcast %3 : vector<1x8xf32> to vector<256x8xf32>
    %5 = arith.mulf %2, %4 : vector<256x8xf32>
    %c0_5 = arith.constant 0 : index
    %c0_6 = arith.constant 0 : index
    %6 = vector.load %arg4[%c0_5, %c0_6] : memref<1x8xf32, #tpu.memory_space<vmem>>, vector<1x8xf32>
    %7 = vector.broadcast %6 : vector<1x8xf32> to vector<256x8xf32>
    %8 = arith.addf %5, %7 : vector<256x8xf32>
    %cst_7 = arith.constant 0.000000e+00 : f32
    %9 = vector.broadcast %cst_7 : f32 to vector<256x8xf32>
    %10 = arith.maximumf %8, %9 : vector<256x8xf32>
    %11 = arith.truncf %10 : vector<256x8xf32> to vector<256x8xbf16>
    %c0_8 = arith.constant 0 : index
    %c0_9 = arith.constant 0 : index
    %12 = vector.load %arg5[%c0_8, %c0_9] : memref<256x8xbf16, #tpu.memory_space<vmem>>, vector<256x8xbf16>
    tpu.vector_store %arg5[%c0_8, %c0_9], %11 {strides = array<i32>} : memref<256x8xbf16, #tpu.memory_space<vmem>>, vector<256x8xbf16>,
    return
  }
  func.func @transform_0(%arg0: i32) -> (i32, i32) {
    %c0_i32 = arith.constant 0 : i32
    %c0_i32_0 = arith.constant 0 : i32
    return %arg0, %c0_i32 : i32, i32
  }
  func.func @transform_1(%arg0: i32) -> (i32, i32) {
    %c0_i32 = arith.constant 0 : i32
    %c0_i32_0 = arith.constant 0 : i32
    %c0_i32_1 = arith.constant 0 : i32
    return %c0_i32, %c0_i32_0 : i32, i32
  }
  func.func @transform_2(%arg0: i32) -> (i32, i32) {
    %c0_i32 = arith.constant 0 : i32
    %c0_i32_0 = arith.constant 0 : i32
    %c0_i32_1 = arith.constant 0 : i32
    return %c0_i32, %c0_i32_0 : i32, i32
  }
  func.func @transform_3(%arg0: i32) -> (i32, i32) {
    %c0_i32 = arith.constant 0 : i32
    %c0_i32_0 = arith.constant 0 : i32
    %c0_i32_1 = arith.constant 0 : i32
    return %c0_i32, %c0_i32_0 : i32, i32
  }
  func.func @transform_4(%arg0: i32) -> (i32, i32) {
    %c0_i32 = arith.constant 0 : i32
    %c0_i32_0 = arith.constant 0 : i32
    return %arg0, %c0_i32 : i32, i32
  }
}

module attributes {stable_mosaic.version = 11 : i64} {
  func.func @_mm_add_dual_kernel(%arg0: i32, %arg1: memref<256x72xbf16, #tpu.memory_space<vmem>>, %arg2: memref<72x8xbf16, #tpu.memory_space<vmem>>, %arg3: memref<256x8xf32, #tpu.memory_space<vmem>>, %arg4: memref<1x8xf32, #tpu.memory_space<vmem>>, %arg5: memref<1x8xf32, #tpu.memory_space<vmem>>, %arg6: memref<256x8xf32, #tpu.memory_space<vmem>>, %arg7: memref<256x8xbf16, #tpu.memory_space<vmem>>) attributes {dimension_semantics = [#tpu.dimension_semantics<parallel>], iteration_bounds = array<i64: 2>, scalar_prefetch = 0 : i64, scratch_operands = 0 : i64, tpu.core_type = #tpu.core_type<tc>, window_params = [{transform_indices = @transform_0, window_bounds = array<i64: 256, 72>}, {pipeline_mode = #tpu.pipeline_mode<synchronous>, transform_indices = @transform_1, window_bounds = array<i64: 72, 8>}, {transform_indices = @transform_2, window_bounds = array<i64: 256, 8>}, {pipeline_mode = #tpu.pipeline_mode<synchronous>, transform_indices = @transform_3, window_bounds = array<i64: 1, 8>}, {pipeline_mode = #tpu.pipeline_mode<synchronous>, transform_indices = @transform_4, window_bounds = array<i64: 1, 8>}, {transform_indices = @transform_5, window_bounds = array<i64: 256, 8>}, {transform_indices = @transform_6, window_bounds = array<i64: 256, 8>}]} {
    %c0 = arith.constant 0 : index
    %c0_0 = arith.constant 0 : index
    %0 = vector.load %arg1[%c0, %c0_0] : memref<256x72xbf16, #tpu.memory_space<vmem>>, vector<256x72xbf16>
    %c0_1 = arith.constant 0 : index
    %c0_2 = arith.constant 0 : index
    %1 = vector.load %arg2[%c0_1, %c0_2] : memref<72x8xbf16, #tpu.memory_space<vmem>>, vector<72x8xbf16>
    %cst = arith.constant dense<0.000000e+00> : vector<256x8xf32>
    %2 = tpu.matmul %0, %1, %cst {dimension_numbers = #tpu.dot_dimension_numbers<[1], [0], [0], [1], [0, 0, 1, 1], [], []>} : vector<256x72xbf16>, vector<72x8xbf16>, vector<256x8xf32> -> vector<256x8xf32>
    %c0_3 = arith.constant 0 : index
    %c0_4 = arith.constant 0 : index
    %3 = vector.load %arg3[%c0_3, %c0_4] : memref<256x8xf32, #tpu.memory_space<vmem>>, vector<256x8xf32>
    %4 = arith.addf %2, %3 : vector<256x8xf32>
    %c0_5 = arith.constant 0 : index
    %c0_6 = arith.constant 0 : index
    %5 = vector.load %arg6[%c0_5, %c0_6] : memref<256x8xf32, #tpu.memory_space<vmem>>, vector<256x8xf32>
    tpu.vector_store %arg6[%c0_5, %c0_6], %4 {strides = array<i32>} : memref<256x8xf32, #tpu.memory_space<vmem>>, vector<256x8xf32>,
    %c0_7 = arith.constant 0 : index
    %c0_8 = arith.constant 0 : index
    %6 = vector.load %arg4[%c0_7, %c0_8] : memref<1x8xf32, #tpu.memory_space<vmem>>, vector<1x8xf32>
    %7 = vector.broadcast %6 : vector<1x8xf32> to vector<256x8xf32>
    %8 = arith.mulf %4, %7 : vector<256x8xf32>
    %c0_9 = arith.constant 0 : index
    %c0_10 = arith.constant 0 : index
    %9 = vector.load %arg5[%c0_9, %c0_10] : memref<1x8xf32, #tpu.memory_space<vmem>>, vector<1x8xf32>
    %10 = vector.broadcast %9 : vector<1x8xf32> to vector<256x8xf32>
    %11 = arith.addf %8, %10 : vector<256x8xf32>
    %cst_11 = arith.constant 0.000000e+00 : f32
    %12 = vector.broadcast %cst_11 : f32 to vector<256x8xf32>
    %13 = arith.maximumf %11, %12 : vector<256x8xf32>
    %14 = arith.truncf %13 : vector<256x8xf32> to vector<256x8xbf16>
    %c0_12 = arith.constant 0 : index
    %c0_13 = arith.constant 0 : index
    %15 = vector.load %arg7[%c0_12, %c0_13] : memref<256x8xbf16, #tpu.memory_space<vmem>>, vector<256x8xbf16>
    tpu.vector_store %arg7[%c0_12, %c0_13], %14 {strides = array<i32>} : memref<256x8xbf16, #tpu.memory_space<vmem>>, vector<256x8xbf16>,
    return
  }
  func.func @transform_0(%arg0: i32) -> (i32, i32) {
    %c0_i32 = arith.constant 0 : i32
    %c0_i32_0 = arith.constant 0 : i32
    return %arg0, %c0_i32 : i32, i32
  }
  func.func @transform_1(%arg0: i32) -> (i32, i32) {
    %c0_i32 = arith.constant 0 : i32
    %c0_i32_0 = arith.constant 0 : i32
    %c0_i32_1 = arith.constant 0 : i32
    return %c0_i32, %c0_i32_0 : i32, i32
  }
  func.func @transform_2(%arg0: i32) -> (i32, i32) {
    %c0_i32 = arith.constant 0 : i32
    %c0_i32_0 = arith.constant 0 : i32
    return %arg0, %c0_i32 : i32, i32
  }
  func.func @transform_3(%arg0: i32) -> (i32, i32) {
    %c0_i32 = arith.constant 0 : i32
    %c0_i32_0 = arith.constant 0 : i32
    %c0_i32_1 = arith.constant 0 : i32
    return %c0_i32, %c0_i32_0 : i32, i32
  }
  func.func @transform_4(%arg0: i32) -> (i32, i32) {
    %c0_i32 = arith.constant 0 : i32
    %c0_i32_0 = arith.constant 0 : i32
    %c0_i32_1 = arith.constant 0 : i32
    return %c0_i32, %c0_i32_0 : i32, i32
  }
  func.func @transform_5(%arg0: i32) -> (i32, i32) {
    %c0_i32 = arith.constant 0 : i32
    %c0_i32_0 = arith.constant 0 : i32
    return %arg0, %c0_i32 : i32, i32
  }
  func.func @transform_6(%arg0: i32) -> (i32, i32) {
    %c0_i32 = arith.constant 0 : i32
    %c0_i32_0 = arith.constant 0 : i32
    return %arg0, %c0_i32 : i32, i32
  }
}

module attributes {stable_mosaic.version = 11 : i64} {
  func.func @_mm_plain_kernel(%arg0: i32, %arg1: memref<64x8xbf16, #tpu.memory_space<vmem>>, %arg2: memref<8x16xbf16, #tpu.memory_space<vmem>>, %arg3: memref<64x16xf32, #tpu.memory_space<vmem>>) attributes {dimension_semantics = [#tpu.dimension_semantics<parallel>], iteration_bounds = array<i64: 2>, scalar_prefetch = 0 : i64, scratch_operands = 0 : i64, tpu.core_type = #tpu.core_type<tc>, window_params = [{transform_indices = @transform_0, window_bounds = array<i64: 64, 8>}, {pipeline_mode = #tpu.pipeline_mode<synchronous>, transform_indices = @transform_1, window_bounds = array<i64: 8, 16>}, {transform_indices = @transform_2, window_bounds = array<i64: 64, 16>}]} {
    %c0 = arith.constant 0 : index
    %c0_0 = arith.constant 0 : index
    %0 = vector.load %arg1[%c0, %c0_0] : memref<64x8xbf16, #tpu.memory_space<vmem>>, vector<64x8xbf16>
    %c0_1 = arith.constant 0 : index
    %c0_2 = arith.constant 0 : index
    %1 = vector.load %arg2[%c0_1, %c0_2] : memref<8x16xbf16, #tpu.memory_space<vmem>>, vector<8x16xbf16>
    %cst = arith.constant dense<0.000000e+00> : vector<64x16xf32>
    %2 = tpu.matmul %0, %1, %cst {dimension_numbers = #tpu.dot_dimension_numbers<[1], [0], [0], [1], [0, 0, 1, 1], [], []>} : vector<64x8xbf16>, vector<8x16xbf16>, vector<64x16xf32> -> vector<64x16xf32>
    %c0_3 = arith.constant 0 : index
    %c0_4 = arith.constant 0 : index
    %3 = vector.load %arg3[%c0_3, %c0_4] : memref<64x16xf32, #tpu.memory_space<vmem>>, vector<64x16xf32>
    tpu.vector_store %arg3[%c0_3, %c0_4], %2 {strides = array<i32>} : memref<64x16xf32, #tpu.memory_space<vmem>>, vector<64x16xf32>,
    return
  }
  func.func @transform_0(%arg0: i32) -> (i32, i32) {
    %c0_i32 = arith.constant 0 : i32
    %c0_i32_0 = arith.constant 0 : i32
    return %arg0, %c0_i32 : i32, i32
  }
  func.func @transform_1(%arg0: i32) -> (i32, i32) {
    %c0_i32 = arith.constant 0 : i32
    %c0_i32_0 = arith.constant 0 : i32
    %c0_i32_1 = arith.constant 0 : i32
    return %c0_i32, %c0_i32_0 : i32, i32
  }
  func.func @transform_2(%arg0: i32) -> (i32, i32) {
    %c0_i32 = arith.constant 0 : i32
    %c0_i32_0 = arith.constant 0 : i32
    return %arg0, %c0_i32 : i32, i32
  }
}

module attributes {stable_mosaic.version = 11 : i64} {
  func.func @_mm_bn_relu_kernel(%arg0: i32, %arg1: memref<256x72xbf16, #tpu.memory_space<vmem>>, %arg2: memref<72x16xbf16, #tpu.memory_space<vmem>>, %arg3: memref<1x16xf32, #tpu.memory_space<vmem>>, %arg4: memref<1x16xf32, #tpu.memory_space<vmem>>, %arg5: memref<256x16xbf16, #tpu.memory_space<vmem>>) attributes {dimension_semantics = [#tpu.dimension_semantics<parallel>], iteration_bounds = array<i64: 2>, scalar_prefetch = 0 : i64, scratch_operands = 0 : i64, tpu.core_type = #tpu.core_type<tc>, window_params = [{transform_indices = @transform_0, window_bounds = array<i64: 256, 72>}, {pipeline_mode = #tpu.pipeline_mode<synchronous>, transform_indices = @transform_1, window_bounds = array<i64: 72, 16>}, {pipeline_mode = #tpu.pipeline_mode<synchronous>, transform_indices = @transform_2, window_bounds = array<i64: 1, 16>}, {pipeline_mode = #tpu.pipeline_mode<synchronous>, transform_indices = @transform_3, window_bounds = array<i64: 1, 16>}, {transform_indices = @transform_4, window_bounds = array<i64: 256, 16>}]} {
    %c0 = arith.constant 0 : index
    %c0_0 = arith.constant 0 : index
    %0 = vector.load %arg1[%c0, %c0_0] : memref<256x72xbf16, #tpu.memory_space<vmem>>, vector<256x72xbf16>
    %c0_1 = arith.constant 0 : index
    %c0_2 = arith.constant 0 : index
    %1 = vector.load %arg2[%c0_1, %c0_2] : memref<72x16xbf16, #tpu.memory_space<vmem>>, vector<72x16xbf16>
    %cst = arith.constant dense<0.000000e+00> : vector<256x16xf32>
    %2 = tpu.matmul %0, %1, %cst {dimension_numbers = #tpu.dot_dimension_numbers<[1], [0], [0], [1], [0, 0, 1, 1], [], []>} : vector<256x72xbf16>, vector<72x16xbf16>, vector<256x16xf32> -> vector<256x16xf32>
    %c0_3 = arith.constant 0 : index
    %c0_4 = arith.constant 0 : index
    %3 = vector.load %arg3[%c0_3, %c0_4] : memref<1x16xf32, #tpu.memory_space<vmem>>, vector<1x16xf32>
    %4 = vector.broadcast %3 : vector<1x16xf32> to vector<256x16xf32>
    %5 = arith.mulf %2, %4 : vector<256x16xf32>
    %c0_5 = arith.constant 0 : index
    %c0_6 = arith.constant 0 : index
    %6 = vector.load %arg4[%c0_5, %c0_6] : memref<1x16xf32, #tpu.memory_space<vmem>>, vector<1x16xf32>
    %7 = vector.broadcast %6 : vector<1x16xf32> to vector<256x16xf32>
    %8 = arith.addf %5, %7 : vector<256x16xf32>
    %cst_7 = arith.constant 0.000000e+00 : f32
    %9 = vector.broadcast %cst_7 : f32 to vector<256x16xf32>
    %10 = arith.maximumf %8, %9 : vector<256x16xf32>
    %11 = arith.truncf %10 : vector<256x16xf32> to vector<256x16xbf16>
    %c0_8 = arith.constant 0 : index
    %c0_9 = arith.constant 0 : index
    %12 = vector.load %arg5[%c0_8, %c0_9] : memref<256x16xbf16, #tpu.memory_space<vmem>>, vector<256x16xbf16>
    tpu.vector_store %arg5[%c0_8, %c0_9], %11 {strides = array<i32>} : memref<256x16xbf16, #tpu.memory_space<vmem>>, vector<256x16xbf16>,
    return
  }
  func.func @transform_0(%arg0: i32) -> (i32, i32) {
    %c0_i32 = arith.constant 0 : i32
    %c0_i32_0 = arith.constant 0 : i32
    return %arg0, %c0_i32 : i32, i32
  }
  func.func @transform_1(%arg0: i32) -> (i32, i32) {
    %c0_i32 = arith.constant 0 : i32
    %c0_i32_0 = arith.constant 0 : i32
    %c0_i32_1 = arith.constant 0 : i32
    return %c0_i32, %c0_i32_0 : i32, i32
  }
  func.func @transform_2(%arg0: i32) -> (i32, i32) {
    %c0_i32 = arith.constant 0 : i32
    %c0_i32_0 = arith.constant 0 : i32
    %c0_i32_1 = arith.constant 0 : i32
    return %c0_i32, %c0_i32_0 : i32, i32
  }
  func.func @transform_3(%arg0: i32) -> (i32, i32) {
    %c0_i32 = arith.constant 0 : i32
    %c0_i32_0 = arith.constant 0 : i32
    %c0_i32_1 = arith.constant 0 : i32
    return %c0_i32, %c0_i32_0 : i32, i32
  }
  func.func @transform_4(%arg0: i32) -> (i32, i32) {
    %c0_i32 = arith.constant 0 : i32
    %c0_i32_0 = arith.constant 0 : i32
    return %arg0, %c0_i32 : i32, i32
  }
}

module attributes {stable_mosaic.version = 11 : i64} {
  func.func @_mm_add_dual_kernel(%arg0: i32, %arg1: memref<64x144xbf16, #tpu.memory_space<vmem>>, %arg2: memref<144x16xbf16, #tpu.memory_space<vmem>>, %arg3: memref<64x16xf32, #tpu.memory_space<vmem>>, %arg4: memref<1x16xf32, #tpu.memory_space<vmem>>, %arg5: memref<1x16xf32, #tpu.memory_space<vmem>>, %arg6: memref<64x16xf32, #tpu.memory_space<vmem>>, %arg7: memref<64x16xbf16, #tpu.memory_space<vmem>>) attributes {dimension_semantics = [#tpu.dimension_semantics<parallel>], iteration_bounds = array<i64: 2>, scalar_prefetch = 0 : i64, scratch_operands = 0 : i64, tpu.core_type = #tpu.core_type<tc>, window_params = [{transform_indices = @transform_0, window_bounds = array<i64: 64, 144>}, {pipeline_mode = #tpu.pipeline_mode<synchronous>, transform_indices = @transform_1, window_bounds = array<i64: 144, 16>}, {transform_indices = @transform_2, window_bounds = array<i64: 64, 16>}, {pipeline_mode = #tpu.pipeline_mode<synchronous>, transform_indices = @transform_3, window_bounds = array<i64: 1, 16>}, {pipeline_mode = #tpu.pipeline_mode<synchronous>, transform_indices = @transform_4, window_bounds = array<i64: 1, 16>}, {transform_indices = @transform_5, window_bounds = array<i64: 64, 16>}, {transform_indices = @transform_6, window_bounds = array<i64: 64, 16>}]} {
    %c0 = arith.constant 0 : index
    %c0_0 = arith.constant 0 : index
    %0 = vector.load %arg1[%c0, %c0_0] : memref<64x144xbf16, #tpu.memory_space<vmem>>, vector<64x144xbf16>
    %c0_1 = arith.constant 0 : index
    %c0_2 = arith.constant 0 : index
    %1 = vector.load %arg2[%c0_1, %c0_2] : memref<144x16xbf16, #tpu.memory_space<vmem>>, vector<144x16xbf16>
    %cst = arith.constant dense<0.000000e+00> : vector<64x16xf32>
    %2 = tpu.matmul %0, %1, %cst {dimension_numbers = #tpu.dot_dimension_numbers<[1], [0], [0], [1], [0, 0, 1, 1], [], []>} : vector<64x144xbf16>, vector<144x16xbf16>, vector<64x16xf32> -> vector<64x16xf32>
    %c0_3 = arith.constant 0 : index
    %c0_4 = arith.constant 0 : index
    %3 = vector.load %arg3[%c0_3, %c0_4] : memref<64x16xf32, #tpu.memory_space<vmem>>, vector<64x16xf32>
    %4 = arith.addf %2, %3 : vector<64x16xf32>
    %c0_5 = arith.constant 0 : index
    %c0_6 = arith.constant 0 : index
    %5 = vector.load %arg6[%c0_5, %c0_6] : memref<64x16xf32, #tpu.memory_space<vmem>>, vector<64x16xf32>
    tpu.vector_store %arg6[%c0_5, %c0_6], %4 {strides = array<i32>} : memref<64x16xf32, #tpu.memory_space<vmem>>, vector<64x16xf32>,
    %c0_7 = arith.constant 0 : index
    %c0_8 = arith.constant 0 : index
    %6 = vector.load %arg4[%c0_7, %c0_8] : memref<1x16xf32, #tpu.memory_space<vmem>>, vector<1x16xf32>
    %7 = vector.broadcast %6 : vector<1x16xf32> to vector<64x16xf32>
    %8 = arith.mulf %4, %7 : vector<64x16xf32>
    %c0_9 = arith.constant 0 : index
    %c0_10 = arith.constant 0 : index
    %9 = vector.load %arg5[%c0_9, %c0_10] : memref<1x16xf32, #tpu.memory_space<vmem>>, vector<1x16xf32>
    %10 = vector.broadcast %9 : vector<1x16xf32> to vector<64x16xf32>
    %11 = arith.addf %8, %10 : vector<64x16xf32>
    %cst_11 = arith.constant 0.000000e+00 : f32
    %12 = vector.broadcast %cst_11 : f32 to vector<64x16xf32>
    %13 = arith.maximumf %11, %12 : vector<64x16xf32>
    %14 = arith.truncf %13 : vector<64x16xf32> to vector<64x16xbf16>
    %c0_12 = arith.constant 0 : index
    %c0_13 = arith.constant 0 : index
    %15 = vector.load %arg7[%c0_12, %c0_13] : memref<64x16xbf16, #tpu.memory_space<vmem>>, vector<64x16xbf16>
    tpu.vector_store %arg7[%c0_12, %c0_13], %14 {strides = array<i32>} : memref<64x16xbf16, #tpu.memory_space<vmem>>, vector<64x16xbf16>,
    return
  }
  func.func @transform_0(%arg0: i32) -> (i32, i32) {
    %c0_i32 = arith.constant 0 : i32
    %c0_i32_0 = arith.constant 0 : i32
    return %arg0, %c0_i32 : i32, i32
  }
  func.func @transform_1(%arg0: i32) -> (i32, i32) {
    %c0_i32 = arith.constant 0 : i32
    %c0_i32_0 = arith.constant 0 : i32
    %c0_i32_1 = arith.constant 0 : i32
    return %c0_i32, %c0_i32_0 : i32, i32
  }
  func.func @transform_2(%arg0: i32) -> (i32, i32) {
    %c0_i32 = arith.constant 0 : i32
    %c0_i32_0 = arith.constant 0 : i32
    return %arg0, %c0_i32 : i32, i32
  }
  func.func @transform_3(%arg0: i32) -> (i32, i32) {
    %c0_i32 = arith.constant 0 : i32
    %c0_i32_0 = arith.constant 0 : i32
    %c0_i32_1 = arith.constant 0 : i32
    return %c0_i32, %c0_i32_0 : i32, i32
  }
  func.func @transform_4(%arg0: i32) -> (i32, i32) {
    %c0_i32 = arith.constant 0 : i32
    %c0_i32_0 = arith.constant 0 : i32
    %c0_i32_1 = arith.constant 0 : i32
    return %c0_i32, %c0_i32_0 : i32, i32
  }
  func.func @transform_5(%arg0: i32) -> (i32, i32) {
    %c0_i32 = arith.constant 0 : i32
    %c0_i32_0 = arith.constant 0 : i32
    return %arg0, %c0_i32 : i32, i32
  }
  func.func @transform_6(%arg0: i32) -> (i32, i32) {
    %c0_i32 = arith.constant 0 : i32
    %c0_i32_0 = arith.constant 0 : i32
    return %arg0, %c0_i32 : i32, i32
  }
}

module attributes {stable_mosaic.version = 11 : i64} {
  func.func @_mm_bn_relu_kernel(%arg0: i32, %arg1: memref<64x144xbf16, #tpu.memory_space<vmem>>, %arg2: memref<144x16xbf16, #tpu.memory_space<vmem>>, %arg3: memref<1x16xf32, #tpu.memory_space<vmem>>, %arg4: memref<1x16xf32, #tpu.memory_space<vmem>>, %arg5: memref<64x16xbf16, #tpu.memory_space<vmem>>) attributes {dimension_semantics = [#tpu.dimension_semantics<parallel>], iteration_bounds = array<i64: 2>, scalar_prefetch = 0 : i64, scratch_operands = 0 : i64, tpu.core_type = #tpu.core_type<tc>, window_params = [{transform_indices = @transform_0, window_bounds = array<i64: 64, 144>}, {pipeline_mode = #tpu.pipeline_mode<synchronous>, transform_indices = @transform_1, window_bounds = array<i64: 144, 16>}, {pipeline_mode = #tpu.pipeline_mode<synchronous>, transform_indices = @transform_2, window_bounds = array<i64: 1, 16>}, {pipeline_mode = #tpu.pipeline_mode<synchronous>, transform_indices = @transform_3, window_bounds = array<i64: 1, 16>}, {transform_indices = @transform_4, window_bounds = array<i64: 64, 16>}]} {
    %c0 = arith.constant 0 : index
    %c0_0 = arith.constant 0 : index
    %0 = vector.load %arg1[%c0, %c0_0] : memref<64x144xbf16, #tpu.memory_space<vmem>>, vector<64x144xbf16>
    %c0_1 = arith.constant 0 : index
    %c0_2 = arith.constant 0 : index
    %1 = vector.load %arg2[%c0_1, %c0_2] : memref<144x16xbf16, #tpu.memory_space<vmem>>, vector<144x16xbf16>
    %cst = arith.constant dense<0.000000e+00> : vector<64x16xf32>
    %2 = tpu.matmul %0, %1, %cst {dimension_numbers = #tpu.dot_dimension_numbers<[1], [0], [0], [1], [0, 0, 1, 1], [], []>} : vector<64x144xbf16>, vector<144x16xbf16>, vector<64x16xf32> -> vector<64x16xf32>
    %c0_3 = arith.constant 0 : index
    %c0_4 = arith.constant 0 : index
    %3 = vector.load %arg3[%c0_3, %c0_4] : memref<1x16xf32, #tpu.memory_space<vmem>>, vector<1x16xf32>
    %4 = vector.broadcast %3 : vector<1x16xf32> to vector<64x16xf32>
    %5 = arith.mulf %2, %4 : vector<64x16xf32>
    %c0_5 = arith.constant 0 : index
    %c0_6 = arith.constant 0 : index
    %6 = vector.load %arg4[%c0_5, %c0_6] : memref<1x16xf32, #tpu.memory_space<vmem>>, vector<1x16xf32>
    %7 = vector.broadcast %6 : vector<1x16xf32> to vector<64x16xf32>
    %8 = arith.addf %5, %7 : vector<64x16xf32>
    %cst_7 = arith.constant 0.000000e+00 : f32
    %9 = vector.broadcast %cst_7 : f32 to vector<64x16xf32>
    %10 = arith.maximumf %8, %9 : vector<64x16xf32>
    %11 = arith.truncf %10 : vector<64x16xf32> to vector<64x16xbf16>
    %c0_8 = arith.constant 0 : index
    %c0_9 = arith.constant 0 : index
    %12 = vector.load %arg5[%c0_8, %c0_9] : memref<64x16xbf16, #tpu.memory_space<vmem>>, vector<64x16xbf16>
    tpu.vector_store %arg5[%c0_8, %c0_9], %11 {strides = array<i32>} : memref<64x16xbf16, #tpu.memory_space<vmem>>, vector<64x16xbf16>,
    return
  }
  func.func @transform_0(%arg0: i32) -> (i32, i32) {
    %c0_i32 = arith.constant 0 : i32
    %c0_i32_0 = arith.constant 0 : i32
    return %arg0, %c0_i32 : i32, i32
  }
  func.func @transform_1(%arg0: i32) -> (i32, i32) {
    %c0_i32 = arith.constant 0 : i32
    %c0_i32_0 = arith.constant 0 : i32
    %c0_i32_1 = arith.constant 0 : i32
    return %c0_i32, %c0_i32_0 : i32, i32
  }
  func.func @transform_2(%arg0: i32) -> (i32, i32) {
    %c0_i32 = arith.constant 0 : i32
    %c0_i32_0 = arith.constant 0 : i32
    %c0_i32_1 = arith.constant 0 : i32
    return %c0_i32, %c0_i32_0 : i32, i32
  }
  func.func @transform_3(%arg0: i32) -> (i32, i32) {
    %c0_i32 = arith.constant 0 : i32
    %c0_i32_0 = arith.constant 0 : i32
    %c0_i32_1 = arith.constant 0 : i32
    return %c0_i32, %c0_i32_0 : i32, i32
  }
  func.func @transform_4(%arg0: i32) -> (i32, i32) {
    %c0_i32 = arith.constant 0 : i32
    %c0_i32_0 = arith.constant 0 : i32
    return %arg0, %c0_i32 : i32, i32
  }
}

module attributes {stable_mosaic.version = 11 : i64} {
  func.func @_mm_add_dual_kernel(%arg0: i32, %arg1: memref<64x144xbf16, #tpu.memory_space<vmem>>, %arg2: memref<144x16xbf16, #tpu.memory_space<vmem>>, %arg3: memref<64x16xf32, #tpu.memory_space<vmem>>, %arg4: memref<1x16xf32, #tpu.memory_space<vmem>>, %arg5: memref<1x16xf32, #tpu.memory_space<vmem>>, %arg6: memref<64x16xf32, #tpu.memory_space<vmem>>, %arg7: memref<64x16xbf16, #tpu.memory_space<vmem>>) attributes {dimension_semantics = [#tpu.dimension_semantics<parallel>], iteration_bounds = array<i64: 2>, scalar_prefetch = 0 : i64, scratch_operands = 0 : i64, tpu.core_type = #tpu.core_type<tc>, window_params = [{transform_indices = @transform_0, window_bounds = array<i64: 64, 144>}, {pipeline_mode = #tpu.pipeline_mode<synchronous>, transform_indices = @transform_1, window_bounds = array<i64: 144, 16>}, {transform_indices = @transform_2, window_bounds = array<i64: 64, 16>}, {pipeline_mode = #tpu.pipeline_mode<synchronous>, transform_indices = @transform_3, window_bounds = array<i64: 1, 16>}, {pipeline_mode = #tpu.pipeline_mode<synchronous>, transform_indices = @transform_4, window_bounds = array<i64: 1, 16>}, {transform_indices = @transform_5, window_bounds = array<i64: 64, 16>}, {transform_indices = @transform_6, window_bounds = array<i64: 64, 16>}]} {
    %c0 = arith.constant 0 : index
    %c0_0 = arith.constant 0 : index
    %0 = vector.load %arg1[%c0, %c0_0] : memref<64x144xbf16, #tpu.memory_space<vmem>>, vector<64x144xbf16>
    %c0_1 = arith.constant 0 : index
    %c0_2 = arith.constant 0 : index
    %1 = vector.load %arg2[%c0_1, %c0_2] : memref<144x16xbf16, #tpu.memory_space<vmem>>, vector<144x16xbf16>
    %cst = arith.constant dense<0.000000e+00> : vector<64x16xf32>
    %2 = tpu.matmul %0, %1, %cst {dimension_numbers = #tpu.dot_dimension_numbers<[1], [0], [0], [1], [0, 0, 1, 1], [], []>} : vector<64x144xbf16>, vector<144x16xbf16>, vector<64x16xf32> -> vector<64x16xf32>
    %c0_3 = arith.constant 0 : index
    %c0_4 = arith.constant 0 : index
    %3 = vector.load %arg3[%c0_3, %c0_4] : memref<64x16xf32, #tpu.memory_space<vmem>>, vector<64x16xf32>
    %4 = arith.addf %2, %3 : vector<64x16xf32>
    %c0_5 = arith.constant 0 : index
    %c0_6 = arith.constant 0 : index
    %5 = vector.load %arg6[%c0_5, %c0_6] : memref<64x16xf32, #tpu.memory_space<vmem>>, vector<64x16xf32>
    tpu.vector_store %arg6[%c0_5, %c0_6], %4 {strides = array<i32>} : memref<64x16xf32, #tpu.memory_space<vmem>>, vector<64x16xf32>,
    %c0_7 = arith.constant 0 : index
    %c0_8 = arith.constant 0 : index
    %6 = vector.load %arg4[%c0_7, %c0_8] : memref<1x16xf32, #tpu.memory_space<vmem>>, vector<1x16xf32>
    %7 = vector.broadcast %6 : vector<1x16xf32> to vector<64x16xf32>
    %8 = arith.mulf %4, %7 : vector<64x16xf32>
    %c0_9 = arith.constant 0 : index
    %c0_10 = arith.constant 0 : index
    %9 = vector.load %arg5[%c0_9, %c0_10] : memref<1x16xf32, #tpu.memory_space<vmem>>, vector<1x16xf32>
    %10 = vector.broadcast %9 : vector<1x16xf32> to vector<64x16xf32>
    %11 = arith.addf %8, %10 : vector<64x16xf32>
    %cst_11 = arith.constant 0.000000e+00 : f32
    %12 = vector.broadcast %cst_11 : f32 to vector<64x16xf32>
    %13 = arith.maximumf %11, %12 : vector<64x16xf32>
    %14 = arith.truncf %13 : vector<64x16xf32> to vector<64x16xbf16>
    %c0_12 = arith.constant 0 : index
    %c0_13 = arith.constant 0 : index
    %15 = vector.load %arg7[%c0_12, %c0_13] : memref<64x16xbf16, #tpu.memory_space<vmem>>, vector<64x16xbf16>
    tpu.vector_store %arg7[%c0_12, %c0_13], %14 {strides = array<i32>} : memref<64x16xbf16, #tpu.memory_space<vmem>>, vector<64x16xbf16>,
    return
  }
  func.func @transform_0(%arg0: i32) -> (i32, i32) {
    %c0_i32 = arith.constant 0 : i32
    %c0_i32_0 = arith.constant 0 : i32
    return %arg0, %c0_i32 : i32, i32
  }
  func.func @transform_1(%arg0: i32) -> (i32, i32) {
    %c0_i32 = arith.constant 0 : i32
    %c0_i32_0 = arith.constant 0 : i32
    %c0_i32_1 = arith.constant 0 : i32
    return %c0_i32, %c0_i32_0 : i32, i32
  }
  func.func @transform_2(%arg0: i32) -> (i32, i32) {
    %c0_i32 = arith.constant 0 : i32
    %c0_i32_0 = arith.constant 0 : i32
    return %arg0, %c0_i32 : i32, i32
  }
  func.func @transform_3(%arg0: i32) -> (i32, i32) {
    %c0_i32 = arith.constant 0 : i32
    %c0_i32_0 = arith.constant 0 : i32
    %c0_i32_1 = arith.constant 0 : i32
    return %c0_i32, %c0_i32_0 : i32, i32
  }
  func.func @transform_4(%arg0: i32) -> (i32, i32) {
    %c0_i32 = arith.constant 0 : i32
    %c0_i32_0 = arith.constant 0 : i32
    %c0_i32_1 = arith.constant 0 : i32
    return %c0_i32, %c0_i32_0 : i32, i32
  }
  func.func @transform_5(%arg0: i32) -> (i32, i32) {
    %c0_i32 = arith.constant 0 : i32
    %c0_i32_0 = arith.constant 0 : i32
    return %arg0, %c0_i32 : i32, i32
  }
  func.func @transform_6(%arg0: i32) -> (i32, i32) {
    %c0_i32 = arith.constant 0 : i32
    %c0_i32_0 = arith.constant 0 : i32
    return %arg0, %c0_i32 : i32, i32
  }
}

module attributes {stable_mosaic.version = 11 : i64} {
  func.func @_mean_hw_kernel(%arg0: i32, %arg1: memref<2x64x16xbf16, #tpu.memory_space<vmem>>, %arg2: memref<2x16xf32, #tpu.memory_space<vmem>>, %arg3: memref<2x16xf32, #tpu.memory_space<vmem>>) attributes {dimension_semantics = [#tpu.dimension_semantics<arbitrary>], iteration_bounds = array<i64: 1>, scalar_prefetch = 0 : i64, scratch_operands = 1 : i64, tpu.core_type = #tpu.core_type<tc>, window_params = [{transform_indices = @transform_0, window_bounds = array<i64: 2, 64, 16>}, {pipeline_mode = #tpu.pipeline_mode<synchronous>, transform_indices = @transform_1, window_bounds = array<i64: 2, 16>}]} {
    %c0_i32 = arith.constant 0 : i32
    %0 = arith.cmpi eq, %arg0, %c0_i32 : i32
    %1 = arith.extui %0 : i1 to i32
    %c0_i32_0 = arith.constant 0 : i32
    %2 = arith.cmpi ne, %1, %c0_i32_0 : i32
    scf.if %2 {
      %cst_9 = arith.constant 0.000000e+00 : f32
      %12 = vector.broadcast %cst_9 : f32 to vector<2x16xf32>
      %c0_10 = arith.constant 0 : index
      %c0_11 = arith.constant 0 : index
      %13 = vector.load %arg3[%c0_10, %c0_11] : memref<2x16xf32, #tpu.memory_space<vmem>>, vector<2x16xf32>
      tpu.vector_store %arg3[%c0_10, %c0_11], %12 {strides = array<i32>} : memref<2x16xf32, #tpu.memory_space<vmem>>, vector<2x16xf32>,
    } else {
    }
    %c0 = arith.constant 0 : index
    %c0_1 = arith.constant 0 : index
    %3 = vector.load %arg3[%c0, %c0_1] : memref<2x16xf32, #tpu.memory_space<vmem>>, vector<2x16xf32>
    %c0_2 = arith.constant 0 : index
    %c0_3 = arith.constant 0 : index
    %c0_4 = arith.constant 0 : index
    %4 = vector.load %arg1[%c0_2, %c0_3, %c0_4] : memref<2x64x16xbf16, #tpu.memory_space<vmem>>, vector<2x64x16xbf16>
    %5 = arith.extf %4 : vector<2x64x16xbf16> to vector<2x64x16xf32>
    %cst = arith.constant dense<0.000000e+00> : vector<2x16xf32>
    %6 = vector.multi_reduction <add>, %5, %cst [1] : vector<2x64x16xf32> to vector<2x16xf32>
    %7 = arith.addf %3, %6 : vector<2x16xf32>
    %c0_5 = arith.constant 0 : index
    %c0_6 = arith.constant 0 : index
    %8 = vector.load %arg3[%c0_5, %c0_6] : memref<2x16xf32, #tpu.memory_space<vmem>>, vector<2x16xf32>
    tpu.vector_store %arg3[%c0_5, %c0_6], %7 {strides = array<i32>} : memref<2x16xf32, #tpu.memory_space<vmem>>, vector<2x16xf32>,
    %c0_i32_7 = arith.constant 0 : i32
    %9 = arith.cmpi eq, %arg0, %c0_i32_7 : i32
    %10 = arith.extui %9 : i1 to i32
    %c0_i32_8 = arith.constant 0 : i32
    %11 = arith.cmpi ne, %10, %c0_i32_8 : i32
    scf.if %11 {
      %c0_9 = arith.constant 0 : index
      %c0_10 = arith.constant 0 : index
      %12 = vector.load %arg3[%c0_9, %c0_10] : memref<2x16xf32, #tpu.memory_space<vmem>>, vector<2x16xf32>
      %cst_11 = arith.constant 1.562500e-02 : f32
      %13 = vector.broadcast %cst_11 : f32 to vector<2x16xf32>
      %14 = arith.mulf %12, %13 : vector<2x16xf32>
      %c0_12 = arith.constant 0 : index
      %c0_13 = arith.constant 0 : index
      %15 = vector.load %arg2[%c0_12, %c0_13] : memref<2x16xf32, #tpu.memory_space<vmem>>, vector<2x16xf32>
      tpu.vector_store %arg2[%c0_12, %c0_13], %14 {strides = array<i32>} : memref<2x16xf32, #tpu.memory_space<vmem>>, vector<2x16xf32>,
    } else {
    }
    return
  }
  func.func @transform_0(%arg0: i32) -> (i32, i32, i32) {
    %c0_i32 = arith.constant 0 : i32
    %c0_i32_0 = arith.constant 0 : i32
    %c0_i32_1 = arith.constant 0 : i32
    return %c0_i32, %arg0, %c0_i32_0 : i32, i32, i32
  }
  func.func @transform_1(%arg0: i32) -> (i32, i32) {
    %c0_i32 = arith.constant 0 : i32
    %c0_i32_0 = arith.constant 0 : i32
    %c0_i32_1 = arith.constant 0 : i32
    return %c0_i32, %c0_i32_0 : i32, i32
  }
}

module attributes {stable_mosaic.version = 11 : i64} {
  func.func @_linear_kernel(%arg0: i32, %arg1: memref<2x16xf32, #tpu.memory_space<vmem>>, %arg2: memref<16x10xf32, #tpu.memory_space<vmem>>, %arg3: memref<1x10xf32, #tpu.memory_space<vmem>>, %arg4: memref<2x10xf32, #tpu.memory_space<vmem>>) attributes {dimension_semantics = [#tpu.dimension_semantics<arbitrary>], iteration_bounds = array<i64: 1>, scalar_prefetch = 0 : i64, scratch_operands = 0 : i64, tpu.core_type = #tpu.core_type<tc>, window_params = [{pipeline_mode = #tpu.pipeline_mode<synchronous>, transform_indices = @transform_0, window_bounds = array<i64: 2, 16>}, {pipeline_mode = #tpu.pipeline_mode<synchronous>, transform_indices = @transform_1, window_bounds = array<i64: 16, 10>}, {pipeline_mode = #tpu.pipeline_mode<synchronous>, transform_indices = @transform_2, window_bounds = array<i64: 1, 10>}, {pipeline_mode = #tpu.pipeline_mode<synchronous>, transform_indices = @transform_3, window_bounds = array<i64: 2, 10>}]} {
    %c0 = arith.constant 0 : index
    %c0_0 = arith.constant 0 : index
    %0 = vector.load %arg1[%c0, %c0_0] : memref<2x16xf32, #tpu.memory_space<vmem>>, vector<2x16xf32>
    %c0_1 = arith.constant 0 : index
    %c0_2 = arith.constant 0 : index
    %1 = vector.load %arg2[%c0_1, %c0_2] : memref<16x10xf32, #tpu.memory_space<vmem>>, vector<16x10xf32>
    %cst = arith.constant dense<0.000000e+00> : vector<2x10xf32>
    %2 = tpu.matmul %0, %1, %cst {dimension_numbers = #tpu.dot_dimension_numbers<[1], [0], [0], [1], [0, 0, 1, 1], [], []>} : vector<2x16xf32>, vector<16x10xf32>, vector<2x10xf32> -> vector<2x10xf32>
    %c0_3 = arith.constant 0 : index
    %c0_4 = arith.constant 0 : index
    %3 = vector.load %arg3[%c0_3, %c0_4] : memref<1x10xf32, #tpu.memory_space<vmem>>, vector<1x10xf32>
    %4 = vector.broadcast %3 : vector<1x10xf32> to vector<2x10xf32>
    %5 = arith.addf %2, %4 : vector<2x10xf32>
    %c0_5 = arith.constant 0 : index
    %c0_6 = arith.constant 0 : index
    %6 = vector.load %arg4[%c0_5, %c0_6] : memref<2x10xf32, #tpu.memory_space<vmem>>, vector<2x10xf32>
    tpu.vector_store %arg4[%c0_5, %c0_6], %5 {strides = array<i32>} : memref<2x10xf32, #tpu.memory_space<vmem>>, vector<2x10xf32>,
    return
  }
  func.func @transform_0(%arg0: i32) -> (i32, i32) {
    %c0_i32 = arith.constant 0 : i32
    %c0_i32_0 = arith.constant 0 : i32
    %c0_i32_1 = arith.constant 0 : i32
    return %c0_i32, %c0_i32_0 : i32, i32
  }
  func.func @transform_1(%arg0: i32) -> (i32, i32) {
    %c0_i32 = arith.constant 0 : i32
    %c0_i32_0 = arith.constant 0 : i32
    %c0_i32_1 = arith.constant 0 : i32
    return %c0_i32, %c0_i32_0 : i32, i32
  }
  func.func @transform_2(%arg0: i32) -> (i32, i32) {
    %c0_i32 = arith.constant 0 : i32
    %c0_i32_0 = arith.constant 0 : i32
    %c0_i32_1 = arith.constant 0 : i32
    return %c0_i32, %c0_i32_0 : i32, i32
  }
  func.func @transform_3(%arg0: i32) -> (i32, i32) {
    %c0_i32 = arith.constant 0 : i32
    %c0_i32_0 = arith.constant 0 : i32
    %c0_i32_1 = arith.constant 0 : i32
    return %c0_i32, %c0_i32_0 : i32, i32
  }
}

</mosaic_0001>

<llo_original>
// kernel: _lambda_.12
$region0: #{_lambda_.12}
  #allocation0 [shape = 'u32[]', space=smem, size = 0x4, offset = 0x4, fixed_abs, tag = 'smem constant byte address 0x4 - core index']
  #allocation1 [shape = 'u32[144,128]{1,0:T(1,128)}', space=vmem, size = 0x12000, scoped, tag = 'internal scratch']
  %s0 = inlined_call_operand.vmem [shape: bf16[512,72], index: 0, kind: input, shape index: {}]
  %s1 = inlined_call_operand.vmem [shape: bf16[72,8], index: 1, kind: input, shape index: {}]
  %s2 = inlined_call_operand.vmem [shape: f32[1,8], index: 2, kind: input, shape index: {}]
  %s3 = inlined_call_operand.vmem [shape: f32[1,8], index: 3, kind: input, shape index: {}]
  %s4 = inlined_call_operand.vmem [shape: f32[512,8], index: 4, kind: output, shape index: {0}]
  %s5 = inlined_call_operand.vmem [shape: bf16[512,8], index: 5, kind: output, shape index: {1}]
  %6 = xla_tuple %s4, %s5
  %s7 = sld [smem:[#allocation0]]
  $region57: #{_lambda_.12} parent=0
    _
  %s9 = ssub.s32 1, %s7
  %s10 = scalar_select 0, %s9, %s7
  loop: start=0, step=1, limit=4
  $region2: #{_lambda_.12} parent=0 // loop_pre_header
    _
  $region3: #{_lambda_.12} parent=0 // loop_header
    %s12 = sphi 0, %s16
    %p13 = scmp.ge.s32.totalorder %s12, 4
    %s22 = sphi 0, %s24
    %s25 = sphi 0, %s22
    %s26 = sphi 0, %s25
    %s42 = sphi 0, %s26
    %s46 = sphi 0, %s46
    %s48 = sphi 0, %s46
    %s49 = sphi 0, %s48
    %s63 = sphi 0, %s49
    %s67 = sphi 0, %s67
    %s69 = sphi 0, %s67
    %s70 = sphi 0, %s69
    %s84 = sphi 0, %s70
    %s88 = sphi 0, %s88
    %s90 = sphi 0, %s88
    %s91 = sphi 0, %s90
    %s105 = sphi 0, %s91
    %s111 = sphi 0, %s113
    %s114 = sphi 0, %s111
    %s115 = sphi 0, %s114
    %s131 = sphi 0, %s115
    %s137 = sphi 0, %s139
    %s140 = sphi 0, %s137
    %s141 = sphi 0, %s140
    %s157 = sphi 0, %s141
  $region4: #{_lambda_.12} parent=0 // loop_header_branch
    %15 = sbr.rel (%p13) target = $region8
  $region5: #{_lambda_.12} parent=0 // loop_body
    %s17 = ssub.s32 %s12, 1
    %s18 = ssub.s32 %s12, 2
    %s19 = sadd.s32 %s12, 1
    %s20 = ssub.s32 %s12, %s19
    %p21 = scmp.eq.s32.totalorder %s20, 0
    %s23 = sadd.s32 %s22, 1
    %s24 = scalar_select %p21, %s22, %s23
    %p27 = pneg %p21
    %p28 = scmp.eq.s32.totalorder %s12, 1
    %p29 = por %p27, %p28
    %p30 = scmp.ne.s32.totalorder %s22, %s25
    %p31 = scmp.eq.s32.totalorder %s12, 0
    %p32 = por %p30, %p31
    %p33 = scmp.ne.s32.totalorder %s22, %s25
    %p34 = scmp.eq.s32.totalorder %s17, 1
    %p35 = por %p33, %p34
    %p36 = scmp.ne.s32.totalorder %s25, %s26
    %p37 = scmp.eq.s32.totalorder %s17, 0
    %p38 = por %p36, %p37
    %p39 = scmp.ne.s32.totalorder %s25, %s26
    %p40 = scmp.eq.s32.totalorder %s18, 1
    %p41 = por %p39, %p40
    %p43 = scmp.ne.s32.totalorder %s26, %s42
    %p44 = scmp.eq.s32.totalorder %s18, 0
    %p45 = por %p43, %p44
    %s47 = sadd.s32 %s46, 1
    %p50 = scmp.eq.s32.totalorder %s12, 1
    %p51 = scmp.ne.s32.totalorder %s46, %s48
    %p52 = scmp.eq.s32.totalorder %s12, 0
    %p53 = por %p51, %p52
    %p54 = scmp.ne.s32.totalorder %s46, %s48
    %p55 = scmp.eq.s32.totalorder %s17, 1
    %p56 = por %p54, %p55
    %p57 = scmp.ne.s32.totalorder %s48, %s49
    %p58 = scmp.eq.s32.totalorder %s17, 0
    %p59 = por %p57, %p58
    %p60 = scmp.ne.s32.totalorder %s48, %s49
    %p61 = scmp.eq.s32.totalorder %s18, 1
    %p62 = por %p60, %p61
    %p64 = scmp.ne.s32.totalorder %s49, %s63
    %p65 = scmp.eq.s32.totalorder %s18, 0
    %p66 = por %p64, %p65
    %s68 = sadd.s32 %s67, 1
    %p71 = scmp.eq.s32.totalorder %s12, 1
    %p72 = scmp.ne.s32.totalorder %s67, %s69
    %p73 = scmp.eq.s32.totalorder %s12, 0
    %p74 = por %p72, %p73
    %p75 = scmp.ne.s32.totalorder %s67, %s69
    %p76 = scmp.eq.s32.totalorder %s17, 1
    %p77 = por %p75, %p76
    %p78 = scmp.ne.s32.totalorder %s69, %s70
    %p79 = scmp.eq.s32.totalorder %s17, 0
    %p80 = por %p78, %p79
    %p81 = scmp.ne.s32.totalorder %s69, %s70
    %p82 = scmp.eq.s32.totalorder %s18, 1
    %p83 = por %p81, %p82
    %p85 = scmp.ne.s32.totalorder %s70, %s84
    %p86 = scmp.eq.s32.totalorder %s18, 0
    %p87 = por %p85, %p86
    %s89 = sadd.s32 %s88, 1
    %p92 = scmp.eq.s32.totalorder %s12, 1
    %p93 = scmp.ne.s32.totalorder %s88, %s90
    %p94 = scmp.eq.s32.totalorder %s12, 0
    %p95 = por %p93, %p94
    %p96 = scmp.ne.s32.totalorder %s88, %s90
    %p97 = scmp.eq.s32.totalorder %s17, 1
    %p98 = por %p96, %p97
    %p99 = scmp.ne.s32.totalorder %s90, %s91
    %p100 = scmp.eq.s32.totalorder %s17, 0
    %p101 = por %p99, %p100
    %p102 = scmp.ne.s32.totalorder %s90, %s91
    %p103 = scmp.eq.s32.totalorder %s18, 1
    %p104 = por %p102, %p103
    %p106 = scmp.ne.s32.totalorder %s91, %s105
    %p107 = scmp.eq.s32.totalorder %s18, 0
    %p108 = por %p106, %p107
    %s109 = ssub.s32 %s12, %s19
    %p110 = scmp.eq.s32.totalorder %s109, 0
    %s112 = sadd.s32 %s111, 1
    %s113 = scalar_select %p110, %s111, %s112
    %p116 = pneg %p110
    %p117 = scmp.eq.s32.totalorder %s12, 1
    %p118 = por %p116, %p117
    %p119 = scmp.ne.s32.totalorder %s111, %s114
    %p120 = scmp.eq.s32.totalorder %s12, 0
    %p121 = por %p119, %p120
    %p122 = scmp.ne.s32.totalorder %s111, %s114
    %p123 = scmp.eq.s32.totalorder %s17, 1
    %p124 = por %p122, %p123
    %p125 = scmp.ne.s32.totalorder %s114, %s115
    %p126 = scmp.eq.s32.totalorder %s17, 0
    %p127 = por %p125, %p126
    %p128 = scmp.ne.s32.totalorder %s114, %s115
    %p129 = scmp.eq.s32.totalorder %s18, 1
    %p130 = por %p128, %p129
    %p132 = scmp.ne.s32.totalorder %s115, %s131
    %p133 = scmp.eq.s32.totalorder %s18, 0
    %p134 = por %p132, %p133
    %s135 = ssub.s32 %s12, %s19
    %p136 = scmp.eq.s32.totalorder %s135, 0
    %s138 = sadd.s32 %s137, 1
    %s139 = scalar_select %p136, %s137, %s138
    %p142 = pneg %p136
    %p143 = scmp.eq.s32.totalorder %s12, 1
    %p144 = por %p142, %p143
    %p145 = scmp.ne.s32.totalorder %s137, %s140
    %p146 = scmp.eq.s32.totalorder %s12, 0
    %p147 = por %p145, %p146
    %p148 = scmp.ne.s32.totalorder %s137, %s140
    %p149 = scmp.eq.s32.totalorder %s17, 1
    %p150 = por %p148, %p149
    %p151 = scmp.ne.s32.totalorder %s140, %s141
    %p152 = scmp.eq.s32.totalorder %s17, 0
    %p153 = por %p151, %p152
    %p154 = scmp.ne.s32.totalorder %s140, %s141
    %p155 = scmp.eq.s32.totalorder %s18, 1
    %p156 = por %p154, %p155
    %p158 = scmp.ne.s32.totalorder %s141, %s157
    %p159 = scmp.eq.s32.totalorder %s18, 0
    %p160 = por %p158, %p159
    %p161 = scmp.le.s32.totalorder 1, %s12
    %p162 = scmp.lt.s32.totalorder %s12, 3
    %p163 = pnand %p161, %p162
    %p164 = pneg %p163
    // Predicated region
    $region9: #{_lambda_.12} parent=5 // pred_check
      _
    $region10: #{_lambda_.12} parent=5 // pred_check_branch
      %166 = sbr.rel (%p163) target = $region12
    $region11: #{_lambda_.12} parent=5 // pred_region
      %s167 = ssub.s32 %s12, 1
      // Predicated region
      $region13: #{_lambda_.12} parent=11 // pred_check
        %p168 = pneg %p59
      $region14: #{_lambda_.12} parent=11 // pred_check_branch
        %170 = sbr.rel (%p168) target = $region16
      $region15: #{_lambda_.12} parent=11 // pred_region
        _
      $region16: #{_lambda_.12} parent=11 // pred_fallthru
        _
      // Predicated region
      $region17: #{_lambda_.12} parent=11 // pred_check
        %p171 = pneg %p80
      $region18: #{_lambda_.12} parent=11 // pred_check_branch
        %173 = sbr.rel (%p171) target = $region20
      $region19: #{_lambda_.12} parent=11 // pred_region
        _
      $region20: #{_lambda_.12} parent=11 // pred_fallthru
        _
      // Predicated region
      $region21: #{_lambda_.12} parent=11 // pred_check
        %p174 = pneg %p101
      $region22: #{_lambda_.12} parent=11 // pred_check_branch
        %176 = sbr.rel (%p174) target = $region24
      $region23: #{_lambda_.12} parent=11 // pred_region
        _
      $region24: #{_lambda_.12} parent=11 // pred_fallthru
        _
    $region12: #{_lambda_.12} parent=5 // pred_fallthru
      _
    %p177 = scmp.lt.s32.totalorder %s12, 2
    // Predicated region
    $region25: #{_lambda_.12} parent=5 // pred_check
      %p178 = pneg %p177
    $region26: #{_lambda_.12} parent=5 // pred_check_branch
      %180 = sbr.rel (%p178) target = $region28
    $region27: #{_lambda_.12} parent=5 // pred_region
      // Predicated region
      $region29: #{_lambda_.12} parent=27 // pred_check
        %p181 = pneg %p32
      $region30: #{_lambda_.12} parent=27 // pred_check_branch
        %183 = sbr.rel (%p181) target = $region32
      $region31: #{_lambda_.12} parent=27 // pred_region
        %s184 = smul.u32 32, %s12
        %p185 = scmp.lt.s32.totalorder %s184, 63
        %s186 = scalar_select %p185, %s184, 63
        %s187 = smul.addr %s186, 4
        %s188 = scalar_lea.vmem %s0, %s187
        %s189 = smul.u32 32, %s12
      $region32: #{_lambda_.12} parent=27 // pred_fallthru
        _
    $region28: #{_lambda_.12} parent=5 // pred_fallthru
      _
    %p190 = scmp.le.s32.totalorder 1, %s12
    %p191 = scmp.lt.s32.totalorder %s12, 3
    %p192 = pnand %p190, %p191
    %p193 = pneg %p192
    // Predicated region
    $region33: #{_lambda_.12} parent=5 // pred_check
      _
    $region34: #{_lambda_.12} parent=5 // pred_check_branch
      %195 = sbr.rel (%p192) target = $region36
    $region35: #{_lambda_.12} parent=5 // pred_region
      %s196 = ssub.s32 %s12, 1
      %s197 = smul.u32 32, %s17
      %p198 = scmp.lt.s32.totalorder %s197, 63
      %s199 = scalar_select %p198, %s197, 63
      %s200 = smul.addr %s199, 4
      %s201 = scalar_lea.vmem %s0, %s200
      %p202 = pneg %p38
      %p203 = pneg %p35
      %p204 = pneg %p59
      %p205 = pneg %p56
      %p206 = pneg %p80
      %p207 = pneg %p77
      %p208 = pneg %p101
      %p209 = pneg %p98
      %p210 = pneg %p127
      %p211 = pneg %p124
      %s212 = smul.u32 32, %s17
      %p213 = scmp.lt.s32.totalorder %s212, 63
      %s214 = scalar_select %p213, %s212, 63
      %s215 = smul.addr %s214, 8
      %s216 = scalar_lea.vmem %s4, %s215
      %p217 = pneg %p153
      %p218 = pneg %p150
      %s219 = smul.u32 32, %s17
      %p220 = scmp.lt.s32.totalorder %s219, 63
      %s221 = scalar_select %p220, %s219, 63
      %s222 = smul.addr %s221, 4
      %s223 = scalar_lea.vmem %s5, %s222
      %s224 = smul.u32 32, %s17
      %p225 = scmp.lt.s32.totalorder %s224, 63
      %s226 = scalar_select %p225, %s224, 63
      %s227 = smul.addr %s226, 4
      %s228 = scalar_lea.vmem %s0, %s227
      %s229 = smul.u32 32, %s17
      %s230 = smul.u32 32, %s17
      %p231 = scmp.lt.s32.totalorder %s230, 63
      %s232 = scalar_select %p231, %s230, 63
      %s233 = smul.addr %s232, 8
      %s234 = scalar_lea.vmem %s4, %s233
      %s235 = smul.u32 32, %s17
      %s236 = smul.u32 32, %s17
      %p237 = scmp.lt.s32.totalorder %s236, 63
      %s238 = scalar_select %p237, %s236, 63
      %s239 = smul.addr %s238, 4
      %s240 = scalar_lea.vmem %s5, %s239
      %s241 = smul.u32 32, %s17
      %v243 = vld [vmem:[%s228] sm:$0xf]
      %v244 = vld [vmem:[%s228 + $0x4] sm:$0xf]
      %v245 = vld [vmem:[%s228 + $0x8] sm:$0xf]
      %v246 = vld [vmem:[%s228 + $0xc] sm:$0xf]
      %v247 = vld [vmem:[%s228 + $0x10] sm:$0xf]
      %v248 = vld [vmem:[%s228 + $0x14] sm:$0xf]
      %v249 = vld [vmem:[%s228 + $0x18] sm:$0xf]
      %v250 = vld [vmem:[%s228 + $0x1c] sm:$0xf]
      %v251 = vld [vmem:[%s228 + $0x20] sm:$0xf]
      %v252 = vld [vmem:[%s228 + $0x24] sm:$0xf]
      %v253 = vld [vmem:[%s228 + $0x28] sm:$0xf]
      %v254 = vld [vmem:[%s228 + $0x2c] sm:$0xf]
      %v255 = vld [vmem:[%s228 + $0x30] sm:$0xf]
      %v256 = vld [vmem:[%s228 + $0x34] sm:$0xf]
      %v257 = vld [vmem:[%s228 + $0x38] sm:$0xf]
      %v258 = vld [vmem:[%s228 + $0x3c] sm:$0xf]
      %v259 = vld [vmem:[%s228 + $0x40] sm:$0xf]
      %v260 = vld [vmem:[%s228 + $0x44] sm:$0xf]
      %v261 = vld [vmem:[%s228 + $0x48] sm:$0xf]
      %v262 = vld [vmem:[%s228 + $0x4c] sm:$0xf]
      %v263 = vld [vmem:[%s228 + $0x50] sm:$0xf]
      %v264 = vld [vmem:[%s228 + $0x54] sm:$0xf]
      %v265 = vld [vmem:[%s228 + $0x58] sm:$0xf]
      %v266 = vld [vmem:[%s228 + $0x5c] sm:$0xf]
      %v267 = vld [vmem:[%s228 + $0x60] sm:$0xf]
      %v268 = vld [vmem:[%s228 + $0x64] sm:$0xf]
      %v269 = vld [vmem:[%s228 + $0x68] sm:$0xf]
      %v270 = vld [vmem:[%s228 + $0x6c] sm:$0xf]
      %v271 = vld [vmem:[%s228 + $0x70] sm:$0xf]
      %v272 = vld [vmem:[%s228 + $0x74] sm:$0xf]
      %v273 = vld [vmem:[%s228 + $0x78] sm:$0xf]
      %v274 = vld [vmem:[%s228 + $0x7c] sm:$0xf]
      %v275 = vld [vmem:[%s1] sm:$0xf]
      %v276 = vld [vmem:[%s1 + $0x4] sm:$0xf]
      %v277 = vld [vmem:[%s1 + $0x8] sm:$0xf]
      %v278 = vld [vmem:[%s1 + $0xc] sm:$0xf]
      %v279 = vld [vmem:[%s1 + $0x10] sm:$0xf]
      %v280 = vld [vmem:[%s1 + $0x14] sm:$0xf]
      %v281 = vld [vmem:[%s1 + $0x18] sm:$0xf]
      %v282 = vld [vmem:[%s1 + $0x1c] sm:$0xf]
      %v283 = vld [vmem:[%s1 + $0x20] sm:$0xf]
      %v316 = vunpack.c.l.b16 %v243
      %v317 = vunpack.c.l.b16 %v244
      %v318 = vunpack.c.l.b16 %v245
      %v319 = vunpack.c.l.b16 %v246
      %v320 = vunpack.c.l.b16 %v247
      %v321 = vunpack.c.l.b16 %v248
      %v322 = vunpack.c.l.b16 %v249
      %v323 = vunpack.c.l.b16 %v250
      %v324 = vunpack.c.l.b16 %v251
      %v325 = vunpack.c.l.b16 %v252
      %v326 = vunpack.c.l.b16 %v253
      %v327 = vunpack.c.l.b16 %v254
      %v328 = vunpack.c.l.b16 %v255
      %v329 = vunpack.c.l.b16 %v256
      %v330 = vunpack.c.l.b16 %v257
      %v331 = vunpack.c.l.b16 %v258
      %v332 = vunpack.c.l.b16 %v259
      %v333 = vunpack.c.l.b16 %v260
      %v334 = vunpack.c.l.b16 %v261
      %v335 = vunpack.c.l.b16 %v262
      %v336 = vunpack.c.l.b16 %v263
      %v337 = vunpack.c.l.b16 %v264
      %v338 = vunpack.c.l.b16 %v265
      %v339 = vunpack.c.l.b16 %v266
      %v340 = vunpack.c.l.b16 %v267
      %v341 = vunpack.c.l.b16 %v268
      %v342 = vunpack.c.l.b16 %v269
      %v343 = vunpack.c.l.b16 %v270
      %v344 = vunpack.c.l.b16 %v271
      %v345 = vunpack.c.l.b16 %v272
      %v346 = vunpack.c.l.b16 %v273
      %v347 = vunpack.c.l.b16 %v274
      %v348 = vpack.c.b16 %v317, %v316
      %v349 = vpack.c.b16 %v319, %v318
      %v350 = vpack.c.b16 %v321, %v320
      %v351 = vpack.c.b16 %v323, %v322
      %v352 = vpack.c.b16 %v325, %v324
      %v353 = vpack.c.b16 %v327, %v326
      %v354 = vpack.c.b16 %v329, %v328
      %v355 = vpack.c.b16 %v331, %v330
      %v356 = vpack.c.b16 %v333, %v332
      %v357 = vpack.c.b16 %v335, %v334
      %v358 = vpack.c.b16 %v337, %v336
      %v359 = vpack.c.b16 %v339, %v338
      %v360 = vpack.c.b16 %v341, %v340
      %v361 = vpack.c.b16 %v343, %v342
      %v362 = vpack.c.b16 %v345, %v344
      %v363 = vpack.c.b16 %v347, %v346
      %v373 = vunpack.c.l.b16 %v275
      %v374 = vunpack.c.l.b16 %v276
      %v375 = vunpack.c.l.b16 %v277
      %v376 = vunpack.c.l.b16 %v278
      %v377 = vunpack.c.l.b16 %v279
      %v378 = vunpack.c.l.b16 %v280
      %v379 = vunpack.c.l.b16 %v281
      %v380 = vunpack.c.l.b16 %v282
      %v381 = vunpack.c.l.b16 %v283
      %v382 = vpack.c.b16 %v374, %v373
      %v383 = vpack.c.b16 %v376, %v375
      %v384 = vpack.c.b16 %v378, %v377
      %v385 = vpack.c.b16 %v380, %v379
      %v386 = vpack.c.b16 %v381, %v381
      %vm391 = vcmask 588800
      %v393 = vsel %vm391, %v348, 0
      %v396 = vsel %vm391, %v349, 0
      %v399 = vsel %vm391, %v350, 0
      %v402 = vsel %vm391, %v351, 0
      %v405 = vsel %vm391, %v352, 0
      %v408 = vsel %vm391, %v353, 0
      %v411 = vsel %vm391, %v354, 0
      %v414 = vsel %vm391, %v355, 0
      %v417 = vsel %vm391, %v356, 0
      %v420 = vsel %vm391, %v357, 0
      %v423 = vsel %vm391, %v358, 0
      %v426 = vsel %vm391, %v359, 0
      %v429 = vsel %vm391, %v360, 0
      %v432 = vsel %vm391, %v361, 0
      %v435 = vsel %vm391, %v362, 0
      %v438 = vsel %vm391, %v363, 0
      %vm440 = vcmask 1043456
      %v442 = vsel %vm440, %v386, 0
      %444 = vmatprep.subr.bf16.mxu0 0
      %445 = vmatpush1.bf16.msra.mxu0 %v382
      %446 = vmatprep.subr.bf16.mxu0 0
      %447 = vmatpush1.bf16.msra.mxu0 %v383
      %448 = vmatprep.subr.bf16.mxu0 0
      %449 = vmatpush1.bf16.msra.mxu0 %v384
      %450 = vmatprep.subr.bf16.mxu0 0
      %451 = vmatpush1.bf16.msra.mxu0 %v385
      %452 = vmatprep.subr.bf16.mxu0 0
      %453 = vmatpush1.bf16.msra.mxu0 %v442
      %454 = vmatprep.subr.bf16.mxu0 0
      %455 = vmatpush1.bf16.msra.mxu0 0
      %456 = vmatprep.subr.bf16.mxu0 0
      %457 = vmatpush1.bf16.msra.mxu0 0
      %458 = vmatprep.subr.bf16.mxu0 0
      %459 = vmatpush1.bf16.msra.mxu0 0
      %460 = vmatprep.subr.bf16.mxu0 0
      %461 = vmatpush1.bf16.msra.mxu0 0
      %462 = vmatprep.subr.bf16.mxu0 0
      %463 = vmatpush1.bf16.msra.mxu0 0
      %464 = vmatprep.subr.bf16.mxu0 0
      %465 = vmatpush1.bf16.msra.mxu0 0
      %466 = vmatprep.subr.bf16.mxu0 0
      %467 = vmatpush1.bf16.msra.mxu0 0
      %468 = vmatprep.subr.bf16.mxu0 0
      %469 = vmatpush1.bf16.msra.mxu0 0
      %470 = vmatprep.subr.bf16.mxu0 0
      %471 = vmatpush1.bf16.msra.mxu0 0
      %472 = vmatprep.subr.bf16.mxu0 0
      %473 = vmatpush1.bf16.msra.mxu0 0
      %474 = vmatprep.subr.bf16.mxu0 0
      %475 = vmatpush1.bf16.msra.mxu0 0
      %476 = vmatprep.mubr.bf16.mxu0 0
      %477 = vmatmul.mubr.bf16.gmra.mrb[0].mxu0 %v393
      %v478 = vpop.f32.mrb[0].mxu0
      %v479 = vadd.f32 0.0, %v478
      %v480 = vpop.f32.mrb[0].mxu0
      %v481 = vpop.f32.mrb[0].mxu0
      %v482 = vadd.f32 0.0, %v481
      %v483 = vpop.f32.mrb[0].mxu0
      %484 = vmatprep.mubr.bf16.mxu0 0
      %485 = vmatmul.mubr.bf16.gmra.mrb[0].mxu0 %v396
      %v486 = vpop.f32.mrb[0].mxu0
      %v487 = vadd.f32 0.0, %v486
      %v488 = vpop.f32.mrb[0].mxu0
      %v489 = vpop.f32.mrb[0].mxu0
      %v490 = vadd.f32 0.0, %v489
      %v491 = vpop.f32.mrb[0].mxu0
      %492 = vmatprep.mubr.bf16.mxu0 0
      %493 = vmatmul.mubr.bf16.gmra.mrb[0].mxu0 %v399
      %v494 = vpop.f32.mrb[0].mxu0
      %v495 = vadd.f32 0.0, %v494
      %v496 = vpop.f32.mrb[0].mxu0
      %v497 = vpop.f32.mrb[0].mxu0
      %v498 = vadd.f32 0.0, %v497
      %v499 = vpop.f32.mrb[0].mxu0
      %500 = vmatprep.mubr.bf16.mxu0 0
      %501 = vmatmul.mubr.bf16.gmra.mrb[0].mxu0 %v402
      %v502 = vpop.f32.mrb[0].mxu0
      %v503 = vadd.f32 0.0, %v502
      %v504 = vpop.f32.mrb[0].mxu0
      %v505 = vpop.f32.mrb[0].mxu0
      %v506 = vadd.f32 0.0, %v505
      %v507 = vpop.f32.mrb[0].mxu0
      %508 = vmatprep.mubr.bf16.mxu0 0
      %509 = vmatmul.mubr.bf16.gmra.mrb[0].mxu0 %v405
      %v510 = vpop.f32.mrb[0].mxu0
      %v511 = vadd.f32 0.0, %v510
      %v512 = vpop.f32.mrb[0].mxu0
      %v513 = vpop.f32.mrb[0].mxu0
      %v514 = vadd.f32 0.0, %v513
      %v515 = vpop.f32.mrb[0].mxu0
      %516 = vmatprep.mubr.bf16.mxu0 0
      %517 = vmatmul.mubr.bf16.gmra.mrb[0].mxu0 %v408
      %v518 = vpop.f32.mrb[0].mxu0
      %v519 = vadd.f32 0.0, %v518
      %v520 = vpop.f32.mrb[0].mxu0
      %v521 = vpop.f32.mrb[0].mxu0
      %v522 = vadd.f32 0.0, %v521
      %v523 = vpop.f32.mrb[0].mxu0
      %524 = vmatprep.mubr.bf16.mxu0 0
      %525 = vmatmul.mubr.bf16.gmra.mrb[0].mxu0 %v411
      %v526 = vpop.f32.mrb[0].mxu0
      %v527 = vadd.f32 0.0, %v526
      %v528 = vpop.f32.mrb[0].mxu0
      %v529 = vpop.f32.mrb[0].mxu0
      %v530 = vadd.f32 0.0, %v529
      %v531 = vpop.f32.mrb[0].mxu0
      %532 = vmatprep.mubr.bf16.mxu0 0
      %533 = vmatmul.mubr.bf16.gmra.mrb[0].mxu0 %v414
      %v534 = vpop.f32.mrb[0].mxu0
      %v535 = vadd.f32 0.0, %v534
      %v536 = vpop.f32.mrb[0].mxu0
      %v537 = vpop.f32.mrb[0].mxu0
      %v538 = vadd.f32 0.0, %v537
      %v539 = vpop.f32.mrb[0].mxu0
      %540 = vmatprep.mubr.bf16.mxu0 0
      %541 = vmatmul.mubr.bf16.gmra.mrb[0].mxu0 %v417
      %v542 = vpop.f32.mrb[0].mxu0
      %v543 = vadd.f32 0.0, %v542
      %v544 = vpop.f32.mrb[0].mxu0
      %v545 = vpop.f32.mrb[0].mxu0
      %v546 = vadd.f32 0.0, %v545
      %v547 = vpop.f32.mrb[0].mxu0
      %548 = vmatprep.mubr.bf16.mxu0 0
      %549 = vmatmul.mubr.bf16.gmra.mrb[0].mxu0 %v420
      %v550 = vpop.f32.mrb[0].mxu0
      %v551 = vadd.f32 0.0, %v550
      %v552 = vpop.f32.mrb[0].mxu0
      %v553 = vpop.f32.mrb[0].mxu0
      %v554 = vadd.f32 0.0, %v553
      %v555 = vpop.f32.mrb[0].mxu0
      %556 = vmatprep.mubr.bf16.mxu0 0
      %557 = vmatmul.mubr.bf16.gmra.mrb[0].mxu0 %v423
      %v558 = vpop.f32.mrb[0].mxu0
      %v559 = vadd.f32 0.0, %v558
      %v560 = vpop.f32.mrb[0].mxu0
      %v561 = vpop.f32.mrb[0].mxu0
      %v562 = vadd.f32 0.0, %v561
      %v563 = vpop.f32.mrb[0].mxu0
      %564 = vmatprep.mubr.bf16.mxu0 0
      %565 = vmatmul.mubr.bf16.gmra.mrb[0].mxu0 %v426
      %v566 = vpop.f32.mrb[0].mxu0
      %v567 = vadd.f32 0.0, %v566
      %v568 = vpop.f32.mrb[0].mxu0
      %v569 = vpop.f32.mrb[0].mxu0
      %v570 = vadd.f32 0.0, %v569
      %v571 = vpop.f32.mrb[0].mxu0
      %572 = vmatprep.mubr.bf16.mxu0 0
      %573 = vmatmul.mubr.bf16.gmra.mrb[0].mxu0 %v429
      %v574 = vpop.f32.mrb[0].mxu0
      %v575 = vadd.f32 0.0, %v574
      %v576 = vpop.f32.mrb[0].mxu0
      %v577 = vpop.f32.mrb[0].mxu0
      %v578 = vadd.f32 0.0, %v577
      %v579 = vpop.f32.mrb[0].mxu0
      %580 = vmatprep.mubr.bf16.mxu0 0
      %581 = vmatmul.mubr.bf16.gmra.mrb[0].mxu0 %v432
      %v582 = vpop.f32.mrb[0].mxu0
      %v583 = vadd.f32 0.0, %v582
      %v584 = vpop.f32.mrb[0].mxu0
      %v585 = vpop.f32.mrb[0].mxu0
      %v586 = vadd.f32 0.0, %v585
      %v587 = vpop.f32.mrb[0].mxu0
      %588 = vmatprep.mubr.bf16.mxu0 0
      %589 = vmatmul.mubr.bf16.gmra.mrb[0].mxu0 %v435
      %v590 = vpop.f32.mrb[0].mxu0
      %v591 = vadd.f32 0.0, %v590
      %v592 = vpop.f32.mrb[0].mxu0
      %v593 = vpop.f32.mrb[0].mxu0
      %v594 = vadd.f32 0.0, %v593
      %v595 = vpop.f32.mrb[0].mxu0
      %596 = vmatprep.mubr.bf16.mxu0 0
      %597 = vmatmul.mubr.bf16.gmra.mrb[0].mxu0 %v438
      %v598 = vpop.f32.mrb[0].mxu0
      %v599 = vadd.f32 0.0, %v598
      %v600 = vpop.f32.mrb[0].mxu0
      %v601 = vpop.f32.mrb[0].mxu0
      %v602 = vadd.f32 0.0, %v601
      %v603 = vpop.f32.mrb[0].mxu0
      %604 = vdwg.mxu0
      %vm605 = vcmask 64512
      %606 = vst.msk [vmem:[%s234] sm:$0xff] %vm605, %v479
      %607 = vst.msk [vmem:[%s234 + $0x8] sm:$0xff] %vm605, %v482
      %608 = vst.msk [vmem:[%s234 + $0x10] sm:$0xff] %vm605, %v487
      %609 = vst.msk [vmem:[%s234 + $0x18] sm:$0xff] %vm605, %v490
      %610 = vst.msk [vmem:[%s234 + $0x20] sm:$0xff] %vm605, %v495
      %611 = vst.msk [vmem:[%s234 + $0x28] sm:$0xff] %vm605, %v498
      %612 = vst.msk [vmem:[%s234 + $0x30] sm:$0xff] %vm605, %v503
      %613 = vst.msk [vmem:[%s234 + $0x38] sm:$0xff] %vm605, %v506
      %614 = vst.msk [vmem:[%s234 + $0x40] sm:$0xff] %vm605, %v511
      %615 = vst.msk [vmem:[%s234 + $0x48] sm:$0xff] %vm605, %v514
      %616 = vst.msk [vmem:[%s234 + $0x50] sm:$0xff] %vm605, %v519
      %617 = vst.msk [vmem:[%s234 + $0x58] sm:$0xff] %vm605, %v522
      %618 = vst.msk [vmem:[%s234 + $0x60] sm:$0xff] %vm605, %v527
      %619 = vst.msk [vmem:[%s234 + $0x68] sm:$0xff] %vm605, %v530
      %620 = vst.msk [vmem:[%s234 + $0x70] sm:$0xff] %vm605, %v535
      %621 = vst.msk [vmem:[%s234 + $0x78] sm:$0xff] %vm605, %v538
      %622 = vst.msk [vmem:[%s234 + $0x80] sm:$0xff] %vm605, %v543
      %623 = vst.msk [vmem:[%s234 + $0x88] sm:$0xff] %vm605, %v546
      %624 = vst.msk [vmem:[%s234 + $0x90] sm:$0xff] %vm605, %v551
      %625 = vst.msk [vmem:[%s234 + $0x98] sm:$0xff] %vm605, %v554
      %626 = vst.msk [vmem:[%s234 + $0xa0] sm:$0xff] %vm605, %v559
      %627 = vst.msk [vmem:[%s234 + $0xa8] sm:$0xff] %vm605, %v562
      %628 = vst.msk [vmem:[%s234 + $0xb0] sm:$0xff] %vm605, %v567
      %629 = vst.msk [vmem:[%s234 + $0xb8] sm:$0xff] %vm605, %v570
      %630 = vst.msk [vmem:[%s234 + $0xc0] sm:$0xff] %vm605, %v575
      %631 = vst.msk [vmem:[%s234 + $0xc8] sm:$0xff] %vm605, %v578
      %632 = vst.msk [vmem:[%s234 + $0xd0] sm:$0xff] %vm605, %v583
      %633 = vst.msk [vmem:[%s234 + $0xd8] sm:$0xff] %vm605, %v586
      %634 = vst.msk [vmem:[%s234 + $0xe0] sm:$0xff] %vm605, %v591
      %635 = vst.msk [vmem:[%s234 + $0xe8] sm:$0xff] %vm605, %v594
      %636 = vst.msk [vmem:[%s234 + $0xf0] sm:$0xff] %vm605, %v599
      %637 = vst.msk [vmem:[%s234 + $0xf8] sm:$0xff] %vm605, %v602
      %v638 = vld [vmem:[%s2] sm:$0x1]
      %v640 = vlaneseq
      %v641 = vshrl.u32 %v640, 7
      %v642 = vsub.s32 0, %v641
      %v643 = vrot.slane %v638, %v642
      %v645 = vmul.f32 %v479, %v643
      %v646 = vmul.f32 %v482, %v643
      %v647 = vmul.f32 %v487, %v643
      %v648 = vmul.f32 %v490, %v643
      %v649 = vmul.f32 %v495, %v643
      %v650 = vmul.f32 %v498, %v643
      %v651 = vmul.f32 %v503, %v643
      %v652 = vmul.f32 %v506, %v643
      %v653 = vmul.f32 %v511, %v643
      %v654 = vmul.f32 %v514, %v643
      %v655 = vmul.f32 %v519, %v643
      %v656 = vmul.f32 %v522, %v643
      %v657 = vmul.f32 %v527, %v643
      %v658 = vmul.f32 %v530, %v643
      %v659 = vmul.f32 %v535, %v643
      %v660 = vmul.f32 %v538, %v643
      %v661 = vmul.f32 %v543, %v643
      %v662 = vmul.f32 %v546, %v643
      %v663 = vmul.f32 %v551, %v643
      %v664 = vmul.f32 %v554, %v643
      %v665 = vmul.f32 %v559, %v643
      %v666 = vmul.f32 %v562, %v643
      %v667 = vmul.f32 %v567, %v643
      %v668 = vmul.f32 %v570, %v643
      %v669 = vmul.f32 %v575, %v643
      %v670 = vmul.f32 %v578, %v643
      %v671 = vmul.f32 %v583, %v643
      %v672 = vmul.f32 %v586, %v643
      %v673 = vmul.f32 %v591, %v643
      %v674 = vmul.f32 %v594, %v643
      %v675 = vmul.f32 %v599, %v643
      %v676 = vmul.f32 %v602, %v643
      %v677 = vld [vmem:[%s3] sm:$0x1]
      %v679 = vlaneseq
      %v680 = vshrl.u32 %v679, 7
      %v681 = vsub.s32 0, %v680
      %v682 = vrot.slane %v677, %v681
      %v684 = vadd.f32 %v645, %v682
      %v685 = vadd.f32 %v646, %v682
      %v686 = vadd.f32 %v647, %v682
      %v687 = vadd.f32 %v648, %v682
      %v688 = vadd.f32 %v649, %v682
      %v689 = vadd.f32 %v650, %v682
      %v690 = vadd.f32 %v651, %v682
      %v691 = vadd.f32 %v652, %v682
      %v692 = vadd.f32 %v653, %v682
      %v693 = vadd.f32 %v654, %v682
      %v694 = vadd.f32 %v655, %v682
      %v695 = vadd.f32 %v656, %v682
      %v696 = vadd.f32 %v657, %v682
      %v697 = vadd.f32 %v658, %v682
      %v698 = vadd.f32 %v659, %v682
      %v699 = vadd.f32 %v660, %v682
      %v700 = vadd.f32 %v661, %v682
      %v701 = vadd.f32 %v662, %v682
      %v702 = vadd.f32 %v663, %v682
      %v703 = vadd.f32 %v664, %v682
      %v704 = vadd.f32 %v665, %v682
      %v705 = vadd.f32 %v666, %v682
      %v706 = vadd.f32 %v667, %v682
      %v707 = vadd.f32 %v668, %v682
      %v708 = vadd.f32 %v669, %v682
      %v709 = vadd.f32 %v670, %v682
      %v710 = vadd.f32 %v671, %v682
      %v711 = vadd.f32 %v672, %v682
      %v712 = vadd.f32 %v673, %v682
      %v713 = vadd.f32 %v674, %v682
      %v714 = vadd.f32 %v675, %v682
      %v715 = vadd.f32 %v676, %v682
      %v716 = vmax.f32 %v684, 0.0
      %v717 = vmax.f32 %v685, 0.0
      %v718 = vmax.f32 %v686, 0.0
      %v719 = vmax.f32 %v687, 0.0
      %v720 = vmax.f32 %v688, 0.0
      %v721 = vmax.f32 %v689, 0.0
      %v722 = vmax.f32 %v690, 0.0
      %v723 = vmax.f32 %v691, 0.0
      %v724 = vmax.f32 %v692, 0.0
      %v725 = vmax.f32 %v693, 0.0
      %v726 = vmax.f32 %v694, 0.0
      %v727 = vmax.f32 %v695, 0.0
      %v728 = vmax.f32 %v696, 0.0
      %v729 = vmax.f32 %v697, 0.0
      %v730 = vmax.f32 %v698, 0.0
      %v731 = vmax.f32 %v699, 0.0
      %v732 = vmax.f32 %v700, 0.0
      %v733 = vmax.f32 %v701, 0.0
      %v734 = vmax.f32 %v702, 0.0
      %v735 = vmax.f32 %v703, 0.0
      %v736 = vmax.f32 %v704, 0.0
      %v737 = vmax.f32 %v705, 0.0
      %v738 = vmax.f32 %v706, 0.0
      %v739 = vmax.f32 %v707, 0.0
      %v740 = vmax.f32 %v708, 0.0
      %v741 = vmax.f32 %v709, 0.0
      %v742 = vmax.f32 %v710, 0.0
      %v743 = vmax.f32 %v711, 0.0
      %v744 = vmax.f32 %v712, 0.0
      %v745 = vmax.f32 %v713, 0.0
      %v746 = vmax.f32 %v714, 0.0
      %v747 = vmax.f32 %v715, 0.0
      %v748 = vpack.c.bf16 %v717, %v716
      %v749 = vpack.c.bf16 %v719, %v718
      %v750 = vpack.c.bf16 %v721, %v720
      %v751 = vpack.c.bf16 %v723, %v722
      %v752 = vpack.c.bf16 %v725, %v724
      %v753 = vpack.c.bf16 %v727, %v726
      %v754 = vpack.c.bf16 %v729, %v728
      %v755 = vpack.c.bf16 %v731, %v730
      %v756 = vpack.c.bf16 %v733, %v732
      %v757 = vpack.c.bf16 %v735, %v734
      %v758 = vpack.c.bf16 %v737, %v736
      %v759 = vpack.c.bf16 %v739, %v738
      %v760 = vpack.c.bf16 %v741, %v740
      %v761 = vpack.c.bf16 %v743, %v742
      %v762 = vpack.c.bf16 %v745, %v744
      %v763 = vpack.c.bf16 %v747, %v746
      %v780 = vunpack.c.l.b16 %v748
      %v781 = vunpack.c.h.b16 %v748
      %v782 = vunpack.c.l.b16 %v749
      %v783 = vunpack.c.h.b16 %v749
      %v784 = vunpack.c.l.b16 %v750
      %v785 = vunpack.c.h.b16 %v750
      %v786 = vunpack.c.l.b16 %v751
      %v787 = vunpack.c.h.b16 %v751
      %v788 = vunpack.c.l.b16 %v752
      %v789 = vunpack.c.h.b16 %v752
      %v790 = vunpack.c.l.b16 %v753
      %v791 = vunpack.c.h.b16 %v753
      %v792 = vunpack.c.l.b16 %v754
      %v793 = vunpack.c.h.b16 %v754
      %v794 = vunpack.c.l.b16 %v755
      %v795 = vunpack.c.h.b16 %v755
      %v796 = vunpack.c.l.b16 %v756
      %v797 = vunpack.c.h.b16 %v756
      %v798 = vunpack.c.l.b16 %v757
      %v799 = vunpack.c.h.b16 %v757
      %v800 = vunpack.c.l.b16 %v758
      %v801 = vunpack.c.h.b16 %v758
      %v802 = vunpack.c.l.b16 %v759
      %v803 = vunpack.c.h.b16 %v759
      %v804 = vunpack.c.l.b16 %v760
      %v805 = vunpack.c.h.b16 %v760
      %v806 = vunpack.c.l.b16 %v761
      %v807 = vunpack.c.h.b16 %v761
      %v808 = vunpack.c.l.b16 %v762
      %v809 = vunpack.c.h.b16 %v762
      %v810 = vunpack.c.l.b16 %v763
      %v811 = vunpack.c.h.b16 %v763
      %v812 = vpack.c.b16 %v780, %v780
      %v813 = vpack.c.b16 %v781, %v781
      %v814 = vpack.c.b16 %v782, %v782
      %v815 = vpack.c.b16 %v783, %v783
      %v816 = vpack.c.b16 %v784, %v784
      %v817 = vpack.c.b16 %v785, %v785
      %v818 = vpack.c.b16 %v786, %v786
      %v819 = vpack.c.b16 %v787, %v787
      %v820 = vpack.c.b16 %v788, %v788
      %v821 = vpack.c.b16 %v789, %v789
      %v822 = vpack.c.b16 %v790, %v790
      %v823 = vpack.c.b16 %v791, %v791
      %v824 = vpack.c.b16 %v792, %v792
      %v825 = vpack.c.b16 %v793, %v793
      %v826 = vpack.c.b16 %v794, %v794
      %v827 = vpack.c.b16 %v795, %v795
      %v828 = vpack.c.b16 %v796, %v796
      %v829 = vpack.c.b16 %v797, %v797
      %v830 = vpack.c.b16 %v798, %v798
      %v831 = vpack.c.b16 %v799, %v799
      %v832 = vpack.c.b16 %v800, %v800
      %v833 = vpack.c.b16 %v801, %v801
      %v834 = vpack.c.b16 %v802, %v802
      %v835 = vpack.c.b16 %v803, %v803
      %v836 = vpack.c.b16 %v804, %v804
      %v837 = vpack.c.b16 %v805, %v805
      %v838 = vpack.c.b16 %v806, %v806
      %v839 = vpack.c.b16 %v807, %v807
      %v840 = vpack.c.b16 %v808, %v808
      %v841 = vpack.c.b16 %v809, %v809
      %v842 = vpack.c.b16 %v810, %v810
      %v843 = vpack.c.b16 %v811, %v811
      %vm876 = vcmask 60416
      %877 = vst.msk [vmem:[%s240] sm:$0xf] %vm876, %v812
      %878 = vst.msk [vmem:[%s240 + $0x4] sm:$0xf] %vm876, %v813
      %879 = vst.msk [vmem:[%s240 + $0x8] sm:$0xf] %vm876, %v814
      %880 = vst.msk [vmem:[%s240 + $0xc] sm:$0xf] %vm876, %v815
      %881 = vst.msk [vmem:[%s240 + $0x10] sm:$0xf] %vm876, %v816
      %882 = vst.msk [vmem:[%s240 + $0x14] sm:$0xf] %vm876, %v817
      %883 = vst.msk [vmem:[%s240 + $0x18] sm:$0xf] %vm876, %v818
      %884 = vst.msk [vmem:[%s240 + $0x1c] sm:$0xf] %vm876, %v819
      %885 = vst.msk [vmem:[%s240 + $0x20] sm:$0xf] %vm876, %v820
      %886 = vst.msk [vmem:[%s240 + $0x24] sm:$0xf] %vm876, %v821
      %887 = vst.msk [vmem:[%s240 + $0x28] sm:$0xf] %vm876, %v822
      %888 = vst.msk [vmem:[%s240 + $0x2c] sm:$0xf] %vm876, %v823
      %889 = vst.msk [vmem:[%s240 + $0x30] sm:$0xf] %vm876, %v824
      %890 = vst.msk [vmem:[%s240 + $0x34] sm:$0xf] %vm876, %v825
      %891 = vst.msk [vmem:[%s240 + $0x38] sm:$0xf] %vm876, %v826
      %892 = vst.msk [vmem:[%s240 + $0x3c] sm:$0xf] %vm876, %v827
      %893 = vst.msk [vmem:[%s240 + $0x40] sm:$0xf] %vm876, %v828
      %894 = vst.msk [vmem:[%s240 + $0x44] sm:$0xf] %vm876, %v829
      %895 = vst.msk [vmem:[%s240 + $0x48] sm:$0xf] %vm876, %v830
      %896 = vst.msk [vmem:[%s240 + $0x4c] sm:$0xf] %vm876, %v831
      %897 = vst.msk [vmem:[%s240 + $0x50] sm:$0xf] %vm876, %v832
      %898 = vst.msk [vmem:[%s240 + $0x54] sm:$0xf] %vm876, %v833
      %899 = vst.msk [vmem:[%s240 + $0x58] sm:$0xf] %vm876, %v834
      %900 = vst.msk [vmem:[%s240 + $0x5c] sm:$0xf] %vm876, %v835
      %901 = vst.msk [vmem:[%s240 + $0x60] sm:$0xf] %vm876, %v836
      %902 = vst.msk [vmem:[%s240 + $0x64] sm:$0xf] %vm876, %v837
      %903 = vst.msk [vmem:[%s240 + $0x68] sm:$0xf] %vm876, %v838
      %904 = vst.msk [vmem:[%s240 + $0x6c] sm:$0xf] %vm876, %v839
      %905 = vst.msk [vmem:[%s240 + $0x70] sm:$0xf] %vm876, %v840
      %906 = vst.msk [vmem:[%s240 + $0x74] sm:$0xf] %vm876, %v841
      %907 = vst.msk [vmem:[%s240 + $0x78] sm:$0xf] %vm876, %v842
      %908 = vst.msk [vmem:[%s240 + $0x7c] sm:$0xf] %vm876, %v843
      %s909 = smul.u32 32, %s17
      %p910 = scmp.lt.s32.totalorder %s909, 63
      %s911 = scalar_select %p910, %s909, 63
      %s912 = smul.addr %s911, 8
      %s913 = scalar_lea.vmem %s4, %s912
      %s914 = smul.u32 32, %s17
      %p915 = scmp.lt.s32.totalorder %s914, 63
      %s916 = scalar_select %p915, %s914, 63
      %s917 = smul.addr %s916, 4
      %s918 = scalar_lea.vmem %s5, %s917
      // Predicated region
      $region37: #{_lambda_.12} parent=35 // pred_check
        %p919 = pneg %p124
      $region38: #{_lambda_.12} parent=35 // pred_check_branch
        %921 = sbr.rel (%p919) target = $region40
      $region39: #{_lambda_.12} parent=35 // pred_region
        %s922 = smul.u32 32, %s17
      $region40: #{_lambda_.12} parent=35 // pred_fallthru
        _
      // Predicated region
      $region41: #{_lambda_.12} parent=35 // pred_check
        %p923 = pneg %p150
      $region42: #{_lambda_.12} parent=35 // pred_check_branch
        %925 = sbr.rel (%p923) target = $region44
      $region43: #{_lambda_.12} parent=35 // pred_region
        %s926 = smul.u32 32, %s17
      $region44: #{_lambda_.12} parent=35 // pred_fallthru
        _
    $region36: #{_lambda_.12} parent=5 // pred_fallthru
      _
    %p927 = scmp.le.s32.totalorder 2, %s12
    // Predicated region
    $region45: #{_lambda_.12} parent=5 // pred_check
      %p928 = pneg %p927
    $region46: #{_lambda_.12} parent=5 // pred_check_branch
      %930 = sbr.rel (%p928) target = $region48
    $region47: #{_lambda_.12} parent=5 // pred_region
      %s931 = ssub.s32 %s12, 2
      // Predicated region
      $region49: #{_lambda_.12} parent=47 // pred_check
        %p932 = pneg %p130
      $region50: #{_lambda_.12} parent=47 // pred_check_branch
        %934 = sbr.rel (%p932) target = $region52
      $region51: #{_lambda_.12} parent=47 // pred_region
        %s935 = smul.u32 32, %s18
        %p936 = scmp.lt.s32.totalorder %s935, 63
        %s937 = scalar_select %p936, %s935, 63
        %s938 = smul.addr %s937, 8
        %s939 = scalar_lea.vmem %s4, %s938
      $region52: #{_lambda_.12} parent=47 // pred_fallthru
        _
      // Predicated region
      $region53: #{_lambda_.12} parent=47 // pred_check
        %p940 = pneg %p156
      $region54: #{_lambda_.12} parent=47 // pred_check_branch
        %942 = sbr.rel (%p940) target = $region56
      $region55: #{_lambda_.12} parent=47 // pred_region
        %s943 = smul.u32 32, %s18
        %p944 = scmp.lt.s32.totalorder %s943, 63
        %s945 = scalar_select %p944, %s943, 63
        %s946 = smul.addr %s945, 4
        %s947 = scalar_lea.vmem %s5, %s946
      $region56: #{_lambda_.12} parent=47 // pred_fallthru
        _
    $region48: #{_lambda_.12} parent=5 // pred_fallthru
      _
  $region6: #{_lambda_.12} parent=0 // loop_footer
    %s16 = sadd.s32 1, %s12
  $region7: #{_lambda_.12} parent=0 // loop_footer_branch
    %11 = sbr.rel target = $region3
  $region8: #{_lambda_.12} parent=0 // loop_exit
    _

// kernel: _lambda_.13
$region0: #{_lambda_.13}
  #allocation0 [shape = 'u32[]', space=smem, size = 0x4, offset = 0x4, fixed_abs, tag = 'smem constant byte address 0x4 - core index']
  #allocation1 [shape = 'u32[144,128]{1,0:T(1,128)}', space=vmem, size = 0x12000, scoped, tag = 'internal scratch']
  %s0 = inlined_call_operand.vmem [shape: bf16[512,72], index: 0, kind: input, shape index: {}]
  %s1 = inlined_call_operand.vmem [shape: bf16[72,8], index: 1, kind: input, shape index: {}]
  %s2 = inlined_call_operand.vmem [shape: f32[1,8], index: 2, kind: input, shape index: {}]
  %s3 = inlined_call_operand.vmem [shape: f32[1,8], index: 3, kind: input, shape index: {}]
  %s4 = inlined_call_operand.vmem [shape: bf16[512,8], index: 4, kind: output, shape index: {}]
  %s5 = sld [smem:[#allocation0]]
  $region49: #{_lambda_.13} parent=0
    _
  %s7 = ssub.s32 1, %s5
  %s8 = scalar_select 0, %s7, %s5
  loop: start=0, step=1, limit=4
  $region2: #{_lambda_.13} parent=0 // loop_pre_header
    _
  $region3: #{_lambda_.13} parent=0 // loop_header
    %s10 = sphi 0, %s14
    %p11 = scmp.ge.s32.totalorder %s10, 4
    %s20 = sphi 0, %s22
    %s23 = sphi 0, %s20
    %s24 = sphi 0, %s23
    %s40 = sphi 0, %s24
    %s44 = sphi 0, %s44
    %s46 = sphi 0, %s44
    %s47 = sphi 0, %s46
    %s61 = sphi 0, %s47
    %s65 = sphi 0, %s65
    %s67 = sphi 0, %s65
    %s68 = sphi 0, %s67
    %s82 = sphi 0, %s68
    %s86 = sphi 0, %s86
    %s88 = sphi 0, %s86
    %s89 = sphi 0, %s88
    %s103 = sphi 0, %s89
    %s109 = sphi 0, %s111
    %s112 = sphi 0, %s109
    %s113 = sphi 0, %s112
    %s129 = sphi 0, %s113
  $region4: #{_lambda_.13} parent=0 // loop_header_branch
    %13 = sbr.rel (%p11) target = $region8
  $region5: #{_lambda_.13} parent=0 // loop_body
    %s15 = ssub.s32 %s10, 1
    %s16 = ssub.s32 %s10, 2
    %s17 = sadd.s32 %s10, 1
    %s18 = ssub.s32 %s10, %s17
    %p19 = scmp.eq.s32.totalorder %s18, 0
    %s21 = sadd.s32 %s20, 1
    %s22 = scalar_select %p19, %s20, %s21
    %p25 = pneg %p19
    %p26 = scmp.eq.s32.totalorder %s10, 1
    %p27 = por %p25, %p26
    %p28 = scmp.ne.s32.totalorder %s20, %s23
    %p29 = scmp.eq.s32.totalorder %s10, 0
    %p30 = por %p28, %p29
    %p31 = scmp.ne.s32.totalorder %s20, %s23
    %p32 = scmp.eq.s32.totalorder %s15, 1
    %p33 = por %p31, %p32
    %p34 = scmp.ne.s32.totalorder %s23, %s24
    %p35 = scmp.eq.s32.totalorder %s15, 0
    %p36 = por %p34, %p35
    %p37 = scmp.ne.s32.totalorder %s23, %s24
    %p38 = scmp.eq.s32.totalorder %s16, 1
    %p39 = por %p37, %p38
    %p41 = scmp.ne.s32.totalorder %s24, %s40
    %p42 = scmp.eq.s32.totalorder %s16, 0
    %p43 = por %p41, %p42
    %s45 = sadd.s32 %s44, 1
    %p48 = scmp.eq.s32.totalorder %s10, 1
    %p49 = scmp.ne.s32.totalorder %s44, %s46
    %p50 = scmp.eq.s32.totalorder %s10, 0
    %p51 = por %p49, %p50
    %p52 = scmp.ne.s32.totalorder %s44, %s46
    %p53 = scmp.eq.s32.totalorder %s15, 1
    %p54 = por %p52, %p53
    %p55 = scmp.ne.s32.totalorder %s46, %s47
    %p56 = scmp.eq.s32.totalorder %s15, 0
    %p57 = por %p55, %p56
    %p58 = scmp.ne.s32.totalorder %s46, %s47
    %p59 = scmp.eq.s32.totalorder %s16, 1
    %p60 = por %p58, %p59
    %p62 = scmp.ne.s32.totalorder %s47, %s61
    %p63 = scmp.eq.s32.totalorder %s16, 0
    %p64 = por %p62, %p63
    %s66 = sadd.s32 %s65, 1
    %p69 = scmp.eq.s32.totalorder %s10, 1
    %p70 = scmp.ne.s32.totalorder %s65, %s67
    %p71 = scmp.eq.s32.totalorder %s10, 0
    %p72 = por %p70, %p71
    %p73 = scmp.ne.s32.totalorder %s65, %s67
    %p74 = scmp.eq.s32.totalorder %s15, 1
    %p75 = por %p73, %p74
    %p76 = scmp.ne.s32.totalorder %s67, %s68
    %p77 = scmp.eq.s32.totalorder %s15, 0
    %p78 = por %p76, %p77
    %p79 = scmp.ne.s32.totalorder %s67, %s68
    %p80 = scmp.eq.s32.totalorder %s16, 1
    %p81 = por %p79, %p80
    %p83 = scmp.ne.s32.totalorder %s68, %s82
    %p84 = scmp.eq.s32.totalorder %s16, 0
    %p85 = por %p83, %p84
    %s87 = sadd.s32 %s86, 1
    %p90 = scmp.eq.s32.totalorder %s10, 1
    %p91 = scmp.ne.s32.totalorder %s86, %s88
    %p92 = scmp.eq.s32.totalorder %s10, 0
    %p93 = por %p91, %p92
    %p94 = scmp.ne.s32.totalorder %s86, %s88
    %p95 = scmp.eq.s32.totalorder %s15, 1
    %p96 = por %p94, %p95
    %p97 = scmp.ne.s32.totalorder %s88, %s89
    %p98 = scmp.eq.s32.totalorder %s15, 0
    %p99 = por %p97, %p98
    %p100 = scmp.ne.s32.totalorder %s88, %s89
    %p101 = scmp.eq.s32.totalorder %s16, 1
    %p102 = por %p100, %p101
    %p104 = scmp.ne.s32.totalorder %s89, %s103
    %p105 = scmp.eq.s32.totalorder %s16, 0
    %p106 = por %p104, %p105
    %s107 = ssub.s32 %s10, %s17
    %p108 = scmp.eq.s32.totalorder %s107, 0
    %s110 = sadd.s32 %s109, 1
    %s111 = scalar_select %p108, %s109, %s110
    %p114 = pneg %p108
    %p115 = scmp.eq.s32.totalorder %s10, 1
    %p116 = por %p114, %p115
    %p117 = scmp.ne.s32.totalorder %s109, %s112
    %p118 = scmp.eq.s32.totalorder %s10, 0
    %p119 = por %p117, %p118
    %p120 = scmp.ne.s32.totalorder %s109, %s112
    %p121 = scmp.eq.s32.totalorder %s15, 1
    %p122 = por %p120, %p121
    %p123 = scmp.ne.s32.totalorder %s112, %s113
    %p124 = scmp.eq.s32.totalorder %s15, 0
    %p125 = por %p123, %p124
    %p126 = scmp.ne.s32.totalorder %s112, %s113
    %p127 = scmp.eq.s32.totalorder %s16, 1
    %p128 = por %p126, %p127
    %p130 = scmp.ne.s32.totalorder %s113, %s129
    %p131 = scmp.eq.s32.totalorder %s16, 0
    %p132 = por %p130, %p131
    %p133 = scmp.le.s32.totalorder 1, %s10
    %p134 = scmp.lt.s32.totalorder %s10, 3
    %p135 = pnand %p133, %p134
    %p136 = pneg %p135
    // Predicated region
    $region9: #{_lambda_.13} parent=5 // pred_check
      _
    $region10: #{_lambda_.13} parent=5 // pred_check_branch
      %138 = sbr.rel (%p135) target = $region12
    $region11: #{_lambda_.13} parent=5 // pred_region
      %s139 = ssub.s32 %s10, 1
      // Predicated region
      $region13: #{_lambda_.13} parent=11 // pred_check
        %p140 = pneg %p57
      $region14: #{_lambda_.13} parent=11 // pred_check_branch
        %142 = sbr.rel (%p140) target = $region16
      $region15: #{_lambda_.13} parent=11 // pred_region
        _
      $region16: #{_lambda_.13} parent=11 // pred_fallthru
        _
      // Predicated region
      $region17: #{_lambda_.13} parent=11 // pred_check
        %p143 = pneg %p78
      $region18: #{_lambda_.13} parent=11 // pred_check_branch
        %145 = sbr.rel (%p143) target = $region20
      $region19: #{_lambda_.13} parent=11 // pred_region
        _
      $region20: #{_lambda_.13} parent=11 // pred_fallthru
        _
      // Predicated region
      $region21: #{_lambda_.13} parent=11 // pred_check
        %p146 = pneg %p99
      $region22: #{_lambda_.13} parent=11 // pred_check_branch
        %148 = sbr.rel (%p146) target = $region24
      $region23: #{_lambda_.13} parent=11 // pred_region
        _
      $region24: #{_lambda_.13} parent=11 // pred_fallthru
        _
    $region12: #{_lambda_.13} parent=5 // pred_fallthru
      _
    %p149 = scmp.lt.s32.totalorder %s10, 2
    // Predicated region
    $region25: #{_lambda_.13} parent=5 // pred_check
      %p150 = pneg %p149
    $region26: #{_lambda_.13} parent=5 // pred_check_branch
      %152 = sbr.rel (%p150) target = $region28
    $region27: #{_lambda_.13} parent=5 // pred_region
      // Predicated region
      $region29: #{_lambda_.13} parent=27 // pred_check
        %p153 = pneg %p30
      $region30: #{_lambda_.13} parent=27 // pred_check_branch
        %155 = sbr.rel (%p153) target = $region32
      $region31: #{_lambda_.13} parent=27 // pred_region
        %s156 = smul.u32 32, %s10
        %p157 = scmp.lt.s32.totalorder %s156, 63
        %s158 = scalar_select %p157, %s156, 63
        %s159 = smul.addr %s158, 4
        %s160 = scalar_lea.vmem %s0, %s159
        %s161 = smul.u32 32, %s10
      $region32: #{_lambda_.13} parent=27 // pred_fallthru
        _
    $region28: #{_lambda_.13} parent=5 // pred_fallthru
      _
    %p162 = scmp.le.s32.totalorder 1, %s10
    %p163 = scmp.lt.s32.totalorder %s10, 3
    %p164 = pnand %p162, %p163
    %p165 = pneg %p164
    // Predicated region
    $region33: #{_lambda_.13} parent=5 // pred_check
      _
    $region34: #{_lambda_.13} parent=5 // pred_check_branch
      %167 = sbr.rel (%p164) target = $region36
    $region35: #{_lambda_.13} parent=5 // pred_region
      %s168 = ssub.s32 %s10, 1
      %s169 = smul.u32 32, %s15
      %p170 = scmp.lt.s32.totalorder %s169, 63
      %s171 = scalar_select %p170, %s169, 63
      %s172 = smul.addr %s171, 4
      %s173 = scalar_lea.vmem %s0, %s172
      %p174 = pneg %p36
      %p175 = pneg %p33
      %p176 = pneg %p57
      %p177 = pneg %p54
      %p178 = pneg %p78
      %p179 = pneg %p75
      %p180 = pneg %p99
      %p181 = pneg %p96
      %p182 = pneg %p125
      %p183 = pneg %p122
      %s184 = smul.u32 32, %s15
      %p185 = scmp.lt.s32.totalorder %s184, 63
      %s186 = scalar_select %p185, %s184, 63
      %s187 = smul.addr %s186, 4
      %s188 = scalar_lea.vmem %s4, %s187
      %s189 = smul.u32 32, %s15
      %p190 = scmp.lt.s32.totalorder %s189, 63
      %s191 = scalar_select %p190, %s189, 63
      %s192 = smul.addr %s191, 4
      %s193 = scalar_lea.vmem %s0, %s192
      %s194 = smul.u32 32, %s15
      %s195 = smul.u32 32, %s15
      %p196 = scmp.lt.s32.totalorder %s195, 63
      %s197 = scalar_select %p196, %s195, 63
      %s198 = smul.addr %s197, 4
      %s199 = scalar_lea.vmem %s4, %s198
      %s200 = smul.u32 32, %s15
      %v202 = vld [vmem:[%s193] sm:$0xf]
      %v203 = vld [vmem:[%s193 + $0x4] sm:$0xf]
      %v204 = vld [vmem:[%s193 + $0x8] sm:$0xf]
      %v205 = vld [vmem:[%s193 + $0xc] sm:$0xf]
      %v206 = vld [vmem:[%s193 + $0x10] sm:$0xf]
      %v207 = vld [vmem:[%s193 + $0x14] sm:$0xf]
      %v208 = vld [vmem:[%s193 + $0x18] sm:$0xf]
      %v209 = vld [vmem:[%s193 + $0x1c] sm:$0xf]
      %v210 = vld [vmem:[%s193 + $0x20] sm:$0xf]
      %v211 = vld [vmem:[%s193 + $0x24] sm:$0xf]
      %v212 = vld [vmem:[%s193 + $0x28] sm:$0xf]
      %v213 = vld [vmem:[%s193 + $0x2c] sm:$0xf]
      %v214 = vld [vmem:[%s193 + $0x30] sm:$0xf]
      %v215 = vld [vmem:[%s193 + $0x34] sm:$0xf]
      %v216 = vld [vmem:[%s193 + $0x38] sm:$0xf]
      %v217 = vld [vmem:[%s193 + $0x3c] sm:$0xf]
      %v218 = vld [vmem:[%s193 + $0x40] sm:$0xf]
      %v219 = vld [vmem:[%s193 + $0x44] sm:$0xf]
      %v220 = vld [vmem:[%s193 + $0x48] sm:$0xf]
      %v221 = vld [vmem:[%s193 + $0x4c] sm:$0xf]
      %v222 = vld [vmem:[%s193 + $0x50] sm:$0xf]
      %v223 = vld [vmem:[%s193 + $0x54] sm:$0xf]
      %v224 = vld [vmem:[%s193 + $0x58] sm:$0xf]
      %v225 = vld [vmem:[%s193 + $0x5c] sm:$0xf]
      %v226 = vld [vmem:[%s193 + $0x60] sm:$0xf]
      %v227 = vld [vmem:[%s193 + $0x64] sm:$0xf]
      %v228 = vld [vmem:[%s193 + $0x68] sm:$0xf]
      %v229 = vld [vmem:[%s193 + $0x6c] sm:$0xf]
      %v230 = vld [vmem:[%s193 + $0x70] sm:$0xf]
      %v231 = vld [vmem:[%s193 + $0x74] sm:$0xf]
      %v232 = vld [vmem:[%s193 + $0x78] sm:$0xf]
      %v233 = vld [vmem:[%s193 + $0x7c] sm:$0xf]
      %v234 = vld [vmem:[%s1] sm:$0xf]
      %v235 = vld [vmem:[%s1 + $0x4] sm:$0xf]
      %v236 = vld [vmem:[%s1 + $0x8] sm:$0xf]
      %v237 = vld [vmem:[%s1 + $0xc] sm:$0xf]
      %v238 = vld [vmem:[%s1 + $0x10] sm:$0xf]
      %v239 = vld [vmem:[%s1 + $0x14] sm:$0xf]
      %v240 = vld [vmem:[%s1 + $0x18] sm:$0xf]
      %v241 = vld [vmem:[%s1 + $0x1c] sm:$0xf]
      %v242 = vld [vmem:[%s1 + $0x20] sm:$0xf]
      %v275 = vunpack.c.l.b16 %v202
      %v276 = vunpack.c.l.b16 %v203
      %v277 = vunpack.c.l.b16 %v204
      %v278 = vunpack.c.l.b16 %v205
      %v279 = vunpack.c.l.b16 %v206
      %v280 = vunpack.c.l.b16 %v207
      %v281 = vunpack.c.l.b16 %v208
      %v282 = vunpack.c.l.b16 %v209
      %v283 = vunpack.c.l.b16 %v210
      %v284 = vunpack.c.l.b16 %v211
      %v285 = vunpack.c.l.b16 %v212
      %v286 = vunpack.c.l.b16 %v213
      %v287 = vunpack.c.l.b16 %v214
      %v288 = vunpack.c.l.b16 %v215
      %v289 = vunpack.c.l.b16 %v216
      %v290 = vunpack.c.l.b16 %v217
      %v291 = vunpack.c.l.b16 %v218
      %v292 = vunpack.c.l.b16 %v219
      %v293 = vunpack.c.l.b16 %v220
      %v294 = vunpack.c.l.b16 %v221
      %v295 = vunpack.c.l.b16 %v222
      %v296 = vunpack.c.l.b16 %v223
      %v297 = vunpack.c.l.b16 %v224
      %v298 = vunpack.c.l.b16 %v225
      %v299 = vunpack.c.l.b16 %v226
      %v300 = vunpack.c.l.b16 %v227
      %v301 = vunpack.c.l.b16 %v228
      %v302 = vunpack.c.l.b16 %v229
      %v303 = vunpack.c.l.b16 %v230
      %v304 = vunpack.c.l.b16 %v231
      %v305 = vunpack.c.l.b16 %v232
      %v306 = vunpack.c.l.b16 %v233
      %v307 = vpack.c.b16 %v276, %v275
      %v308 = vpack.c.b16 %v278, %v277
      %v309 = vpack.c.b16 %v280, %v279
      %v310 = vpack.c.b16 %v282, %v281
      %v311 = vpack.c.b16 %v284, %v283
      %v312 = vpack.c.b16 %v286, %v285
      %v313 = vpack.c.b16 %v288, %v287
      %v314 = vpack.c.b16 %v290, %v289
      %v315 = vpack.c.b16 %v292, %v291
      %v316 = vpack.c.b16 %v294, %v293
      %v317 = vpack.c.b16 %v296, %v295
      %v318 = vpack.c.b16 %v298, %v297
      %v319 = vpack.c.b16 %v300, %v299
      %v320 = vpack.c.b16 %v302, %v301
      %v321 = vpack.c.b16 %v304, %v303
      %v322 = vpack.c.b16 %v306, %v305
      %v332 = vunpack.c.l.b16 %v234
      %v333 = vunpack.c.l.b16 %v235
      %v334 = vunpack.c.l.b16 %v236
      %v335 = vunpack.c.l.b16 %v237
      %v336 = vunpack.c.l.b16 %v238
      %v337 = vunpack.c.l.b16 %v239
      %v338 = vunpack.c.l.b16 %v240
      %v339 = vunpack.c.l.b16 %v241
      %v340 = vunpack.c.l.b16 %v242
      %v341 = vpack.c.b16 %v333, %v332
      %v342 = vpack.c.b16 %v335, %v334
      %v343 = vpack.c.b16 %v337, %v336
      %v344 = vpack.c.b16 %v339, %v338
      %v345 = vpack.c.b16 %v340, %v340
      %vm350 = vcmask 588800
      %v352 = vsel %vm350, %v307, 0
      %v355 = vsel %vm350, %v308, 0
      %v358 = vsel %vm350, %v309, 0
      %v361 = vsel %vm350, %v310, 0
      %v364 = vsel %vm350, %v311, 0
      %v367 = vsel %vm350, %v312, 0
      %v370 = vsel %vm350, %v313, 0
      %v373 = vsel %vm350, %v314, 0
      %v376 = vsel %vm350, %v315, 0
      %v379 = vsel %vm350, %v316, 0
      %v382 = vsel %vm350, %v317, 0
      %v385 = vsel %vm350, %v318, 0
      %v388 = vsel %vm350, %v319, 0
      %v391 = vsel %vm350, %v320, 0
      %v394 = vsel %vm350, %v321, 0
      %v397 = vsel %vm350, %v322, 0
      %vm399 = vcmask 1043456
      %v401 = vsel %vm399, %v345, 0
      %403 = vmatprep.subr.bf16.mxu0 0
      %404 = vmatpush1.bf16.msra.mxu0 %v341
      %405 = vmatprep.subr.bf16.mxu0 0
      %406 = vmatpush1.bf16.msra.mxu0 %v342
      %407 = vmatprep.subr.bf16.mxu0 0
      %408 = vmatpush1.bf16.msra.mxu0 %v343
      %409 = vmatprep.subr.bf16.mxu0 0
      %410 = vmatpush1.bf16.msra.mxu0 %v344
      %411 = vmatprep.subr.bf16.mxu0 0
      %412 = vmatpush1.bf16.msra.mxu0 %v401
      %413 = vmatprep.subr.bf16.mxu0 0
      %414 = vmatpush1.bf16.msra.mxu0 0
      %415 = vmatprep.subr.bf16.mxu0 0
      %416 = vmatpush1.bf16.msra.mxu0 0
      %417 = vmatprep.subr.bf16.mxu0 0
      %418 = vmatpush1.bf16.msra.mxu0 0
      %419 = vmatprep.subr.bf16.mxu0 0
      %420 = vmatpush1.bf16.msra.mxu0 0
      %421 = vmatprep.subr.bf16.mxu0 0
      %422 = vmatpush1.bf16.msra.mxu0 0
      %423 = vmatprep.subr.bf16.mxu0 0
      %424 = vmatpush1.bf16.msra.mxu0 0
      %425 = vmatprep.subr.bf16.mxu0 0
      %426 = vmatpush1.bf16.msra.mxu0 0
      %427 = vmatprep.subr.bf16.mxu0 0
      %428 = vmatpush1.bf16.msra.mxu0 0
      %429 = vmatprep.subr.bf16.mxu0 0
      %430 = vmatpush1.bf16.msra.mxu0 0
      %431 = vmatprep.subr.bf16.mxu0 0
      %432 = vmatpush1.bf16.msra.mxu0 0
      %433 = vmatprep.subr.bf16.mxu0 0
      %434 = vmatpush1.bf16.msra.mxu0 0
      %435 = vmatprep.mubr.bf16.mxu0 0
      %436 = vmatmul.mubr.bf16.gmra.mrb[0].mxu0 %v352
      %v437 = vpop.f32.mrb[0].mxu0
      %v438 = vadd.f32 0.0, %v437
      %v439 = vpop.f32.mrb[0].mxu0
      %v440 = vpop.f32.mrb[0].mxu0
      %v441 = vadd.f32 0.0, %v440
      %v442 = vpop.f32.mrb[0].mxu0
      %443 = vmatprep.mubr.bf16.mxu0 0
      %444 = vmatmul.mubr.bf16.gmra.mrb[0].mxu0 %v355
      %v445 = vpop.f32.mrb[0].mxu0
      %v446 = vadd.f32 0.0, %v445
      %v447 = vpop.f32.mrb[0].mxu0
      %v448 = vpop.f32.mrb[0].mxu0
      %v449 = vadd.f32 0.0, %v448
      %v450 = vpop.f32.mrb[0].mxu0
      %451 = vmatprep.mubr.bf16.mxu0 0
      %452 = vmatmul.mubr.bf16.gmra.mrb[0].mxu0 %v358
      %v453 = vpop.f32.mrb[0].mxu0
      %v454 = vadd.f32 0.0, %v453
      %v455 = vpop.f32.mrb[0].mxu0
      %v456 = vpop.f32.mrb[0].mxu0
      %v457 = vadd.f32 0.0, %v456
      %v458 = vpop.f32.mrb[0].mxu0
      %459 = vmatprep.mubr.bf16.mxu0 0
      %460 = vmatmul.mubr.bf16.gmra.mrb[0].mxu0 %v361
      %v461 = vpop.f32.mrb[0].mxu0
      %v462 = vadd.f32 0.0, %v461
      %v463 = vpop.f32.mrb[0].mxu0
      %v464 = vpop.f32.mrb[0].mxu0
      %v465 = vadd.f32 0.0, %v464
      %v466 = vpop.f32.mrb[0].mxu0
      %467 = vmatprep.mubr.bf16.mxu0 0
      %468 = vmatmul.mubr.bf16.gmra.mrb[0].mxu0 %v364
      %v469 = vpop.f32.mrb[0].mxu0
      %v470 = vadd.f32 0.0, %v469
      %v471 = vpop.f32.mrb[0].mxu0
      %v472 = vpop.f32.mrb[0].mxu0
      %v473 = vadd.f32 0.0, %v472
      %v474 = vpop.f32.mrb[0].mxu0
      %475 = vmatprep.mubr.bf16.mxu0 0
      %476 = vmatmul.mubr.bf16.gmra.mrb[0].mxu0 %v367
      %v477 = vpop.f32.mrb[0].mxu0
      %v478 = vadd.f32 0.0, %v477
      %v479 = vpop.f32.mrb[0].mxu0
      %v480 = vpop.f32.mrb[0].mxu0
      %v481 = vadd.f32 0.0, %v480
      %v482 = vpop.f32.mrb[0].mxu0
      %483 = vmatprep.mubr.bf16.mxu0 0
      %484 = vmatmul.mubr.bf16.gmra.mrb[0].mxu0 %v370
      %v485 = vpop.f32.mrb[0].mxu0
      %v486 = vadd.f32 0.0, %v485
      %v487 = vpop.f32.mrb[0].mxu0
      %v488 = vpop.f32.mrb[0].mxu0
      %v489 = vadd.f32 0.0, %v488
      %v490 = vpop.f32.mrb[0].mxu0
      %491 = vmatprep.mubr.bf16.mxu0 0
      %492 = vmatmul.mubr.bf16.gmra.mrb[0].mxu0 %v373
      %v493 = vpop.f32.mrb[0].mxu0
      %v494 = vadd.f32 0.0, %v493
      %v495 = vpop.f32.mrb[0].mxu0
      %v496 = vpop.f32.mrb[0].mxu0
      %v497 = vadd.f32 0.0, %v496
      %v498 = vpop.f32.mrb[0].mxu0
      %499 = vmatprep.mubr.bf16.mxu0 0
      %500 = vmatmul.mubr.bf16.gmra.mrb[0].mxu0 %v376
      %v501 = vpop.f32.mrb[0].mxu0
      %v502 = vadd.f32 0.0, %v501
      %v503 = vpop.f32.mrb[0].mxu0
      %v504 = vpop.f32.mrb[0].mxu0
      %v505 = vadd.f32 0.0, %v504
      %v506 = vpop.f32.mrb[0].mxu0
      %507 = vmatprep.mubr.bf16.mxu0 0
      %508 = vmatmul.mubr.bf16.gmra.mrb[0].mxu0 %v379
      %v509 = vpop.f32.mrb[0].mxu0
      %v510 = vadd.f32 0.0, %v509
      %v511 = vpop.f32.mrb[0].mxu0
      %v512 = vpop.f32.mrb[0].mxu0
      %v513 = vadd.f32 0.0, %v512
      %v514 = vpop.f32.mrb[0].mxu0
      %515 = vmatprep.mubr.bf16.mxu0 0
      %516 = vmatmul.mubr.bf16.gmra.mrb[0].mxu0 %v382
      %v517 = vpop.f32.mrb[0].mxu0
      %v518 = vadd.f32 0.0, %v517
      %v519 = vpop.f32.mrb[0].mxu0
      %v520 = vpop.f32.mrb[0].mxu0
      %v521 = vadd.f32 0.0, %v520
      %v522 = vpop.f32.mrb[0].mxu0
      %523 = vmatprep.mubr.bf16.mxu0 0
      %524 = vmatmul.mubr.bf16.gmra.mrb[0].mxu0 %v385
      %v525 = vpop.f32.mrb[0].mxu0
      %v526 = vadd.f32 0.0, %v525
      %v527 = vpop.f32.mrb[0].mxu0
      %v528 = vpop.f32.mrb[0].mxu0
      %v529 = vadd.f32 0.0, %v528
      %v530 = vpop.f32.mrb[0].mxu0
      %531 = vmatprep.mubr.bf16.mxu0 0
      %532 = vmatmul.mubr.bf16.gmra.mrb[0].mxu0 %v388
      %v533 = vpop.f32.mrb[0].mxu0
      %v534 = vadd.f32 0.0, %v533
      %v535 = vpop.f32.mrb[0].mxu0
      %v536 = vpop.f32.mrb[0].mxu0
      %v537 = vadd.f32 0.0, %v536
      %v538 = vpop.f32.mrb[0].mxu0
      %539 = vmatprep.mubr.bf16.mxu0 0
      %540 = vmatmul.mubr.bf16.gmra.mrb[0].mxu0 %v391
      %v541 = vpop.f32.mrb[0].mxu0
      %v542 = vadd.f32 0.0, %v541
      %v543 = vpop.f32.mrb[0].mxu0
      %v544 = vpop.f32.mrb[0].mxu0
      %v545 = vadd.f32 0.0, %v544
      %v546 = vpop.f32.mrb[0].mxu0
      %547 = vmatprep.mubr.bf16.mxu0 0
      %548 = vmatmul.mubr.bf16.gmra.mrb[0].mxu0 %v394
      %v549 = vpop.f32.mrb[0].mxu0
      %v550 = vadd.f32 0.0, %v549
      %v551 = vpop.f32.mrb[0].mxu0
      %v552 = vpop.f32.mrb[0].mxu0
      %v553 = vadd.f32 0.0, %v552
      %v554 = vpop.f32.mrb[0].mxu0
      %555 = vmatprep.mubr.bf16.mxu0 0
      %556 = vmatmul.mubr.bf16.gmra.mrb[0].mxu0 %v397
      %v557 = vpop.f32.mrb[0].mxu0
      %v558 = vadd.f32 0.0, %v557
      %v559 = vpop.f32.mrb[0].mxu0
      %v560 = vpop.f32.mrb[0].mxu0
      %v561 = vadd.f32 0.0, %v560
      %v562 = vpop.f32.mrb[0].mxu0
      %563 = vdwg.mxu0
      %v564 = vld [vmem:[%s2] sm:$0x1]
      %v566 = vlaneseq
      %v567 = vshrl.u32 %v566, 7
      %v568 = vsub.s32 0, %v567
      %v569 = vrot.slane %v564, %v568
      %v571 = vmul.f32 %v438, %v569
      %v572 = vmul.f32 %v441, %v569
      %v573 = vmul.f32 %v446, %v569
      %v574 = vmul.f32 %v449, %v569
      %v575 = vmul.f32 %v454, %v569
      %v576 = vmul.f32 %v457, %v569
      %v577 = vmul.f32 %v462, %v569
      %v578 = vmul.f32 %v465, %v569
      %v579 = vmul.f32 %v470, %v569
      %v580 = vmul.f32 %v473, %v569
      %v581 = vmul.f32 %v478, %v569
      %v582 = vmul.f32 %v481, %v569
      %v583 = vmul.f32 %v486, %v569
      %v584 = vmul.f32 %v489, %v569
      %v585 = vmul.f32 %v494, %v569
      %v586 = vmul.f32 %v497, %v569
      %v587 = vmul.f32 %v502, %v569
      %v588 = vmul.f32 %v505, %v569
      %v589 = vmul.f32 %v510, %v569
      %v590 = vmul.f32 %v513, %v569
      %v591 = vmul.f32 %v518, %v569
      %v592 = vmul.f32 %v521, %v569
      %v593 = vmul.f32 %v526, %v569
      %v594 = vmul.f32 %v529, %v569
      %v595 = vmul.f32 %v534, %v569
      %v596 = vmul.f32 %v537, %v569
      %v597 = vmul.f32 %v542, %v569
      %v598 = vmul.f32 %v545, %v569
      %v599 = vmul.f32 %v550, %v569
      %v600 = vmul.f32 %v553, %v569
      %v601 = vmul.f32 %v558, %v569
      %v602 = vmul.f32 %v561, %v569
      %v603 = vld [vmem:[%s3] sm:$0x1]
      %v605 = vlaneseq
      %v606 = vshrl.u32 %v605, 7
      %v607 = vsub.s32 0, %v606
      %v608 = vrot.slane %v603, %v607
      %v610 = vadd.f32 %v571, %v608
      %v611 = vadd.f32 %v572, %v608
      %v612 = vadd.f32 %v573, %v608
      %v613 = vadd.f32 %v574, %v608
      %v614 = vadd.f32 %v575, %v608
      %v615 = vadd.f32 %v576, %v608
      %v616 = vadd.f32 %v577, %v608
      %v617 = vadd.f32 %v578, %v608
      %v618 = vadd.f32 %v579, %v608
      %v619 = vadd.f32 %v580, %v608
      %v620 = vadd.f32 %v581, %v608
      %v621 = vadd.f32 %v582, %v608
      %v622 = vadd.f32 %v583, %v608
      %v623 = vadd.f32 %v584, %v608
      %v624 = vadd.f32 %v585, %v608
      %v625 = vadd.f32 %v586, %v608
      %v626 = vadd.f32 %v587, %v608
      %v627 = vadd.f32 %v588, %v608
      %v628 = vadd.f32 %v589, %v608
      %v629 = vadd.f32 %v590, %v608
      %v630 = vadd.f32 %v591, %v608
      %v631 = vadd.f32 %v592, %v608
      %v632 = vadd.f32 %v593, %v608
      %v633 = vadd.f32 %v594, %v608
      %v634 = vadd.f32 %v595, %v608
      %v635 = vadd.f32 %v596, %v608
      %v636 = vadd.f32 %v597, %v608
      %v637 = vadd.f32 %v598, %v608
      %v638 = vadd.f32 %v599, %v608
      %v639 = vadd.f32 %v600, %v608
      %v640 = vadd.f32 %v601, %v608
      %v641 = vadd.f32 %v602, %v608
      %v642 = vmax.f32 %v610, 0.0
      %v643 = vmax.f32 %v611, 0.0
      %v644 = vmax.f32 %v612, 0.0
      %v645 = vmax.f32 %v613, 0.0
      %v646 = vmax.f32 %v614, 0.0
      %v647 = vmax.f32 %v615, 0.0
      %v648 = vmax.f32 %v616, 0.0
      %v649 = vmax.f32 %v617, 0.0
      %v650 = vmax.f32 %v618, 0.0
      %v651 = vmax.f32 %v619, 0.0
      %v652 = vmax.f32 %v620, 0.0
      %v653 = vmax.f32 %v621, 0.0
      %v654 = vmax.f32 %v622, 0.0
      %v655 = vmax.f32 %v623, 0.0
      %v656 = vmax.f32 %v624, 0.0
      %v657 = vmax.f32 %v625, 0.0
      %v658 = vmax.f32 %v626, 0.0
      %v659 = vmax.f32 %v627, 0.0
      %v660 = vmax.f32 %v628, 0.0
      %v661 = vmax.f32 %v629, 0.0
      %v662 = vmax.f32 %v630, 0.0
      %v663 = vmax.f32 %v631, 0.0
      %v664 = vmax.f32 %v632, 0.0
      %v665 = vmax.f32 %v633, 0.0
      %v666 = vmax.f32 %v634, 0.0
      %v667 = vmax.f32 %v635, 0.0
      %v668 = vmax.f32 %v636, 0.0
      %v669 = vmax.f32 %v637, 0.0
      %v670 = vmax.f32 %v638, 0.0
      %v671 = vmax.f32 %v639, 0.0
      %v672 = vmax.f32 %v640, 0.0
      %v673 = vmax.f32 %v641, 0.0
      %v674 = vpack.c.bf16 %v643, %v642
      %v675 = vpack.c.bf16 %v645, %v644
      %v676 = vpack.c.bf16 %v647, %v646
      %v677 = vpack.c.bf16 %v649, %v648
      %v678 = vpack.c.bf16 %v651, %v650
      %v679 = vpack.c.bf16 %v653, %v652
      %v680 = vpack.c.bf16 %v655, %v654
      %v681 = vpack.c.bf16 %v657, %v656
      %v682 = vpack.c.bf16 %v659, %v658
      %v683 = vpack.c.bf16 %v661, %v660
      %v684 = vpack.c.bf16 %v663, %v662
      %v685 = vpack.c.bf16 %v665, %v664
      %v686 = vpack.c.bf16 %v667, %v666
      %v687 = vpack.c.bf16 %v669, %v668
      %v688 = vpack.c.bf16 %v671, %v670
      %v689 = vpack.c.bf16 %v673, %v672
      %v706 = vunpack.c.l.b16 %v674
      %v707 = vunpack.c.h.b16 %v674
      %v708 = vunpack.c.l.b16 %v675
      %v709 = vunpack.c.h.b16 %v675
      %v710 = vunpack.c.l.b16 %v676
      %v711 = vunpack.c.h.b16 %v676
      %v712 = vunpack.c.l.b16 %v677
      %v713 = vunpack.c.h.b16 %v677
      %v714 = vunpack.c.l.b16 %v678
      %v715 = vunpack.c.h.b16 %v678
      %v716 = vunpack.c.l.b16 %v679
      %v717 = vunpack.c.h.b16 %v679
      %v718 = vunpack.c.l.b16 %v680
      %v719 = vunpack.c.h.b16 %v680
      %v720 = vunpack.c.l.b16 %v681
      %v721 = vunpack.c.h.b16 %v681
      %v722 = vunpack.c.l.b16 %v682
      %v723 = vunpack.c.h.b16 %v682
      %v724 = vunpack.c.l.b16 %v683
      %v725 = vunpack.c.h.b16 %v683
      %v726 = vunpack.c.l.b16 %v684
      %v727 = vunpack.c.h.b16 %v684
      %v728 = vunpack.c.l.b16 %v685
      %v729 = vunpack.c.h.b16 %v685
      %v730 = vunpack.c.l.b16 %v686
      %v731 = vunpack.c.h.b16 %v686
      %v732 = vunpack.c.l.b16 %v687
      %v733 = vunpack.c.h.b16 %v687
      %v734 = vunpack.c.l.b16 %v688
      %v735 = vunpack.c.h.b16 %v688
      %v736 = vunpack.c.l.b16 %v689
      %v737 = vunpack.c.h.b16 %v689
      %v738 = vpack.c.b16 %v706, %v706
      %v739 = vpack.c.b16 %v707, %v707
      %v740 = vpack.c.b16 %v708, %v708
      %v741 = vpack.c.b16 %v709, %v709
      %v742 = vpack.c.b16 %v710, %v710
      %v743 = vpack.c.b16 %v711, %v711
      %v744 = vpack.c.b16 %v712, %v712
      %v745 = vpack.c.b16 %v713, %v713
      %v746 = vpack.c.b16 %v714, %v714
      %v747 = vpack.c.b16 %v715, %v715
      %v748 = vpack.c.b16 %v716, %v716
      %v749 = vpack.c.b16 %v717, %v717
      %v750 = vpack.c.b16 %v718, %v718
      %v751 = vpack.c.b16 %v719, %v719
      %v752 = vpack.c.b16 %v720, %v720
      %v753 = vpack.c.b16 %v721, %v721
      %v754 = vpack.c.b16 %v722, %v722
      %v755 = vpack.c.b16 %v723, %v723
      %v756 = vpack.c.b16 %v724, %v724
      %v757 = vpack.c.b16 %v725, %v725
      %v758 = vpack.c.b16 %v726, %v726
      %v759 = vpack.c.b16 %v727, %v727
      %v760 = vpack.c.b16 %v728, %v728
      %v761 = vpack.c.b16 %v729, %v729
      %v762 = vpack.c.b16 %v730, %v730
      %v763 = vpack.c.b16 %v731, %v731
      %v764 = vpack.c.b16 %v732, %v732
      %v765 = vpack.c.b16 %v733, %v733
      %v766 = vpack.c.b16 %v734, %v734
      %v767 = vpack.c.b16 %v735, %v735
      %v768 = vpack.c.b16 %v736, %v736
      %v769 = vpack.c.b16 %v737, %v737
      %vm802 = vcmask 60416
      %803 = vst.msk [vmem:[%s199] sm:$0xf] %vm802, %v738
      %804 = vst.msk [vmem:[%s199 + $0x4] sm:$0xf] %vm802, %v739
      %805 = vst.msk [vmem:[%s199 + $0x8] sm:$0xf] %vm802, %v740
      %806 = vst.msk [vmem:[%s199 + $0xc] sm:$0xf] %vm802, %v741
      %807 = vst.msk [vmem:[%s199 + $0x10] sm:$0xf] %vm802, %v742
      %808 = vst.msk [vmem:[%s199 + $0x14] sm:$0xf] %vm802, %v743
      %809 = vst.msk [vmem:[%s199 + $0x18] sm:$0xf] %vm802, %v744
      %810 = vst.msk [vmem:[%s199 + $0x1c] sm:$0xf] %vm802, %v745
      %811 = vst.msk [vmem:[%s199 + $0x20] sm:$0xf] %vm802, %v746
      %812 = vst.msk [vmem:[%s199 + $0x24] sm:$0xf] %vm802, %v747
      %813 = vst.msk [vmem:[%s199 + $0x28] sm:$0xf] %vm802, %v748
      %814 = vst.msk [vmem:[%s199 + $0x2c] sm:$0xf] %vm802, %v749
      %815 = vst.msk [vmem:[%s199 + $0x30] sm:$0xf] %vm802, %v750
      %816 = vst.msk [vmem:[%s199 + $0x34] sm:$0xf] %vm802, %v751
      %817 = vst.msk [vmem:[%s199 + $0x38] sm:$0xf] %vm802, %v752
      %818 = vst.msk [vmem:[%s199 + $0x3c] sm:$0xf] %vm802, %v753
      %819 = vst.msk [vmem:[%s199 + $0x40] sm:$0xf] %vm802, %v754
      %820 = vst.msk [vmem:[%s199 + $0x44] sm:$0xf] %vm802, %v755
      %821 = vst.msk [vmem:[%s199 + $0x48] sm:$0xf] %vm802, %v756
      %822 = vst.msk [vmem:[%s199 + $0x4c] sm:$0xf] %vm802, %v757
      %823 = vst.msk [vmem:[%s199 + $0x50] sm:$0xf] %vm802, %v758
      %824 = vst.msk [vmem:[%s199 + $0x54] sm:$0xf] %vm802, %v759
      %825 = vst.msk [vmem:[%s199 + $0x58] sm:$0xf] %vm802, %v760
      %826 = vst.msk [vmem:[%s199 + $0x5c] sm:$0xf] %vm802, %v761
      %827 = vst.msk [vmem:[%s199 + $0x60] sm:$0xf] %vm802, %v762
      %828 = vst.msk [vmem:[%s199 + $0x64] sm:$0xf] %vm802, %v763
      %829 = vst.msk [vmem:[%s199 + $0x68] sm:$0xf] %vm802, %v764
      %830 = vst.msk [vmem:[%s199 + $0x6c] sm:$0xf] %vm802, %v765
      %831 = vst.msk [vmem:[%s199 + $0x70] sm:$0xf] %vm802, %v766
      %832 = vst.msk [vmem:[%s199 + $0x74] sm:$0xf] %vm802, %v767
      %833 = vst.msk [vmem:[%s199 + $0x78] sm:$0xf] %vm802, %v768
      %834 = vst.msk [vmem:[%s199 + $0x7c] sm:$0xf] %vm802, %v769
      %s835 = smul.u32 32, %s15
      %p836 = scmp.lt.s32.totalorder %s835, 63
      %s837 = scalar_select %p836, %s835, 63
      %s838 = smul.addr %s837, 4
      %s839 = scalar_lea.vmem %s4, %s838
      // Predicated region
      $region37: #{_lambda_.13} parent=35 // pred_check
        %p840 = pneg %p122
      $region38: #{_lambda_.13} parent=35 // pred_check_branch
        %842 = sbr.rel (%p840) target = $region40
      $region39: #{_lambda_.13} parent=35 // pred_region
        %s843 = smul.u32 32, %s15
      $region40: #{_lambda_.13} parent=35 // pred_fallthru
        _
    $region36: #{_lambda_.13} parent=5 // pred_fallthru
      _
    %p844 = scmp.le.s32.totalorder 2, %s10
    // Predicated region
    $region41: #{_lambda_.13} parent=5 // pred_check
      %p845 = pneg %p844
    $region42: #{_lambda_.13} parent=5 // pred_check_branch
      %847 = sbr.rel (%p845) target = $region44
    $region43: #{_lambda_.13} parent=5 // pred_region
      %s848 = ssub.s32 %s10, 2
      // Predicated region
      $region45: #{_lambda_.13} parent=43 // pred_check
        %p849 = pneg %p128
      $region46: #{_lambda_.13} parent=43 // pred_check_branch
        %851 = sbr.rel (%p849) target = $region48
      $region47: #{_lambda_.13} parent=43 // pred_region
        %s852 = smul.u32 32, %s16
        %p853 = scmp.lt.s32.totalorder %s852, 63
        %s854 = scalar_select %p853, %s852, 63
        %s855 = smul.addr %s854, 4
        %s856 = scalar_lea.vmem %s4, %s855
      $region48: #{_lambda_.13} parent=43 // pred_fallthru
        _
    $region44: #{_lambda_.13} parent=5 // pred_fallthru
      _
  $region6: #{_lambda_.13} parent=0 // loop_footer
    %s14 = sadd.s32 1, %s10
  $region7: #{_lambda_.13} parent=0 // loop_footer_branch
    %9 = sbr.rel target = $region3
  $region8: #{_lambda_.13} parent=0 // loop_exit
    _

// kernel: _lambda_.14
$region0: #{_lambda_.14}
  #allocation0 [shape = 'u32[]', space=smem, size = 0x4, offset = 0x4, fixed_abs, tag = 'smem constant byte address 0x4 - core index']
  #allocation1 [shape = 'u32[144,128]{1,0:T(1,128)}', space=vmem, size = 0x12000, scoped, tag = 'internal scratch']
  %s0 = inlined_call_operand.vmem [shape: bf16[512,72], index: 0, kind: input, shape index: {}]
  %s1 = inlined_call_operand.vmem [shape: bf16[72,8], index: 1, kind: input, shape index: {}]
  %s2 = inlined_call_operand.vmem [shape: f32[512,8], index: 2, kind: input, shape index: {}]
  %s3 = inlined_call_operand.vmem [shape: f32[1,8], index: 3, kind: input, shape index: {}]
  %s4 = inlined_call_operand.vmem [shape: f32[1,8], index: 4, kind: input, shape index: {}]
  %s5 = inlined_call_operand.vmem [shape: f32[512,8], index: 5, kind: output, shape index: {0}]
  %s6 = inlined_call_operand.vmem [shape: bf16[512,8], index: 6, kind: output, shape index: {1}]
  %7 = xla_tuple %s5, %s6
  %s8 = sld [smem:[#allocation0]]
  $region61: #{_lambda_.14} parent=0
    _
  %s10 = ssub.s32 1, %s8
  %s11 = scalar_select 0, %s10, %s8
  loop: start=0, step=1, limit=4
  $region2: #{_lambda_.14} parent=0 // loop_pre_header
    _
  $region3: #{_lambda_.14} parent=0 // loop_header
    %s13 = sphi 0, %s17
    %p14 = scmp.ge.s32.totalorder %s13, 4
    %s23 = sphi 0, %s25
    %s26 = sphi 0, %s23
    %s27 = sphi 0, %s26
    %s43 = sphi 0, %s27
    %s47 = sphi 0, %s47
    %s49 = sphi 0, %s47
    %s50 = sphi 0, %s49
    %s64 = sphi 0, %s50
    %s70 = sphi 0, %s72
    %s73 = sphi 0, %s70
    %s74 = sphi 0, %s73
    %s90 = sphi 0, %s74
    %s94 = sphi 0, %s94
    %s96 = sphi 0, %s94
    %s97 = sphi 0, %s96
    %s111 = sphi 0, %s97
    %s115 = sphi 0, %s115
    %s117 = sphi 0, %s115
    %s118 = sphi 0, %s117
    %s132 = sphi 0, %s118
    %s138 = sphi 0, %s140
    %s141 = sphi 0, %s138
    %s142 = sphi 0, %s141
    %s158 = sphi 0, %s142
    %s164 = sphi 0, %s166
    %s167 = sphi 0, %s164
    %s168 = sphi 0, %s167
    %s184 = sphi 0, %s168
  $region4: #{_lambda_.14} parent=0 // loop_header_branch
    %16 = sbr.rel (%p14) target = $region8
  $region5: #{_lambda_.14} parent=0 // loop_body
    %s18 = ssub.s32 %s13, 1
    %s19 = ssub.s32 %s13, 2
    %s20 = sadd.s32 %s13, 1
    %s21 = ssub.s32 %s13, %s20
    %p22 = scmp.eq.s32.totalorder %s21, 0
    %s24 = sadd.s32 %s23, 1
    %s25 = scalar_select %p22, %s23, %s24
    %p28 = pneg %p22
    %p29 = scmp.eq.s32.totalorder %s13, 1
    %p30 = por %p28, %p29
    %p31 = scmp.ne.s32.totalorder %s23, %s26
    %p32 = scmp.eq.s32.totalorder %s13, 0
    %p33 = por %p31, %p32
    %p34 = scmp.ne.s32.totalorder %s23, %s26
    %p35 = scmp.eq.s32.totalorder %s18, 1
    %p36 = por %p34, %p35
    %p37 = scmp.ne.s32.totalorder %s26, %s27
    %p38 = scmp.eq.s32.totalorder %s18, 0
    %p39 = por %p37, %p38
    %p40 = scmp.ne.s32.totalorder %s26, %s27
    %p41 = scmp.eq.s32.totalorder %s19, 1
    %p42 = por %p40, %p41
    %p44 = scmp.ne.s32.totalorder %s27, %s43
    %p45 = scmp.eq.s32.totalorder %s19, 0
    %p46 = por %p44, %p45
    %s48 = sadd.s32 %s47, 1
    %p51 = scmp.eq.s32.totalorder %s13, 1
    %p52 = scmp.ne.s32.totalorder %s47, %s49
    %p53 = scmp.eq.s32.totalorder %s13, 0
    %p54 = por %p52, %p53
    %p55 = scmp.ne.s32.totalorder %s47, %s49
    %p56 = scmp.eq.s32.totalorder %s18, 1
    %p57 = por %p55, %p56
    %p58 = scmp.ne.s32.totalorder %s49, %s50
    %p59 = scmp.eq.s32.totalorder %s18, 0
    %p60 = por %p58, %p59
    %p61 = scmp.ne.s32.totalorder %s49, %s50
    %p62 = scmp.eq.s32.totalorder %s19, 1
    %p63 = por %p61, %p62
    %p65 = scmp.ne.s32.totalorder %s50, %s64
    %p66 = scmp.eq.s32.totalorder %s19, 0
    %p67 = por %p65, %p66
    %s68 = ssub.s32 %s13, %s20
    %p69 = scmp.eq.s32.totalorder %s68, 0
    %s71 = sadd.s32 %s70, 1
    %s72 = scalar_select %p69, %s70, %s71
    %p75 = pneg %p69
    %p76 = scmp.eq.s32.totalorder %s13, 1
    %p77 = por %p75, %p76
    %p78 = scmp.ne.s32.totalorder %s70, %s73
    %p79 = scmp.eq.s32.totalorder %s13, 0
    %p80 = por %p78, %p79
    %p81 = scmp.ne.s32.totalorder %s70, %s73
    %p82 = scmp.eq.s32.totalorder %s18, 1
    %p83 = por %p81, %p82
    %p84 = scmp.ne.s32.totalorder %s73, %s74
    %p85 = scmp.eq.s32.totalorder %s18, 0
    %p86 = por %p84, %p85
    %p87 = scmp.ne.s32.totalorder %s73, %s74
    %p88 = scmp.eq.s32.totalorder %s19, 1
    %p89 = por %p87, %p88
    %p91 = scmp.ne.s32.totalorder %s74, %s90
    %p92 = scmp.eq.s32.totalorder %s19, 0
    %p93 = por %p91, %p92
    %s95 = sadd.s32 %s94, 1
    %p98 = scmp.eq.s32.totalorder %s13, 1
    %p99 = scmp.ne.s32.totalorder %s94, %s96
    %p100 = scmp.eq.s32.totalorder %s13, 0
    %p101 = por %p99, %p100
    %p102 = scmp.ne.s32.totalorder %s94, %s96
    %p103 = scmp.eq.s32.totalorder %s18, 1
    %p104 = por %p102, %p103
    %p105 = scmp.ne.s32.totalorder %s96, %s97
    %p106 = scmp.eq.s32.totalorder %s18, 0
    %p107 = por %p105, %p106
    %p108 = scmp.ne.s32.totalorder %s96, %s97
    %p109 = scmp.eq.s32.totalorder %s19, 1
    %p110 = por %p108, %p109
    %p112 = scmp.ne.s32.totalorder %s97, %s111
    %p113 = scmp.eq.s32.totalorder %s19, 0
    %p114 = por %p112, %p113
    %s116 = sadd.s32 %s115, 1
    %p119 = scmp.eq.s32.totalorder %s13, 1
    %p120 = scmp.ne.s32.totalorder %s115, %s117
    %p121 = scmp.eq.s32.totalorder %s13, 0
    %p122 = por %p120, %p121
    %p123 = scmp.ne.s32.totalorder %s115, %s117
    %p124 = scmp.eq.s32.totalorder %s18, 1
    %p125 = por %p123, %p124
    %p126 = scmp.ne.s32.totalorder %s117, %s118
    %p127 = scmp.eq.s32.totalorder %s18, 0
    %p128 = por %p126, %p127
    %p129 = scmp.ne.s32.totalorder %s117, %s118
    %p130 = scmp.eq.s32.totalorder %s19, 1
    %p131 = por %p129, %p130
    %p133 = scmp.ne.s32.totalorder %s118, %s132
    %p134 = scmp.eq.s32.totalorder %s19, 0
    %p135 = por %p133, %p134
    %s136 = ssub.s32 %s13, %s20
    %p137 = scmp.eq.s32.totalorder %s136, 0
    %s139 = sadd.s32 %s138, 1
    %s140 = scalar_select %p137, %s138, %s139
    %p143 = pneg %p137
    %p144 = scmp.eq.s32.totalorder %s13, 1
    %p145 = por %p143, %p144
    %p146 = scmp.ne.s32.totalorder %s138, %s141
    %p147 = scmp.eq.s32.totalorder %s13, 0
    %p148 = por %p146, %p147
    %p149 = scmp.ne.s32.totalorder %s138, %s141
    %p150 = scmp.eq.s32.totalorder %s18, 1
    %p151 = por %p149, %p150
    %p152 = scmp.ne.s32.totalorder %s141, %s142
    %p153 = scmp.eq.s32.totalorder %s18, 0
    %p154 = por %p152, %p153
    %p155 = scmp.ne.s32.totalorder %s141, %s142
    %p156 = scmp.eq.s32.totalorder %s19, 1
    %p157 = por %p155, %p156
    %p159 = scmp.ne.s32.totalorder %s142, %s158
    %p160 = scmp.eq.s32.totalorder %s19, 0
    %p161 = por %p159, %p160
    %s162 = ssub.s32 %s13, %s20
    %p163 = scmp.eq.s32.totalorder %s162, 0
    %s165 = sadd.s32 %s164, 1
    %s166 = scalar_select %p163, %s164, %s165
    %p169 = pneg %p163
    %p170 = scmp.eq.s32.totalorder %s13, 1
    %p171 = por %p169, %p170
    %p172 = scmp.ne.s32.totalorder %s164, %s167
    %p173 = scmp.eq.s32.totalorder %s13, 0
    %p174 = por %p172, %p173
    %p175 = scmp.ne.s32.totalorder %s164, %s167
    %p176 = scmp.eq.s32.totalorder %s18, 1
    %p177 = por %p175, %p176
    %p178 = scmp.ne.s32.totalorder %s167, %s168
    %p179 = scmp.eq.s32.totalorder %s18, 0
    %p180 = por %p178, %p179
    %p181 = scmp.ne.s32.totalorder %s167, %s168
    %p182 = scmp.eq.s32.totalorder %s19, 1
    %p183 = por %p181, %p182
    %p185 = scmp.ne.s32.totalorder %s168, %s184
    %p186 = scmp.eq.s32.totalorder %s19, 0
    %p187 = por %p185, %p186
    %p188 = scmp.le.s32.totalorder 1, %s13
    %p189 = scmp.lt.s32.totalorder %s13, 3
    %p190 = pnand %p188, %p189
    %p191 = pneg %p190
    // Predicated region
    $region9: #{_lambda_.14} parent=5 // pred_check
      _
    $region10: #{_lambda_.14} parent=5 // pred_check_branch
      %193 = sbr.rel (%p190) target = $region12
    $region11: #{_lambda_.14} parent=5 // pred_region
      %s194 = ssub.s32 %s13, 1
      // Predicated region
      $region13: #{_lambda_.14} parent=11 // pred_check
        %p195 = pneg %p60
      $region14: #{_lambda_.14} parent=11 // pred_check_branch
        %197 = sbr.rel (%p195) target = $region16
      $region15: #{_lambda_.14} parent=11 // pred_region
        _
      $region16: #{_lambda_.14} parent=11 // pred_fallthru
        _
      // Predicated region
      $region17: #{_lambda_.14} parent=11 // pred_check
        %p198 = pneg %p107
      $region18: #{_lambda_.14} parent=11 // pred_check_branch
        %200 = sbr.rel (%p198) target = $region20
      $region19: #{_lambda_.14} parent=11 // pred_region
        _
      $region20: #{_lambda_.14} parent=11 // pred_fallthru
        _
      // Predicated region
      $region21: #{_lambda_.14} parent=11 // pred_check
        %p201 = pneg %p128
      $region22: #{_lambda_.14} parent=11 // pred_check_branch
        %203 = sbr.rel (%p201) target = $region24
      $region23: #{_lambda_.14} parent=11 // pred_region
        _
      $region24: #{_lambda_.14} parent=11 // pred_fallthru
        _
    $region12: #{_lambda_.14} parent=5 // pred_fallthru
      _
    %p204 = scmp.lt.s32.totalorder %s13, 2
    // Predicated region
    $region25: #{_lambda_.14} parent=5 // pred_check
      %p205 = pneg %p204
    $region26: #{_lambda_.14} parent=5 // pred_check_branch
      %207 = sbr.rel (%p205) target = $region28
    $region27: #{_lambda_.14} parent=5 // pred_region
      // Predicated region
      $region29: #{_lambda_.14} parent=27 // pred_check
        %p208 = pneg %p33
      $region30: #{_lambda_.14} parent=27 // pred_check_branch
        %210 = sbr.rel (%p208) target = $region32
      $region31: #{_lambda_.14} parent=27 // pred_region
        %s211 = smul.u32 32, %s13
        %p212 = scmp.lt.s32.totalorder %s211, 63
        %s213 = scalar_select %p212, %s211, 63
        %s214 = smul.addr %s213, 4
        %s215 = scalar_lea.vmem %s0, %s214
        %s216 = smul.u32 32, %s13
      $region32: #{_lambda_.14} parent=27 // pred_fallthru
        _
      // Predicated region
      $region33: #{_lambda_.14} parent=27 // pred_check
        %p217 = pneg %p80
      $region34: #{_lambda_.14} parent=27 // pred_check_branch
        %219 = sbr.rel (%p217) target = $region36
      $region35: #{_lambda_.14} parent=27 // pred_region
        %s220 = smul.u32 32, %s13
        %p221 = scmp.lt.s32.totalorder %s220, 63
        %s222 = scalar_select %p221, %s220, 63
        %s223 = smul.addr %s222, 8
        %s224 = scalar_lea.vmem %s2, %s223
        %s225 = smul.u32 32, %s13
      $region36: #{_lambda_.14} parent=27 // pred_fallthru
        _
    $region28: #{_lambda_.14} parent=5 // pred_fallthru
      _
    %p226 = scmp.le.s32.totalorder 1, %s13
    %p227 = scmp.lt.s32.totalorder %s13, 3
    %p228 = pnand %p226, %p227
    %p229 = pneg %p228
    // Predicated region
    $region37: #{_lambda_.14} parent=5 // pred_check
      _
    $region38: #{_lambda_.14} parent=5 // pred_check_branch
      %231 = sbr.rel (%p228) target = $region40
    $region39: #{_lambda_.14} parent=5 // pred_region
      %s232 = ssub.s32 %s13, 1
      %s233 = smul.u32 32, %s18
      %p234 = scmp.lt.s32.totalorder %s233, 63
      %s235 = scalar_select %p234, %s233, 63
      %s236 = smul.addr %s235, 4
      %s237 = scalar_lea.vmem %s0, %s236
      %p238 = pneg %p39
      %p239 = pneg %p36
      %p240 = pneg %p60
      %p241 = pneg %p57
      %s242 = smul.u32 32, %s18
      %p243 = scmp.lt.s32.totalorder %s242, 63
      %s244 = scalar_select %p243, %s242, 63
      %s245 = smul.addr %s244, 8
      %s246 = scalar_lea.vmem %s2, %s245
      %p247 = pneg %p86
      %p248 = pneg %p83
      %p249 = pneg %p107
      %p250 = pneg %p104
      %p251 = pneg %p128
      %p252 = pneg %p125
      %p253 = pneg %p154
      %p254 = pneg %p151
      %s255 = smul.u32 32, %s18
      %p256 = scmp.lt.s32.totalorder %s255, 63
      %s257 = scalar_select %p256, %s255, 63
      %s258 = smul.addr %s257, 8
      %s259 = scalar_lea.vmem %s5, %s258
      %p260 = pneg %p180
      %p261 = pneg %p177
      %s262 = smul.u32 32, %s18
      %p263 = scmp.lt.s32.totalorder %s262, 63
      %s264 = scalar_select %p263, %s262, 63
      %s265 = smul.addr %s264, 4
      %s266 = scalar_lea.vmem %s6, %s265
      %s267 = smul.u32 32, %s18
      %p268 = scmp.lt.s32.totalorder %s267, 63
      %s269 = scalar_select %p268, %s267, 63
      %s270 = smul.addr %s269, 4
      %s271 = scalar_lea.vmem %s0, %s270
      %s272 = smul.u32 32, %s18
      %s273 = smul.u32 32, %s18
      %p274 = scmp.lt.s32.totalorder %s273, 63
      %s275 = scalar_select %p274, %s273, 63
      %s276 = smul.addr %s275, 8
      %s277 = scalar_lea.vmem %s2, %s276
      %s278 = smul.u32 32, %s18
      %s279 = smul.u32 32, %s18
      %p280 = scmp.lt.s32.totalorder %s279, 63
      %s281 = scalar_select %p280, %s279, 63
      %s282 = smul.addr %s281, 8
      %s283 = scalar_lea.vmem %s5, %s282
      %s284 = smul.u32 32, %s18
      %s285 = smul.u32 32, %s18
      %p286 = scmp.lt.s32.totalorder %s285, 63
      %s287 = scalar_select %p286, %s285, 63
      %s288 = smul.addr %s287, 4
      %s289 = scalar_lea.vmem %s6, %s288
      %s290 = smul.u32 32, %s18
      %v292 = vld [vmem:[%s271] sm:$0xf]
      %v293 = vld [vmem:[%s271 + $0x4] sm:$0xf]
      %v294 = vld [vmem:[%s271 + $0x8] sm:$0xf]
      %v295 = vld [vmem:[%s271 + $0xc] sm:$0xf]
      %v296 = vld [vmem:[%s271 + $0x10] sm:$0xf]
      %v297 = vld [vmem:[%s271 + $0x14] sm:$0xf]
      %v298 = vld [vmem:[%s271 + $0x18] sm:$0xf]
      %v299 = vld [vmem:[%s271 + $0x1c] sm:$0xf]
      %v300 = vld [vmem:[%s271 + $0x20] sm:$0xf]
      %v301 = vld [vmem:[%s271 + $0x24] sm:$0xf]
      %v302 = vld [vmem:[%s271 + $0x28] sm:$0xf]
      %v303 = vld [vmem:[%s271 + $0x2c] sm:$0xf]
      %v304 = vld [vmem:[%s271 + $0x30] sm:$0xf]
      %v305 = vld [vmem:[%s271 + $0x34] sm:$0xf]
      %v306 = vld [vmem:[%s271 + $0x38] sm:$0xf]
      %v307 = vld [vmem:[%s271 + $0x3c] sm:$0xf]
      %v308 = vld [vmem:[%s271 + $0x40] sm:$0xf]
      %v309 = vld [vmem:[%s271 + $0x44] sm:$0xf]
      %v310 = vld [vmem:[%s271 + $0x48] sm:$0xf]
      %v311 = vld [vmem:[%s271 + $0x4c] sm:$0xf]
      %v312 = vld [vmem:[%s271 + $0x50] sm:$0xf]
      %v313 = vld [vmem:[%s271 + $0x54] sm:$0xf]
      %v314 = vld [vmem:[%s271 + $0x58] sm:$0xf]
      %v315 = vld [vmem:[%s271 + $0x5c] sm:$0xf]
      %v316 = vld [vmem:[%s271 + $0x60] sm:$0xf]
      %v317 = vld [vmem:[%s271 + $0x64] sm:$0xf]
      %v318 = vld [vmem:[%s271 + $0x68] sm:$0xf]
      %v319 = vld [vmem:[%s271 + $0x6c] sm:$0xf]
      %v320 = vld [vmem:[%s271 + $0x70] sm:$0xf]
      %v321 = vld [vmem:[%s271 + $0x74] sm:$0xf]
      %v322 = vld [vmem:[%s271 + $0x78] sm:$0xf]
      %v323 = vld [vmem:[%s271 + $0x7c] sm:$0xf]
      %v324 = vld [vmem:[%s1] sm:$0xf]
      %v325 = vld [vmem:[%s1 + $0x4] sm:$0xf]
      %v326 = vld [vmem:[%s1 + $0x8] sm:$0xf]
      %v327 = vld [vmem:[%s1 + $0xc] sm:$0xf]
      %v328 = vld [vmem:[%s1 + $0x10] sm:$0xf]
      %v329 = vld [vmem:[%s1 + $0x14] sm:$0xf]
      %v330 = vld [vmem:[%s1 + $0x18] sm:$0xf]
      %v331 = vld [vmem:[%s1 + $0x1c] sm:$0xf]
      %v332 = vld [vmem:[%s1 + $0x20] sm:$0xf]
      %v333 = vld [vmem:[%s277] sm:$0xff]
      %v334 = vld [vmem:[%s277 + $0x8] sm:$0xff]
      %v335 = vld [vmem:[%s277 + $0x10] sm:$0xff]
      %v336 = vld [vmem:[%s277 + $0x18] sm:$0xff]
      %v337 = vld [vmem:[%s277 + $0x20] sm:$0xff]
      %v338 = vld [vmem:[%s277 + $0x28] sm:$0xff]
      %v339 = vld [vmem:[%s277 + $0x30] sm:$0xff]
      %v340 = vld [vmem:[%s277 + $0x38] sm:$0xff]
      %v341 = vld [vmem:[%s277 + $0x40] sm:$0xff]
      %v342 = vld [vmem:[%s277 + $0x48] sm:$0xff]
      %v343 = vld [vmem:[%s277 + $0x50] sm:$0xff]
      %v344 = vld [vmem:[%s277 + $0x58] sm:$0xff]
      %v345 = vld [vmem:[%s277 + $0x60] sm:$0xff]
      %v346 = vld [vmem:[%s277 + $0x68] sm:$0xff]
      %v347 = vld [vmem:[%s277 + $0x70] sm:$0xff]
      %v348 = vld [vmem:[%s277 + $0x78] sm:$0xff]
      %v349 = vld [vmem:[%s277 + $0x80] sm:$0xff]
      %v350 = vld [vmem:[%s277 + $0x88] sm:$0xff]
      %v351 = vld [vmem:[%s277 + $0x90] sm:$0xff]
      %v352 = vld [vmem:[%s277 + $0x98] sm:$0xff]
      %v353 = vld [vmem:[%s277 + $0xa0] sm:$0xff]
      %v354 = vld [vmem:[%s277 + $0xa8] sm:$0xff]
      %v355 = vld [vmem:[%s277 + $0xb0] sm:$0xff]
      %v356 = vld [vmem:[%s277 + $0xb8] sm:$0xff]
      %v357 = vld [vmem:[%s277 + $0xc0] sm:$0xff]
      %v358 = vld [vmem:[%s277 + $0xc8] sm:$0xff]
      %v359 = vld [vmem:[%s277 + $0xd0] sm:$0xff]
      %v360 = vld [vmem:[%s277 + $0xd8] sm:$0xff]
      %v361 = vld [vmem:[%s277 + $0xe0] sm:$0xff]
      %v362 = vld [vmem:[%s277 + $0xe8] sm:$0xff]
      %v363 = vld [vmem:[%s277 + $0xf0] sm:$0xff]
      %v364 = vld [vmem:[%s277 + $0xf8] sm:$0xff]
      %v397 = vunpack.c.l.b16 %v292
      %v398 = vunpack.c.l.b16 %v293
      %v399 = vunpack.c.l.b16 %v294
      %v400 = vunpack.c.l.b16 %v295
      %v401 = vunpack.c.l.b16 %v296
      %v402 = vunpack.c.l.b16 %v297
      %v403 = vunpack.c.l.b16 %v298
      %v404 = vunpack.c.l.b16 %v299
      %v405 = vunpack.c.l.b16 %v300
      %v406 = vunpack.c.l.b16 %v301
      %v407 = vunpack.c.l.b16 %v302
      %v408 = vunpack.c.l.b16 %v303
      %v409 = vunpack.c.l.b16 %v304
      %v410 = vunpack.c.l.b16 %v305
      %v411 = vunpack.c.l.b16 %v306
      %v412 = vunpack.c.l.b16 %v307
      %v413 = vunpack.c.l.b16 %v308
      %v414 = vunpack.c.l.b16 %v309
      %v415 = vunpack.c.l.b16 %v310
      %v416 = vunpack.c.l.b16 %v311
      %v417 = vunpack.c.l.b16 %v312
      %v418 = vunpack.c.l.b16 %v313
      %v419 = vunpack.c.l.b16 %v314
      %v420 = vunpack.c.l.b16 %v315
      %v421 = vunpack.c.l.b16 %v316
      %v422 = vunpack.c.l.b16 %v317
      %v423 = vunpack.c.l.b16 %v318
      %v424 = vunpack.c.l.b16 %v319
      %v425 = vunpack.c.l.b16 %v320
      %v426 = vunpack.c.l.b16 %v321
      %v427 = vunpack.c.l.b16 %v322
      %v428 = vunpack.c.l.b16 %v323
      %v429 = vpack.c.b16 %v398, %v397
      %v430 = vpack.c.b16 %v400, %v399
      %v431 = vpack.c.b16 %v402, %v401
      %v432 = vpack.c.b16 %v404, %v403
      %v433 = vpack.c.b16 %v406, %v405
      %v434 = vpack.c.b16 %v408, %v407
      %v435 = vpack.c.b16 %v410, %v409
      %v436 = vpack.c.b16 %v412, %v411
      %v437 = vpack.c.b16 %v414, %v413
      %v438 = vpack.c.b16 %v416, %v415
      %v439 = vpack.c.b16 %v418, %v417
      %v440 = vpack.c.b16 %v420, %v419
      %v441 = vpack.c.b16 %v422, %v421
      %v442 = vpack.c.b16 %v424, %v423
      %v443 = vpack.c.b16 %v426, %v425
      %v444 = vpack.c.b16 %v428, %v427
      %v454 = vunpack.c.l.b16 %v324
      %v455 = vunpack.c.l.b16 %v325
      %v456 = vunpack.c.l.b16 %v326
      %v457 = vunpack.c.l.b16 %v327
      %v458 = vunpack.c.l.b16 %v328
      %v459 = vunpack.c.l.b16 %v329
      %v460 = vunpack.c.l.b16 %v330
      %v461 = vunpack.c.l.b16 %v331
      %v462 = vunpack.c.l.b16 %v332
      %v463 = vpack.c.b16 %v455, %v454
      %v464 = vpack.c.b16 %v457, %v456
      %v465 = vpack.c.b16 %v459, %v458
      %v466 = vpack.c.b16 %v461, %v460
      %v467 = vpack.c.b16 %v462, %v462
      %vm472 = vcmask 588800
      %v474 = vsel %vm472, %v429, 0
      %v477 = vsel %vm472, %v430, 0
      %v480 = vsel %vm472, %v431, 0
      %v483 = vsel %vm472, %v432, 0
      %v486 = vsel %vm472, %v433, 0
      %v489 = vsel %vm472, %v434, 0
      %v492 = vsel %vm472, %v435, 0
      %v495 = vsel %vm472, %v436, 0
      %v498 = vsel %vm472, %v437, 0
      %v501 = vsel %vm472, %v438, 0
      %v504 = vsel %vm472, %v439, 0
      %v507 = vsel %vm472, %v440, 0
      %v510 = vsel %vm472, %v441, 0
      %v513 = vsel %vm472, %v442, 0
      %v516 = vsel %vm472, %v443, 0
      %v519 = vsel %vm472, %v444, 0
      %vm521 = vcmask 1043456
      %v523 = vsel %vm521, %v467, 0
      %525 = vmatprep.subr.bf16.mxu0 0
      %526 = vmatpush1.bf16.msra.mxu0 %v463
      %527 = vmatprep.subr.bf16.mxu0 0
      %528 = vmatpush1.bf16.msra.mxu0 %v464
      %529 = vmatprep.subr.bf16.mxu0 0
      %530 = vmatpush1.bf16.msra.mxu0 %v465
      %531 = vmatprep.subr.bf16.mxu0 0
      %532 = vmatpush1.bf16.msra.mxu0 %v466
      %533 = vmatprep.subr.bf16.mxu0 0
      %534 = vmatpush1.bf16.msra.mxu0 %v523
      %535 = vmatprep.subr.bf16.mxu0 0
      %536 = vmatpush1.bf16.msra.mxu0 0
      %537 = vmatprep.subr.bf16.mxu0 0
      %538 = vmatpush1.bf16.msra.mxu0 0
      %539 = vmatprep.subr.bf16.mxu0 0
      %540 = vmatpush1.bf16.msra.mxu0 0
      %541 = vmatprep.subr.bf16.mxu0 0
      %542 = vmatpush1.bf16.msra.mxu0 0
      %543 = vmatprep.subr.bf16.mxu0 0
      %544 = vmatpush1.bf16.msra.mxu0 0
      %545 = vmatprep.subr.bf16.mxu0 0
      %546 = vmatpush1.bf16.msra.mxu0 0
      %547 = vmatprep.subr.bf16.mxu0 0
      %548 = vmatpush1.bf16.msra.mxu0 0
      %549 = vmatprep.subr.bf16.mxu0 0
      %550 = vmatpush1.bf16.msra.mxu0 0
      %551 = vmatprep.subr.bf16.mxu0 0
      %552 = vmatpush1.bf16.msra.mxu0 0
      %553 = vmatprep.subr.bf16.mxu0 0
      %554 = vmatpush1.bf16.msra.mxu0 0
      %555 = vmatprep.subr.bf16.mxu0 0
      %556 = vmatpush1.bf16.msra.mxu0 0
      %557 = vmatprep.mubr.bf16.mxu0 0
      %558 = vmatmul.mubr.bf16.gmra.mrb[0].mxu0 %v474
      %v559 = vpop.f32.mrb[0].mxu0
      %v560 = vadd.f32 %v333, %v559
      %v561 = vpop.f32.mrb[0].mxu0
      %v562 = vpop.f32.mrb[0].mxu0
      %v563 = vadd.f32 %v334, %v562
      %v564 = vpop.f32.mrb[0].mxu0
      %565 = vmatprep.mubr.bf16.mxu0 0
      %566 = vmatmul.mubr.bf16.gmra.mrb[0].mxu0 %v477
      %v567 = vpop.f32.mrb[0].mxu0
      %v568 = vadd.f32 %v335, %v567
      %v569 = vpop.f32.mrb[0].mxu0
      %v570 = vpop.f32.mrb[0].mxu0
      %v571 = vadd.f32 %v336, %v570
      %v572 = vpop.f32.mrb[0].mxu0
      %573 = vmatprep.mubr.bf16.mxu0 0
      %574 = vmatmul.mubr.bf16.gmra.mrb[0].mxu0 %v480
      %v575 = vpop.f32.mrb[0].mxu0
      %v576 = vadd.f32 %v337, %v575
      %v577 = vpop.f32.mrb[0].mxu0
      %v578 = vpop.f32.mrb[0].mxu0
      %v579 = vadd.f32 %v338, %v578
      %v580 = vpop.f32.mrb[0].mxu0
      %581 = vmatprep.mubr.bf16.mxu0 0
      %582 = vmatmul.mubr.bf16.gmra.mrb[0].mxu0 %v483
      %v583 = vpop.f32.mrb[0].mxu0
      %v584 = vadd.f32 %v339, %v583
      %v585 = vpop.f32.mrb[0].mxu0
      %v586 = vpop.f32.mrb[0].mxu0
      %v587 = vadd.f32 %v340, %v586
      %v588 = vpop.f32.mrb[0].mxu0
      %589 = vmatprep.mubr.bf16.mxu0 0
      %590 = vmatmul.mubr.bf16.gmra.mrb[0].mxu0 %v486
      %v591 = vpop.f32.mrb[0].mxu0
      %v592 = vadd.f32 %v341, %v591
      %v593 = vpop.f32.mrb[0].mxu0
      %v594 = vpop.f32.mrb[0].mxu0
      %v595 = vadd.f32 %v342, %v594
      %v596 = vpop.f32.mrb[0].mxu0
      %597 = vmatprep.mubr.bf16.mxu0 0
      %598 = vmatmul.mubr.bf16.gmra.mrb[0].mxu0 %v489
      %v599 = vpop.f32.mrb[0].mxu0
      %v600 = vadd.f32 %v343, %v599
      %v601 = vpop.f32.mrb[0].mxu0
      %v602 = vpop.f32.mrb[0].mxu0
      %v603 = vadd.f32 %v344, %v602
      %v604 = vpop.f32.mrb[0].mxu0
      %605 = vmatprep.mubr.bf16.mxu0 0
      %606 = vmatmul.mubr.bf16.gmra.mrb[0].mxu0 %v492
      %v607 = vpop.f32.mrb[0].mxu0
      %v608 = vadd.f32 %v345, %v607
      %v609 = vpop.f32.mrb[0].mxu0
      %v610 = vpop.f32.mrb[0].mxu0
      %v611 = vadd.f32 %v346, %v610
      %v612 = vpop.f32.mrb[0].mxu0
      %613 = vmatprep.mubr.bf16.mxu0 0
      %614 = vmatmul.mubr.bf16.gmra.mrb[0].mxu0 %v495
      %v615 = vpop.f32.mrb[0].mxu0
      %v616 = vadd.f32 %v347, %v615
      %v617 = vpop.f32.mrb[0].mxu0
      %v618 = vpop.f32.mrb[0].mxu0
      %v619 = vadd.f32 %v348, %v618
      %v620 = vpop.f32.mrb[0].mxu0
      %621 = vmatprep.mubr.bf16.mxu0 0
      %622 = vmatmul.mubr.bf16.gmra.mrb[0].mxu0 %v498
      %v623 = vpop.f32.mrb[0].mxu0
      %v624 = vadd.f32 %v349, %v623
      %v625 = vpop.f32.mrb[0].mxu0
      %v626 = vpop.f32.mrb[0].mxu0
      %v627 = vadd.f32 %v350, %v626
      %v628 = vpop.f32.mrb[0].mxu0
      %629 = vmatprep.mubr.bf16.mxu0 0
      %630 = vmatmul.mubr.bf16.gmra.mrb[0].mxu0 %v501
      %v631 = vpop.f32.mrb[0].mxu0
      %v632 = vadd.f32 %v351, %v631
      %v633 = vpop.f32.mrb[0].mxu0
      %v634 = vpop.f32.mrb[0].mxu0
      %v635 = vadd.f32 %v352, %v634
      %v636 = vpop.f32.mrb[0].mxu0
      %637 = vmatprep.mubr.bf16.mxu0 0
      %638 = vmatmul.mubr.bf16.gmra.mrb[0].mxu0 %v504
      %v639 = vpop.f32.mrb[0].mxu0
      %v640 = vadd.f32 %v353, %v639
      %v641 = vpop.f32.mrb[0].mxu0
      %v642 = vpop.f32.mrb[0].mxu0
      %v643 = vadd.f32 %v354, %v642
      %v644 = vpop.f32.mrb[0].mxu0
      %645 = vmatprep.mubr.bf16.mxu0 0
      %646 = vmatmul.mubr.bf16.gmra.mrb[0].mxu0 %v507
      %v647 = vpop.f32.mrb[0].mxu0
      %v648 = vadd.f32 %v355, %v647
      %v649 = vpop.f32.mrb[0].mxu0
      %v650 = vpop.f32.mrb[0].mxu0
      %v651 = vadd.f32 %v356, %v650
      %v652 = vpop.f32.mrb[0].mxu0
      %653 = vmatprep.mubr.bf16.mxu0 0
      %654 = vmatmul.mubr.bf16.gmra.mrb[0].mxu0 %v510
      %v655 = vpop.f32.mrb[0].mxu0
      %v656 = vadd.f32 %v357, %v655
      %v657 = vpop.f32.mrb[0].mxu0
      %v658 = vpop.f32.mrb[0].mxu0
      %v659 = vadd.f32 %v358, %v658
      %v660 = vpop.f32.mrb[0].mxu0
      %661 = vmatprep.mubr.bf16.mxu0 0
      %662 = vmatmul.mubr.bf16.gmra.mrb[0].mxu0 %v513
      %v663 = vpop.f32.mrb[0].mxu0
      %v664 = vadd.f32 %v359, %v663
      %v665 = vpop.f32.mrb[0].mxu0
      %v666 = vpop.f32.mrb[0].mxu0
      %v667 = vadd.f32 %v360, %v666
      %v668 = vpop.f32.mrb[0].mxu0
      %669 = vmatprep.mubr.bf16.mxu0 0
      %670 = vmatmul.mubr.bf16.gmra.mrb[0].mxu0 %v516
      %v671 = vpop.f32.mrb[0].mxu0
      %v672 = vadd.f32 %v361, %v671
      %v673 = vpop.f32.mrb[0].mxu0
      %v674 = vpop.f32.mrb[0].mxu0
      %v675 = vadd.f32 %v362, %v674
      %v676 = vpop.f32.mrb[0].mxu0
      %677 = vmatprep.mubr.bf16.mxu0 0
      %678 = vmatmul.mubr.bf16.gmra.mrb[0].mxu0 %v519
      %v679 = vpop.f32.mrb[0].mxu0
      %v680 = vadd.f32 %v363, %v679
      %v681 = vpop.f32.mrb[0].mxu0
      %v682 = vpop.f32.mrb[0].mxu0
      %v683 = vadd.f32 %v364, %v682
      %v684 = vpop.f32.mrb[0].mxu0
      %685 = vdwg.mxu0
      %vm686 = vcmask 64512
      %687 = vst.msk [vmem:[%s283] sm:$0xff] %vm686, %v560
      %688 = vst.msk [vmem:[%s283 + $0x8] sm:$0xff] %vm686, %v563
      %689 = vst.msk [vmem:[%s283 + $0x10] sm:$0xff] %vm686, %v568
      %690 = vst.msk [vmem:[%s283 + $0x18] sm:$0xff] %vm686, %v571
      %691 = vst.msk [vmem:[%s283 + $0x20] sm:$0xff] %vm686, %v576
      %692 = vst.msk [vmem:[%s283 + $0x28] sm:$0xff] %vm686, %v579
      %693 = vst.msk [vmem:[%s283 + $0x30] sm:$0xff] %vm686, %v584
      %694 = vst.msk [vmem:[%s283 + $0x38] sm:$0xff] %vm686, %v587
      %695 = vst.msk [vmem:[%s283 + $0x40] sm:$0xff] %vm686, %v592
      %696 = vst.msk [vmem:[%s283 + $0x48] sm:$0xff] %vm686, %v595
      %697 = vst.msk [vmem:[%s283 + $0x50] sm:$0xff] %vm686, %v600
      %698 = vst.msk [vmem:[%s283 + $0x58] sm:$0xff] %vm686, %v603
      %699 = vst.msk [vmem:[%s283 + $0x60] sm:$0xff] %vm686, %v608
      %700 = vst.msk [vmem:[%s283 + $0x68] sm:$0xff] %vm686, %v611
      %701 = vst.msk [vmem:[%s283 + $0x70] sm:$0xff] %vm686, %v616
      %702 = vst.msk [vmem:[%s283 + $0x78] sm:$0xff] %vm686, %v619
      %703 = vst.msk [vmem:[%s283 + $0x80] sm:$0xff] %vm686, %v624
      %704 = vst.msk [vmem:[%s283 + $0x88] sm:$0xff] %vm686, %v627
      %705 = vst.msk [vmem:[%s283 + $0x90] sm:$0xff] %vm686, %v632
      %706 = vst.msk [vmem:[%s283 + $0x98] sm:$0xff] %vm686, %v635
      %707 = vst.msk [vmem:[%s283 + $0xa0] sm:$0xff] %vm686, %v640
      %708 = vst.msk [vmem:[%s283 + $0xa8] sm:$0xff] %vm686, %v643
      %709 = vst.msk [vmem:[%s283 + $0xb0] sm:$0xff] %vm686, %v648
      %710 = vst.msk [vmem:[%s283 + $0xb8] sm:$0xff] %vm686, %v651
      %711 = vst.msk [vmem:[%s283 + $0xc0] sm:$0xff] %vm686, %v656
      %712 = vst.msk [vmem:[%s283 + $0xc8] sm:$0xff] %vm686, %v659
      %713 = vst.msk [vmem:[%s283 + $0xd0] sm:$0xff] %vm686, %v664
      %714 = vst.msk [vmem:[%s283 + $0xd8] sm:$0xff] %vm686, %v667
      %715 = vst.msk [vmem:[%s283 + $0xe0] sm:$0xff] %vm686, %v672
      %716 = vst.msk [vmem:[%s283 + $0xe8] sm:$0xff] %vm686, %v675
      %717 = vst.msk [vmem:[%s283 + $0xf0] sm:$0xff] %vm686, %v680
      %718 = vst.msk [vmem:[%s283 + $0xf8] sm:$0xff] %vm686, %v683
      %v719 = vld [vmem:[%s3] sm:$0x1]
      %v721 = vlaneseq
      %v722 = vshrl.u32 %v721, 7
      %v723 = vsub.s32 0, %v722
      %v724 = vrot.slane %v719, %v723
      %v726 = vmul.f32 %v560, %v724
      %v727 = vmul.f32 %v563, %v724
      %v728 = vmul.f32 %v568, %v724
      %v729 = vmul.f32 %v571, %v724
      %v730 = vmul.f32 %v576, %v724
      %v731 = vmul.f32 %v579, %v724
      %v732 = vmul.f32 %v584, %v724
      %v733 = vmul.f32 %v587, %v724
      %v734 = vmul.f32 %v592, %v724
      %v735 = vmul.f32 %v595, %v724
      %v736 = vmul.f32 %v600, %v724
      %v737 = vmul.f32 %v603, %v724
      %v738 = vmul.f32 %v608, %v724
      %v739 = vmul.f32 %v611, %v724
      %v740 = vmul.f32 %v616, %v724
      %v741 = vmul.f32 %v619, %v724
      %v742 = vmul.f32 %v624, %v724
      %v743 = vmul.f32 %v627, %v724
      %v744 = vmul.f32 %v632, %v724
      %v745 = vmul.f32 %v635, %v724
      %v746 = vmul.f32 %v640, %v724
      %v747 = vmul.f32 %v643, %v724
      %v748 = vmul.f32 %v648, %v724
      %v749 = vmul.f32 %v651, %v724
      %v750 = vmul.f32 %v656, %v724
      %v751 = vmul.f32 %v659, %v724
      %v752 = vmul.f32 %v664, %v724
      %v753 = vmul.f32 %v667, %v724
      %v754 = vmul.f32 %v672, %v724
      %v755 = vmul.f32 %v675, %v724
      %v756 = vmul.f32 %v680, %v724
      %v757 = vmul.f32 %v683, %v724
      %v758 = vld [vmem:[%s4] sm:$0x1]
      %v760 = vlaneseq
      %v761 = vshrl.u32 %v760, 7
      %v762 = vsub.s32 0, %v761
      %v763 = vrot.slane %v758, %v762
      %v765 = vadd.f32 %v726, %v763
      %v766 = vadd.f32 %v727, %v763
      %v767 = vadd.f32 %v728, %v763
      %v768 = vadd.f32 %v729, %v763
      %v769 = vadd.f32 %v730, %v763
      %v770 = vadd.f32 %v731, %v763
      %v771 = vadd.f32 %v732, %v763
      %v772 = vadd.f32 %v733, %v763
      %v773 = vadd.f32 %v734, %v763
      %v774 = vadd.f32 %v735, %v763
      %v775 = vadd.f32 %v736, %v763
      %v776 = vadd.f32 %v737, %v763
      %v777 = vadd.f32 %v738, %v763
      %v778 = vadd.f32 %v739, %v763
      %v779 = vadd.f32 %v740, %v763
      %v780 = vadd.f32 %v741, %v763
      %v781 = vadd.f32 %v742, %v763
      %v782 = vadd.f32 %v743, %v763
      %v783 = vadd.f32 %v744, %v763
      %v784 = vadd.f32 %v745, %v763
      %v785 = vadd.f32 %v746, %v763
      %v786 = vadd.f32 %v747, %v763
      %v787 = vadd.f32 %v748, %v763
      %v788 = vadd.f32 %v749, %v763
      %v789 = vadd.f32 %v750, %v763
      %v790 = vadd.f32 %v751, %v763
      %v791 = vadd.f32 %v752, %v763
      %v792 = vadd.f32 %v753, %v763
      %v793 = vadd.f32 %v754, %v763
      %v794 = vadd.f32 %v755, %v763
      %v795 = vadd.f32 %v756, %v763
      %v796 = vadd.f32 %v757, %v763
      %v797 = vmax.f32 %v765, 0.0
      %v798 = vmax.f32 %v766, 0.0
      %v799 = vmax.f32 %v767, 0.0
      %v800 = vmax.f32 %v768, 0.0
      %v801 = vmax.f32 %v769, 0.0
      %v802 = vmax.f32 %v770, 0.0
      %v803 = vmax.f32 %v771, 0.0
      %v804 = vmax.f32 %v772, 0.0
      %v805 = vmax.f32 %v773, 0.0
      %v806 = vmax.f32 %v774, 0.0
      %v807 = vmax.f32 %v775, 0.0
      %v808 = vmax.f32 %v776, 0.0
      %v809 = vmax.f32 %v777, 0.0
      %v810 = vmax.f32 %v778, 0.0
      %v811 = vmax.f32 %v779, 0.0
      %v812 = vmax.f32 %v780, 0.0
      %v813 = vmax.f32 %v781, 0.0
      %v814 = vmax.f32 %v782, 0.0
      %v815 = vmax.f32 %v783, 0.0
      %v816 = vmax.f32 %v784, 0.0
      %v817 = vmax.f32 %v785, 0.0
      %v818 = vmax.f32 %v786, 0.0
      %v819 = vmax.f32 %v787, 0.0
      %v820 = vmax.f32 %v788, 0.0
      %v821 = vmax.f32 %v789, 0.0
      %v822 = vmax.f32 %v790, 0.0
      %v823 = vmax.f32 %v791, 0.0
      %v824 = vmax.f32 %v792, 0.0
      %v825 = vmax.f32 %v793, 0.0
      %v826 = vmax.f32 %v794, 0.0
      %v827 = vmax.f32 %v795, 0.0
      %v828 = vmax.f32 %v796, 0.0
      %v829 = vpack.c.bf16 %v798, %v797
      %v830 = vpack.c.bf16 %v800, %v799
      %v831 = vpack.c.bf16 %v802, %v801
      %v832 = vpack.c.bf16 %v804, %v803
      %v833 = vpack.c.bf16 %v806, %v805
      %v834 = vpack.c.bf16 %v808, %v807
      %v835 = vpack.c.bf16 %v810, %v809
      %v836 = vpack.c.bf16 %v812, %v811
      %v837 = vpack.c.bf16 %v814, %v813
      %v838 = vpack.c.bf16 %v816, %v815
      %v839 = vpack.c.bf16 %v818, %v817
      %v840 = vpack.c.bf16 %v820, %v819
      %v841 = vpack.c.bf16 %v822, %v821
      %v842 = vpack.c.bf16 %v824, %v823
      %v843 = vpack.c.bf16 %v826, %v825
      %v844 = vpack.c.bf16 %v828, %v827
      %v861 = vunpack.c.l.b16 %v829
      %v862 = vunpack.c.h.b16 %v829
      %v863 = vunpack.c.l.b16 %v830
      %v864 = vunpack.c.h.b16 %v830
      %v865 = vunpack.c.l.b16 %v831
      %v866 = vunpack.c.h.b16 %v831
      %v867 = vunpack.c.l.b16 %v832
      %v868 = vunpack.c.h.b16 %v832
      %v869 = vunpack.c.l.b16 %v833
      %v870 = vunpack.c.h.b16 %v833
      %v871 = vunpack.c.l.b16 %v834
      %v872 = vunpack.c.h.b16 %v834
      %v873 = vunpack.c.l.b16 %v835
      %v874 = vunpack.c.h.b16 %v835
      %v875 = vunpack.c.l.b16 %v836
      %v876 = vunpack.c.h.b16 %v836
      %v877 = vunpack.c.l.b16 %v837
      %v878 = vunpack.c.h.b16 %v837
      %v879 = vunpack.c.l.b16 %v838
      %v880 = vunpack.c.h.b16 %v838
      %v881 = vunpack.c.l.b16 %v839
      %v882 = vunpack.c.h.b16 %v839
      %v883 = vunpack.c.l.b16 %v840
      %v884 = vunpack.c.h.b16 %v840
      %v885 = vunpack.c.l.b16 %v841
      %v886 = vunpack.c.h.b16 %v841
      %v887 = vunpack.c.l.b16 %v842
      %v888 = vunpack.c.h.b16 %v842
      %v889 = vunpack.c.l.b16 %v843
      %v890 = vunpack.c.h.b16 %v843
      %v891 = vunpack.c.l.b16 %v844
      %v892 = vunpack.c.h.b16 %v844
      %v893 = vpack.c.b16 %v861, %v861
      %v894 = vpack.c.b16 %v862, %v862
      %v895 = vpack.c.b16 %v863, %v863
      %v896 = vpack.c.b16 %v864, %v864
      %v897 = vpack.c.b16 %v865, %v865
      %v898 = vpack.c.b16 %v866, %v866
      %v899 = vpack.c.b16 %v867, %v867
      %v900 = vpack.c.b16 %v868, %v868
      %v901 = vpack.c.b16 %v869, %v869
      %v902 = vpack.c.b16 %v870, %v870
      %v903 = vpack.c.b16 %v871, %v871
      %v904 = vpack.c.b16 %v872, %v872
      %v905 = vpack.c.b16 %v873, %v873
      %v906 = vpack.c.b16 %v874, %v874
      %v907 = vpack.c.b16 %v875, %v875
      %v908 = vpack.c.b16 %v876, %v876
      %v909 = vpack.c.b16 %v877, %v877
      %v910 = vpack.c.b16 %v878, %v878
      %v911 = vpack.c.b16 %v879, %v879
      %v912 = vpack.c.b16 %v880, %v880
      %v913 = vpack.c.b16 %v881, %v881
      %v914 = vpack.c.b16 %v882, %v882
      %v915 = vpack.c.b16 %v883, %v883
      %v916 = vpack.c.b16 %v884, %v884
      %v917 = vpack.c.b16 %v885, %v885
      %v918 = vpack.c.b16 %v886, %v886
      %v919 = vpack.c.b16 %v887, %v887
      %v920 = vpack.c.b16 %v888, %v888
      %v921 = vpack.c.b16 %v889, %v889
      %v922 = vpack.c.b16 %v890, %v890
      %v923 = vpack.c.b16 %v891, %v891
      %v924 = vpack.c.b16 %v892, %v892
      %vm957 = vcmask 60416
      %958 = vst.msk [vmem:[%s289] sm:$0xf] %vm957, %v893
      %959 = vst.msk [vmem:[%s289 + $0x4] sm:$0xf] %vm957, %v894
      %960 = vst.msk [vmem:[%s289 + $0x8] sm:$0xf] %vm957, %v895
      %961 = vst.msk [vmem:[%s289 + $0xc] sm:$0xf] %vm957, %v896
      %962 = vst.msk [vmem:[%s289 + $0x10] sm:$0xf] %vm957, %v897
      %963 = vst.msk [vmem:[%s289 + $0x14] sm:$0xf] %vm957, %v898
      %964 = vst.msk [vmem:[%s289 + $0x18] sm:$0xf] %vm957, %v899
      %965 = vst.msk [vmem:[%s289 + $0x1c] sm:$0xf] %vm957, %v900
      %966 = vst.msk [vmem:[%s289 + $0x20] sm:$0xf] %vm957, %v901
      %967 = vst.msk [vmem:[%s289 + $0x24] sm:$0xf] %vm957, %v902
      %968 = vst.msk [vmem:[%s289 + $0x28] sm:$0xf] %vm957, %v903
      %969 = vst.msk [vmem:[%s289 + $0x2c] sm:$0xf] %vm957, %v904
      %970 = vst.msk [vmem:[%s289 + $0x30] sm:$0xf] %vm957, %v905
      %971 = vst.msk [vmem:[%s289 + $0x34] sm:$0xf] %vm957, %v906
      %972 = vst.msk [vmem:[%s289 + $0x38] sm:$0xf] %vm957, %v907
      %973 = vst.msk [vmem:[%s289 + $0x3c] sm:$0xf] %vm957, %v908
      %974 = vst.msk [vmem:[%s289 + $0x40] sm:$0xf] %vm957, %v909
      %975 = vst.msk [vmem:[%s289 + $0x44] sm:$0xf] %vm957, %v910
      %976 = vst.msk [vmem:[%s289 + $0x48] sm:$0xf] %vm957, %v911
      %977 = vst.msk [vmem:[%s289 + $0x4c] sm:$0xf] %vm957, %v912
      %978 = vst.msk [vmem:[%s289 + $0x50] sm:$0xf] %vm957, %v913
      %979 = vst.msk [vmem:[%s289 + $0x54] sm:$0xf] %vm957, %v914
      %980 = vst.msk [vmem:[%s289 + $0x58] sm:$0xf] %vm957, %v915
      %981 = vst.msk [vmem:[%s289 + $0x5c] sm:$0xf] %vm957, %v916
      %982 = vst.msk [vmem:[%s289 + $0x60] sm:$0xf] %vm957, %v917
      %983 = vst.msk [vmem:[%s289 + $0x64] sm:$0xf] %vm957, %v918
      %984 = vst.msk [vmem:[%s289 + $0x68] sm:$0xf] %vm957, %v919
      %985 = vst.msk [vmem:[%s289 + $0x6c] sm:$0xf] %vm957, %v920
      %986 = vst.msk [vmem:[%s289 + $0x70] sm:$0xf] %vm957, %v921
      %987 = vst.msk [vmem:[%s289 + $0x74] sm:$0xf] %vm957, %v922
      %988 = vst.msk [vmem:[%s289 + $0x78] sm:$0xf] %vm957, %v923
      %989 = vst.msk [vmem:[%s289 + $0x7c] sm:$0xf] %vm957, %v924
      %s990 = smul.u32 32, %s18
      %p991 = scmp.lt.s32.totalorder %s990, 63
      %s992 = scalar_select %p991, %s990, 63
      %s993 = smul.addr %s992, 8
      %s994 = scalar_lea.vmem %s5, %s993
      %s995 = smul.u32 32, %s18
      %p996 = scmp.lt.s32.totalorder %s995, 63
      %s997 = scalar_select %p996, %s995, 63
      %s998 = smul.addr %s997, 4
      %s999 = scalar_lea.vmem %s6, %s998
      // Predicated region
      $region41: #{_lambda_.14} parent=39 // pred_check
        %p1000 = pneg %p151
      $region42: #{_lambda_.14} parent=39 // pred_check_branch
        %1002 = sbr.rel (%p1000) target = $region44
      $region43: #{_lambda_.14} parent=39 // pred_region
        %s1003 = smul.u32 32, %s18
      $region44: #{_lambda_.14} parent=39 // pred_fallthru
        _
      // Predicated region
      $region45: #{_lambda_.14} parent=39 // pred_check
        %p1004 = pneg %p177
      $region46: #{_lambda_.14} parent=39 // pred_check_branch
        %1006 = sbr.rel (%p1004) target = $region48
      $region47: #{_lambda_.14} parent=39 // pred_region
        %s1007 = smul.u32 32, %s18
      $region48: #{_lambda_.14} parent=39 // pred_fallthru
        _
    $region40: #{_lambda_.14} parent=5 // pred_fallthru
      _
    %p1008 = scmp.le.s32.totalorder 2, %s13
    // Predicated region
    $region49: #{_lambda_.14} parent=5 // pred_check
      %p1009 = pneg %p1008
    $region50: #{_lambda_.14} parent=5 // pred_check_branch
      %1011 = sbr.rel (%p1009) target = $region52
    $region51: #{_lambda_.14} parent=5 // pred_region
      %s1012 = ssub.s32 %s13, 2
      // Predicated region
      $region53: #{_lambda_.14} parent=51 // pred_check
        %p1013 = pneg %p157
      $region54: #{_lambda_.14} parent=51 // pred_check_branch
        %1015 = sbr.rel (%p1013) target = $region56
      $region55: #{_lambda_.14} parent=51 // pred_region
        %s1016 = smul.u32 32, %s19
        %p1017 = scmp.lt.s32.totalorder %s1016, 63
        %s1018 = scalar_select %p1017, %s1016, 63
        %s1019 = smul.addr %s1018, 8
        %s1020 = scalar_lea.vmem %s5, %s1019
      $region56: #{_lambda_.14} parent=51 // pred_fallthru
        _
      // Predicated region
      $region57: #{_lambda_.14} parent=51 // pred_check
        %p1021 = pneg %p183
      $region58: #{_lambda_.14} parent=51 // pred_check_branch
        %1023 = sbr.rel (%p1021) target = $region60
      $region59: #{_lambda_.14} parent=51 // pred_region
        %s1024 = smul.u32 32, %s19
        %p1025 = scmp.lt.s32.totalorder %s1024, 63
        %s1026 = scalar_select %p1025, %s1024, 63
        %s1027 = smul.addr %s1026, 4
        %s1028 = scalar_lea.vmem %s6, %s1027
      $region60: #{_lambda_.14} parent=51 // pred_fallthru
        _
    $region52: #{_lambda_.14} parent=5 // pred_fallthru
      _
  $region6: #{_lambda_.14} parent=0 // loop_footer
    %s17 = sadd.s32 1, %s13
  $region7: #{_lambda_.14} parent=0 // loop_footer_branch
    %12 = sbr.rel target = $region3
  $region8: #{_lambda_.14} parent=0 // loop_exit
    _

// kernel: _lambda_.17
$region0: #{_lambda_.17}
  #allocation0 [shape = 'u32[]', space=smem, size = 0x4, offset = 0x4, fixed_abs, tag = 'smem constant byte address 0x4 - core index']
  #allocation1 [shape = 'u32[144,128]{1,0:T(1,128)}', space=vmem, size = 0x12000, scoped, tag = 'internal scratch']
  %s0 = inlined_call_operand.vmem [shape: bf16[128,8], index: 0, kind: input, shape index: {}]
  %s1 = inlined_call_operand.vmem [shape: bf16[8,16], index: 1, kind: input, shape index: {}]
  %s2 = inlined_call_operand.vmem [shape: f32[128,16], index: 2, kind: output, shape index: {}]
  %s3 = sld [smem:[#allocation0]]
  $region41: #{_lambda_.17} parent=0
    _
  %s5 = ssub.s32 1, %s3
  %s6 = scalar_select 0, %s5, %s3
  loop: start=0, step=1, limit=4
  $region2: #{_lambda_.17} parent=0 // loop_pre_header
    _
  $region3: #{_lambda_.17} parent=0 // loop_header
    %s8 = sphi 0, %s12
    %p9 = scmp.ge.s32.totalorder %s8, 4
    %s18 = sphi 0, %s20
    %s21 = sphi 0, %s18
    %s22 = sphi 0, %s21
    %s38 = sphi 0, %s22
    %s42 = sphi 0, %s42
    %s44 = sphi 0, %s42
    %s45 = sphi 0, %s44
    %s59 = sphi 0, %s45
    %s65 = sphi 0, %s67
    %s68 = sphi 0, %s65
    %s69 = sphi 0, %s68
    %s85 = sphi 0, %s69
  $region4: #{_lambda_.17} parent=0 // loop_header_branch
    %11 = sbr.rel (%p9) target = $region8
  $region5: #{_lambda_.17} parent=0 // loop_body
    %s13 = ssub.s32 %s8, 1
    %s14 = ssub.s32 %s8, 2
    %s15 = sadd.s32 %s8, 1
    %s16 = ssub.s32 %s8, %s15
    %p17 = scmp.eq.s32.totalorder %s16, 0
    %s19 = sadd.s32 %s18, 1
    %s20 = scalar_select %p17, %s18, %s19
    %p23 = pneg %p17
    %p24 = scmp.eq.s32.totalorder %s8, 1
    %p25 = por %p23, %p24
    %p26 = scmp.ne.s32.totalorder %s18, %s21
    %p27 = scmp.eq.s32.totalorder %s8, 0
    %p28 = por %p26, %p27
    %p29 = scmp.ne.s32.totalorder %s18, %s21
    %p30 = scmp.eq.s32.totalorder %s13, 1
    %p31 = por %p29, %p30
    %p32 = scmp.ne.s32.totalorder %s21, %s22
    %p33 = scmp.eq.s32.totalorder %s13, 0
    %p34 = por %p32, %p33
    %p35 = scmp.ne.s32.totalorder %s21, %s22
    %p36 = scmp.eq.s32.totalorder %s14, 1
    %p37 = por %p35, %p36
    %p39 = scmp.ne.s32.totalorder %s22, %s38
    %p40 = scmp.eq.s32.totalorder %s14, 0
    %p41 = por %p39, %p40
    %s43 = sadd.s32 %s42, 1
    %p46 = scmp.eq.s32.totalorder %s8, 1
    %p47 = scmp.ne.s32.totalorder %s42, %s44
    %p48 = scmp.eq.s32.totalorder %s8, 0
    %p49 = por %p47, %p48
    %p50 = scmp.ne.s32.totalorder %s42, %s44
    %p51 = scmp.eq.s32.totalorder %s13, 1
    %p52 = por %p50, %p51
    %p53 = scmp.ne.s32.totalorder %s44, %s45
    %p54 = scmp.eq.s32.totalorder %s13, 0
    %p55 = por %p53, %p54
    %p56 = scmp.ne.s32.totalorder %s44, %s45
    %p57 = scmp.eq.s32.totalorder %s14, 1
    %p58 = por %p56, %p57
    %p60 = scmp.ne.s32.totalorder %s45, %s59
    %p61 = scmp.eq.s32.totalorder %s14, 0
    %p62 = por %p60, %p61
    %s63 = ssub.s32 %s8, %s15
    %p64 = scmp.eq.s32.totalorder %s63, 0
    %s66 = sadd.s32 %s65, 1
    %s67 = scalar_select %p64, %s65, %s66
    %p70 = pneg %p64
    %p71 = scmp.eq.s32.totalorder %s8, 1
    %p72 = por %p70, %p71
    %p73 = scmp.ne.s32.totalorder %s65, %s68
    %p74 = scmp.eq.s32.totalorder %s8, 0
    %p75 = por %p73, %p74
    %p76 = scmp.ne.s32.totalorder %s65, %s68
    %p77 = scmp.eq.s32.totalorder %s13, 1
    %p78 = por %p76, %p77
    %p79 = scmp.ne.s32.totalorder %s68, %s69
    %p80 = scmp.eq.s32.totalorder %s13, 0
    %p81 = por %p79, %p80
    %p82 = scmp.ne.s32.totalorder %s68, %s69
    %p83 = scmp.eq.s32.totalorder %s14, 1
    %p84 = por %p82, %p83
    %p86 = scmp.ne.s32.totalorder %s69, %s85
    %p87 = scmp.eq.s32.totalorder %s14, 0
    %p88 = por %p86, %p87
    %p89 = scmp.le.s32.totalorder 1, %s8
    %p90 = scmp.lt.s32.totalorder %s8, 3
    %p91 = pnand %p89, %p90
    %p92 = pneg %p91
    // Predicated region
    $region9: #{_lambda_.17} parent=5 // pred_check
      _
    $region10: #{_lambda_.17} parent=5 // pred_check_branch
      %94 = sbr.rel (%p91) target = $region12
    $region11: #{_lambda_.17} parent=5 // pred_region
      %s95 = ssub.s32 %s8, 1
      // Predicated region
      $region13: #{_lambda_.17} parent=11 // pred_check
        %p96 = pneg %p55
      $region14: #{_lambda_.17} parent=11 // pred_check_branch
        %98 = sbr.rel (%p96) target = $region16
      $region15: #{_lambda_.17} parent=11 // pred_region
        _
      $region16: #{_lambda_.17} parent=11 // pred_fallthru
        _
    $region12: #{_lambda_.17} parent=5 // pred_fallthru
      _
    %p99 = scmp.lt.s32.totalorder %s8, 2
    // Predicated region
    $region17: #{_lambda_.17} parent=5 // pred_check
      %p100 = pneg %p99
    $region18: #{_lambda_.17} parent=5 // pred_check_branch
      %102 = sbr.rel (%p100) target = $region20
    $region19: #{_lambda_.17} parent=5 // pred_region
      // Predicated region
      $region21: #{_lambda_.17} parent=19 // pred_check
        %p103 = pneg %p28
      $region22: #{_lambda_.17} parent=19 // pred_check_branch
        %105 = sbr.rel (%p103) target = $region24
      $region23: #{_lambda_.17} parent=19 // pred_region
        %s106 = smul.u32 8, %s8
        %p107 = scmp.lt.s32.totalorder %s106, 15
        %s108 = scalar_select %p107, %s106, 15
        %s109 = smul.addr %s108, 4
        %s110 = scalar_lea.vmem %s0, %s109
        %s111 = smul.u32 8, %s8
      $region24: #{_lambda_.17} parent=19 // pred_fallthru
        _
    $region20: #{_lambda_.17} parent=5 // pred_fallthru
      _
    %p112 = scmp.le.s32.totalorder 1, %s8
    %p113 = scmp.lt.s32.totalorder %s8, 3
    %p114 = pnand %p112, %p113
    %p115 = pneg %p114
    // Predicated region
    $region25: #{_lambda_.17} parent=5 // pred_check
      _
    $region26: #{_lambda_.17} parent=5 // pred_check_branch
      %117 = sbr.rel (%p114) target = $region28
    $region27: #{_lambda_.17} parent=5 // pred_region
      %s118 = ssub.s32 %s8, 1
      %s119 = smul.u32 8, %s13
      %p120 = scmp.lt.s32.totalorder %s119, 15
      %s121 = scalar_select %p120, %s119, 15
      %s122 = smul.addr %s121, 4
      %s123 = scalar_lea.vmem %s0, %s122
      %p124 = pneg %p34
      %p125 = pneg %p31
      %p126 = pneg %p55
      %p127 = pneg %p52
      %p128 = pneg %p81
      %p129 = pneg %p78
      %s130 = smul.u32 8, %s13
      %p131 = scmp.lt.s32.totalorder %s130, 15
      %s132 = scalar_select %p131, %s130, 15
      %s133 = smul.addr %s132, 8
      %s134 = scalar_lea.vmem %s2, %s133
      %s135 = smul.u32 8, %s13
      %p136 = scmp.lt.s32.totalorder %s135, 15
      %s137 = scalar_select %p136, %s135, 15
      %s138 = smul.addr %s137, 4
      %s139 = scalar_lea.vmem %s0, %s138
      %s140 = smul.u32 8, %s13
      %s141 = smul.u32 8, %s13
      %p142 = scmp.lt.s32.totalorder %s141, 15
      %s143 = scalar_select %p142, %s141, 15
      %s144 = smul.addr %s143, 8
      %s145 = scalar_lea.vmem %s2, %s144
      %s146 = smul.u32 8, %s13
      %v148 = vld [vmem:[%s139] sm:$0xf]
      %v149 = vld [vmem:[%s139 + $0x4] sm:$0xf]
      %v150 = vld [vmem:[%s139 + $0x8] sm:$0xf]
      %v151 = vld [vmem:[%s139 + $0xc] sm:$0xf]
      %v152 = vld [vmem:[%s139 + $0x10] sm:$0xf]
      %v153 = vld [vmem:[%s139 + $0x14] sm:$0xf]
      %v154 = vld [vmem:[%s139 + $0x18] sm:$0xf]
      %v155 = vld [vmem:[%s139 + $0x1c] sm:$0xf]
      %v156 = vld [vmem:[%s1] sm:$0xf]
      %v165 = vunpack.c.l.b16 %v148
      %v166 = vunpack.c.l.b16 %v149
      %v167 = vunpack.c.l.b16 %v150
      %v168 = vunpack.c.l.b16 %v151
      %v169 = vunpack.c.l.b16 %v152
      %v170 = vunpack.c.l.b16 %v153
      %v171 = vunpack.c.l.b16 %v154
      %v172 = vunpack.c.l.b16 %v155
      %v173 = vpack.c.b16 %v166, %v165
      %v174 = vpack.c.b16 %v168, %v167
      %v175 = vpack.c.b16 %v170, %v169
      %v176 = vpack.c.b16 %v172, %v171
      %vm177 = vcmask 64512
      %v179 = vsel %vm177, %v173, 0
      %v182 = vsel %vm177, %v174, 0
      %v185 = vsel %vm177, %v175, 0
      %v188 = vsel %vm177, %v176, 0
      %vm190 = vcmask 1043456
      %v192 = vsel %vm190, %v156, 0
      %194 = vmatprep.subr.bf16.mxu0 0
      %195 = vmatpush1.bf16.msra.mxu0 %v192
      %196 = vmatprep.subr.bf16.mxu0 0
      %197 = vmatpush1.bf16.msra.mxu0 0
      %198 = vmatprep.subr.bf16.mxu0 0
      %199 = vmatpush1.bf16.msra.mxu0 0
      %200 = vmatprep.subr.bf16.mxu0 0
      %201 = vmatpush1.bf16.msra.mxu0 0
      %202 = vmatprep.subr.bf16.mxu0 0
      %203 = vmatpush1.bf16.msra.mxu0 0
      %204 = vmatprep.subr.bf16.mxu0 0
      %205 = vmatpush1.bf16.msra.mxu0 0
      %206 = vmatprep.subr.bf16.mxu0 0
      %207 = vmatpush1.bf16.msra.mxu0 0
      %208 = vmatprep.subr.bf16.mxu0 0
      %209 = vmatpush1.bf16.msra.mxu0 0
      %210 = vmatprep.subr.bf16.mxu0 0
      %211 = vmatpush1.bf16.msra.mxu0 0
      %212 = vmatprep.subr.bf16.mxu0 0
      %213 = vmatpush1.bf16.msra.mxu0 0
      %214 = vmatprep.subr.bf16.mxu0 0
      %215 = vmatpush1.bf16.msra.mxu0 0
      %216 = vmatprep.subr.bf16.mxu0 0
      %217 = vmatpush1.bf16.msra.mxu0 0
      %218 = vmatprep.subr.bf16.mxu0 0
      %219 = vmatpush1.bf16.msra.mxu0 0
      %220 = vmatprep.subr.bf16.mxu0 0
      %221 = vmatpush1.bf16.msra.mxu0 0
      %222 = vmatprep.subr.bf16.mxu0 0
      %223 = vmatpush1.bf16.msra.mxu0 0
      %224 = vmatprep.subr.bf16.mxu0 0
      %225 = vmatpush1.bf16.msra.mxu0 0
      %226 = vmatprep.mubr.bf16.mxu0 0
      %227 = vmatmul.mubr.bf16.gmra.mrb[0].mxu0 %v179
      %v228 = vpop.f32.mrb[0].mxu0
      %v229 = vadd.f32 0.0, %v228
      %v230 = vpop.f32.mrb[0].mxu0
      %v231 = vpop.f32.mrb[0].mxu0
      %v232 = vadd.f32 0.0, %v231
      %v233 = vpop.f32.mrb[0].mxu0
      %234 = vmatprep.mubr.bf16.mxu0 0
      %235 = vmatmul.mubr.bf16.gmra.mrb[0].mxu0 %v182
      %v236 = vpop.f32.mrb[0].mxu0
      %v237 = vadd.f32 0.0, %v236
      %v238 = vpop.f32.mrb[0].mxu0
      %v239 = vpop.f32.mrb[0].mxu0
      %v240 = vadd.f32 0.0, %v239
      %v241 = vpop.f32.mrb[0].mxu0
      %242 = vmatprep.mubr.bf16.mxu0 0
      %243 = vmatmul.mubr.bf16.gmra.mrb[0].mxu0 %v185
      %v244 = vpop.f32.mrb[0].mxu0
      %v245 = vadd.f32 0.0, %v244
      %v246 = vpop.f32.mrb[0].mxu0
      %v247 = vpop.f32.mrb[0].mxu0
      %v248 = vadd.f32 0.0, %v247
      %v249 = vpop.f32.mrb[0].mxu0
      %250 = vmatprep.mubr.bf16.mxu0 0
      %251 = vmatmul.mubr.bf16.gmra.mrb[0].mxu0 %v188
      %v252 = vpop.f32.mrb[0].mxu0
      %v253 = vadd.f32 0.0, %v252
      %v254 = vpop.f32.mrb[0].mxu0
      %v255 = vpop.f32.mrb[0].mxu0
      %v256 = vadd.f32 0.0, %v255
      %v257 = vpop.f32.mrb[0].mxu0
      %258 = vdwg.mxu0
      %vm259 = vcmask 130048
      %260 = vst.msk [vmem:[%s145] sm:$0xff] %vm259, %v229
      %261 = vst.msk [vmem:[%s145 + $0x8] sm:$0xff] %vm259, %v232
      %262 = vst.msk [vmem:[%s145 + $0x10] sm:$0xff] %vm259, %v237
      %263 = vst.msk [vmem:[%s145 + $0x18] sm:$0xff] %vm259, %v240
      %264 = vst.msk [vmem:[%s145 + $0x20] sm:$0xff] %vm259, %v245
      %265 = vst.msk [vmem:[%s145 + $0x28] sm:$0xff] %vm259, %v248
      %266 = vst.msk [vmem:[%s145 + $0x30] sm:$0xff] %vm259, %v253
      %267 = vst.msk [vmem:[%s145 + $0x38] sm:$0xff] %vm259, %v256
      %s268 = smul.u32 8, %s13
      %p269 = scmp.lt.s32.totalorder %s268, 15
      %s270 = scalar_select %p269, %s268, 15
      %s271 = smul.addr %s270, 8
      %s272 = scalar_lea.vmem %s2, %s271
      // Predicated region
      $region29: #{_lambda_.17} parent=27 // pred_check
        %p273 = pneg %p78
      $region30: #{_lambda_.17} parent=27 // pred_check_branch
        %275 = sbr.rel (%p273) target = $region32
      $region31: #{_lambda_.17} parent=27 // pred_region
        %s276 = smul.u32 8, %s13
      $region32: #{_lambda_.17} parent=27 // pred_fallthru
        _
    $region28: #{_lambda_.17} parent=5 // pred_fallthru
      _
    %p277 = scmp.le.s32.totalorder 2, %s8
    // Predicated region
    $region33: #{_lambda_.17} parent=5 // pred_check
      %p278 = pneg %p277
    $region34: #{_lambda_.17} parent=5 // pred_check_branch
      %280 = sbr.rel (%p278) target = $region36
    $region35: #{_lambda_.17} parent=5 // pred_region
      %s281 = ssub.s32 %s8, 2
      // Predicated region
      $region37: #{_lambda_.17} parent=35 // pred_check
        %p282 = pneg %p84
      $region38: #{_lambda_.17} parent=35 // pred_check_branch
        %284 = sbr.rel (%p282) target = $region40
      $region39: #{_lambda_.17} parent=35 // pred_region
        %s285 = smul.u32 8, %s14
        %p286 = scmp.lt.s32.totalorder %s285, 15
        %s287 = scalar_select %p286, %s285, 15
        %s288 = smul.addr %s287, 8
        %s289 = scalar_lea.vmem %s2, %s288
      $region40: #{_lambda_.17} parent=35 // pred_fallthru
        _
    $region36: #{_lambda_.17} parent=5 // pred_fallthru
      _
  $region6: #{_lambda_.17} parent=0 // loop_footer
    %s12 = sadd.s32 1, %s8
  $region7: #{_lambda_.17} parent=0 // loop_footer_branch
    %7 = sbr.rel target = $region3
  $region8: #{_lambda_.17} parent=0 // loop_exit
    _

// kernel: _lambda_.18
$region0: #{_lambda_.18}
  #allocation0 [shape = 'u32[]', space=smem, size = 0x4, offset = 0x4, fixed_abs, tag = 'smem constant byte address 0x4 - core index']
  #allocation1 [shape = 'u32[144,128]{1,0:T(1,128)}', space=vmem, size = 0x12000, scoped, tag = 'internal scratch']
  %s0 = inlined_call_operand.vmem [shape: bf16[512,72], index: 0, kind: input, shape index: {}]
  %s1 = inlined_call_operand.vmem [shape: bf16[72,16], index: 1, kind: input, shape index: {}]
  %s2 = inlined_call_operand.vmem [shape: f32[1,16], index: 2, kind: input, shape index: {}]
  %s3 = inlined_call_operand.vmem [shape: f32[1,16], index: 3, kind: input, shape index: {}]
  %s4 = inlined_call_operand.vmem [shape: bf16[512,16], index: 4, kind: output, shape index: {}]
  %s5 = sld [smem:[#allocation0]]
  $region49: #{_lambda_.18} parent=0
    _
  %s7 = ssub.s32 1, %s5
  %s8 = scalar_select 0, %s7, %s5
  loop: start=0, step=1, limit=4
  $region2: #{_lambda_.18} parent=0 // loop_pre_header
    _
  $region3: #{_lambda_.18} parent=0 // loop_header
    %s10 = sphi 0, %s14
    %p11 = scmp.ge.s32.totalorder %s10, 4
    %s20 = sphi 0, %s22
    %s23 = sphi 0, %s20
    %s24 = sphi 0, %s23
    %s40 = sphi 0, %s24
    %s44 = sphi 0, %s44
    %s46 = sphi 0, %s44
    %s47 = sphi 0, %s46
    %s61 = sphi 0, %s47
    %s65 = sphi 0, %s65
    %s67 = sphi 0, %s65
    %s68 = sphi 0, %s67
    %s82 = sphi 0, %s68
    %s86 = sphi 0, %s86
    %s88 = sphi 0, %s86
    %s89 = sphi 0, %s88
    %s103 = sphi 0, %s89
    %s109 = sphi 0, %s111
    %s112 = sphi 0, %s109
    %s113 = sphi 0, %s112
    %s129 = sphi 0, %s113
  $region4: #{_lambda_.18} parent=0 // loop_header_branch
    %13 = sbr.rel (%p11) target = $region8
  $region5: #{_lambda_.18} parent=0 // loop_body
    %s15 = ssub.s32 %s10, 1
    %s16 = ssub.s32 %s10, 2
    %s17 = sadd.s32 %s10, 1
    %s18 = ssub.s32 %s10, %s17
    %p19 = scmp.eq.s32.totalorder %s18, 0
    %s21 = sadd.s32 %s20, 1
    %s22 = scalar_select %p19, %s20, %s21
    %p25 = pneg %p19
    %p26 = scmp.eq.s32.totalorder %s10, 1
    %p27 = por %p25, %p26
    %p28 = scmp.ne.s32.totalorder %s20, %s23
    %p29 = scmp.eq.s32.totalorder %s10, 0
    %p30 = por %p28, %p29
    %p31 = scmp.ne.s32.totalorder %s20, %s23
    %p32 = scmp.eq.s32.totalorder %s15, 1
    %p33 = por %p31, %p32
    %p34 = scmp.ne.s32.totalorder %s23, %s24
    %p35 = scmp.eq.s32.totalorder %s15, 0
    %p36 = por %p34, %p35
    %p37 = scmp.ne.s32.totalorder %s23, %s24
    %p38 = scmp.eq.s32.totalorder %s16, 1
    %p39 = por %p37, %p38
    %p41 = scmp.ne.s32.totalorder %s24, %s40
    %p42 = scmp.eq.s32.totalorder %s16, 0
    %p43 = por %p41, %p42
    %s45 = sadd.s32 %s44, 1
    %p48 = scmp.eq.s32.totalorder %s10, 1
    %p49 = scmp.ne.s32.totalorder %s44, %s46
    %p50 = scmp.eq.s32.totalorder %s10, 0
    %p51 = por %p49, %p50
    %p52 = scmp.ne.s32.totalorder %s44, %s46
    %p53 = scmp.eq.s32.totalorder %s15, 1
    %p54 = por %p52, %p53
    %p55 = scmp.ne.s32.totalorder %s46, %s47
    %p56 = scmp.eq.s32.totalorder %s15, 0
    %p57 = por %p55, %p56
    %p58 = scmp.ne.s32.totalorder %s46, %s47
    %p59 = scmp.eq.s32.totalorder %s16, 1
    %p60 = por %p58, %p59
    %p62 = scmp.ne.s32.totalorder %s47, %s61
    %p63 = scmp.eq.s32.totalorder %s16, 0
    %p64 = por %p62, %p63
    %s66 = sadd.s32 %s65, 1
    %p69 = scmp.eq.s32.totalorder %s10, 1
    %p70 = scmp.ne.s32.totalorder %s65, %s67
    %p71 = scmp.eq.s32.totalorder %s10, 0
    %p72 = por %p70, %p71
    %p73 = scmp.ne.s32.totalorder %s65, %s67
    %p74 = scmp.eq.s32.totalorder %s15, 1
    %p75 = por %p73, %p74
    %p76 = scmp.ne.s32.totalorder %s67, %s68
    %p77 = scmp.eq.s32.totalorder %s15, 0
    %p78 = por %p76, %p77
    %p79 = scmp.ne.s32.totalorder %s67, %s68
    %p80 = scmp.eq.s32.totalorder %s16, 1
    %p81 = por %p79, %p80
    %p83 = scmp.ne.s32.totalorder %s68, %s82
    %p84 = scmp.eq.s32.totalorder %s16, 0
    %p85 = por %p83, %p84
    %s87 = sadd.s32 %s86, 1
    %p90 = scmp.eq.s32.totalorder %s10, 1
    %p91 = scmp.ne.s32.totalorder %s86, %s88
    %p92 = scmp.eq.s32.totalorder %s10, 0
    %p93 = por %p91, %p92
    %p94 = scmp.ne.s32.totalorder %s86, %s88
    %p95 = scmp.eq.s32.totalorder %s15, 1
    %p96 = por %p94, %p95
    %p97 = scmp.ne.s32.totalorder %s88, %s89
    %p98 = scmp.eq.s32.totalorder %s15, 0
    %p99 = por %p97, %p98
    %p100 = scmp.ne.s32.totalorder %s88, %s89
    %p101 = scmp.eq.s32.totalorder %s16, 1
    %p102 = por %p100, %p101
    %p104 = scmp.ne.s32.totalorder %s89, %s103
    %p105 = scmp.eq.s32.totalorder %s16, 0
    %p106 = por %p104, %p105
    %s107 = ssub.s32 %s10, %s17
    %p108 = scmp.eq.s32.totalorder %s107, 0
    %s110 = sadd.s32 %s109, 1
    %s111 = scalar_select %p108, %s109, %s110
    %p114 = pneg %p108
    %p115 = scmp.eq.s32.totalorder %s10, 1
    %p116 = por %p114, %p115
    %p117 = scmp.ne.s32.totalorder %s109, %s112
    %p118 = scmp.eq.s32.totalorder %s10, 0
    %p119 = por %p117, %p118
    %p120 = scmp.ne.s32.totalorder %s109, %s112
    %p121 = scmp.eq.s32.totalorder %s15, 1
    %p122 = por %p120, %p121
    %p123 = scmp.ne.s32.totalorder %s112, %s113
    %p124 = scmp.eq.s32.totalorder %s15, 0
    %p125 = por %p123, %p124
    %p126 = scmp.ne.s32.totalorder %s112, %s113
    %p127 = scmp.eq.s32.totalorder %s16, 1
    %p128 = por %p126, %p127
    %p130 = scmp.ne.s32.totalorder %s113, %s129
    %p131 = scmp.eq.s32.totalorder %s16, 0
    %p132 = por %p130, %p131
    %p133 = scmp.le.s32.totalorder 1, %s10
    %p134 = scmp.lt.s32.totalorder %s10, 3
    %p135 = pnand %p133, %p134
    %p136 = pneg %p135
    // Predicated region
    $region9: #{_lambda_.18} parent=5 // pred_check
      _
    $region10: #{_lambda_.18} parent=5 // pred_check_branch
      %138 = sbr.rel (%p135) target = $region12
    $region11: #{_lambda_.18} parent=5 // pred_region
      %s139 = ssub.s32 %s10, 1
      // Predicated region
      $region13: #{_lambda_.18} parent=11 // pred_check
        %p140 = pneg %p57
      $region14: #{_lambda_.18} parent=11 // pred_check_branch
        %142 = sbr.rel (%p140) target = $region16
      $region15: #{_lambda_.18} parent=11 // pred_region
        _
      $region16: #{_lambda_.18} parent=11 // pred_fallthru
        _
      // Predicated region
      $region17: #{_lambda_.18} parent=11 // pred_check
        %p143 = pneg %p78
      $region18: #{_lambda_.18} parent=11 // pred_check_branch
        %145 = sbr.rel (%p143) target = $region20
      $region19: #{_lambda_.18} parent=11 // pred_region
        _
      $region20: #{_lambda_.18} parent=11 // pred_fallthru
        _
      // Predicated region
      $region21: #{_lambda_.18} parent=11 // pred_check
        %p146 = pneg %p99
      $region22: #{_lambda_.18} parent=11 // pred_check_branch
        %148 = sbr.rel (%p146) target = $region24
      $region23: #{_lambda_.18} parent=11 // pred_region
        _
      $region24: #{_lambda_.18} parent=11 // pred_fallthru
        _
    $region12: #{_lambda_.18} parent=5 // pred_fallthru
      _
    %p149 = scmp.lt.s32.totalorder %s10, 2
    // Predicated region
    $region25: #{_lambda_.18} parent=5 // pred_check
      %p150 = pneg %p149
    $region26: #{_lambda_.18} parent=5 // pred_check_branch
      %152 = sbr.rel (%p150) target = $region28
    $region27: #{_lambda_.18} parent=5 // pred_region
      // Predicated region
      $region29: #{_lambda_.18} parent=27 // pred_check
        %p153 = pneg %p30
      $region30: #{_lambda_.18} parent=27 // pred_check_branch
        %155 = sbr.rel (%p153) target = $region32
      $region31: #{_lambda_.18} parent=27 // pred_region
        %s156 = smul.u32 32, %s10
        %p157 = scmp.lt.s32.totalorder %s156, 63
        %s158 = scalar_select %p157, %s156, 63
        %s159 = smul.addr %s158, 4
        %s160 = scalar_lea.vmem %s0, %s159
        %s161 = smul.u32 32, %s10
      $region32: #{_lambda_.18} parent=27 // pred_fallthru
        _
    $region28: #{_lambda_.18} parent=5 // pred_fallthru
      _
    %p162 = scmp.le.s32.totalorder 1, %s10
    %p163 = scmp.lt.s32.totalorder %s10, 3
    %p164 = pnand %p162, %p163
    %p165 = pneg %p164
    // Predicated region
    $region33: #{_lambda_.18} parent=5 // pred_check
      _
    $region34: #{_lambda_.18} parent=5 // pred_check_branch
      %167 = sbr.rel (%p164) target = $region36
    $region35: #{_lambda_.18} parent=5 // pred_region
      %s168 = ssub.s32 %s10, 1
      %s169 = smul.u32 32, %s15
      %p170 = scmp.lt.s32.totalorder %s169, 63
      %s171 = scalar_select %p170, %s169, 63
      %s172 = smul.addr %s171, 4
      %s173 = scalar_lea.vmem %s0, %s172
      %p174 = pneg %p36
      %p175 = pneg %p33
      %p176 = pneg %p57
      %p177 = pneg %p54
      %p178 = pneg %p78
      %p179 = pneg %p75
      %p180 = pneg %p99
      %p181 = pneg %p96
      %p182 = pneg %p125
      %p183 = pneg %p122
      %s184 = smul.u32 32, %s15
      %p185 = scmp.lt.s32.totalorder %s184, 63
      %s186 = scalar_select %p185, %s184, 63
      %s187 = smul.addr %s186, 4
      %s188 = scalar_lea.vmem %s4, %s187
      %s189 = smul.u32 32, %s15
      %p190 = scmp.lt.s32.totalorder %s189, 63
      %s191 = scalar_select %p190, %s189, 63
      %s192 = smul.addr %s191, 4
      %s193 = scalar_lea.vmem %s0, %s192
      %s194 = smul.u32 32, %s15
      %s195 = smul.u32 32, %s15
      %p196 = scmp.lt.s32.totalorder %s195, 63
      %s197 = scalar_select %p196, %s195, 63
      %s198 = smul.addr %s197, 4
      %s199 = scalar_lea.vmem %s4, %s198
      %s200 = smul.u32 32, %s15
      %v202 = vld [vmem:[%s193] sm:$0xf]
      %v203 = vld [vmem:[%s193 + $0x4] sm:$0xf]
      %v204 = vld [vmem:[%s193 + $0x8] sm:$0xf]
      %v205 = vld [vmem:[%s193 + $0xc] sm:$0xf]
      %v206 = vld [vmem:[%s193 + $0x10] sm:$0xf]
      %v207 = vld [vmem:[%s193 + $0x14] sm:$0xf]
      %v208 = vld [vmem:[%s193 + $0x18] sm:$0xf]
      %v209 = vld [vmem:[%s193 + $0x1c] sm:$0xf]
      %v210 = vld [vmem:[%s193 + $0x20] sm:$0xf]
      %v211 = vld [vmem:[%s193 + $0x24] sm:$0xf]
      %v212 = vld [vmem:[%s193 + $0x28] sm:$0xf]
      %v213 = vld [vmem:[%s193 + $0x2c] sm:$0xf]
      %v214 = vld [vmem:[%s193 + $0x30] sm:$0xf]
      %v215 = vld [vmem:[%s193 + $0x34] sm:$0xf]
      %v216 = vld [vmem:[%s193 + $0x38] sm:$0xf]
      %v217 = vld [vmem:[%s193 + $0x3c] sm:$0xf]
      %v218 = vld [vmem:[%s193 + $0x40] sm:$0xf]
      %v219 = vld [vmem:[%s193 + $0x44] sm:$0xf]
      %v220 = vld [vmem:[%s193 + $0x48] sm:$0xf]
      %v221 = vld [vmem:[%s193 + $0x4c] sm:$0xf]
      %v222 = vld [vmem:[%s193 + $0x50] sm:$0xf]
      %v223 = vld [vmem:[%s193 + $0x54] sm:$0xf]
      %v224 = vld [vmem:[%s193 + $0x58] sm:$0xf]
      %v225 = vld [vmem:[%s193 + $0x5c] sm:$0xf]
      %v226 = vld [vmem:[%s193 + $0x60] sm:$0xf]
      %v227 = vld [vmem:[%s193 + $0x64] sm:$0xf]
      %v228 = vld [vmem:[%s193 + $0x68] sm:$0xf]
      %v229 = vld [vmem:[%s193 + $0x6c] sm:$0xf]
      %v230 = vld [vmem:[%s193 + $0x70] sm:$0xf]
      %v231 = vld [vmem:[%s193 + $0x74] sm:$0xf]
      %v232 = vld [vmem:[%s193 + $0x78] sm:$0xf]
      %v233 = vld [vmem:[%s193 + $0x7c] sm:$0xf]
      %v234 = vld [vmem:[%s1] sm:$0xf]
      %v235 = vld [vmem:[%s1 + $0x4] sm:$0xf]
      %v236 = vld [vmem:[%s1 + $0x8] sm:$0xf]
      %v237 = vld [vmem:[%s1 + $0xc] sm:$0xf]
      %v238 = vld [vmem:[%s1 + $0x10] sm:$0xf]
      %v239 = vld [vmem:[%s1 + $0x14] sm:$0xf]
      %v240 = vld [vmem:[%s1 + $0x18] sm:$0xf]
      %v241 = vld [vmem:[%s1 + $0x1c] sm:$0xf]
      %v242 = vld [vmem:[%s1 + $0x20] sm:$0xf]
      %v275 = vunpack.c.l.b16 %v202
      %v276 = vunpack.c.l.b16 %v203
      %v277 = vunpack.c.l.b16 %v204
      %v278 = vunpack.c.l.b16 %v205
      %v279 = vunpack.c.l.b16 %v206
      %v280 = vunpack.c.l.b16 %v207
      %v281 = vunpack.c.l.b16 %v208
      %v282 = vunpack.c.l.b16 %v209
      %v283 = vunpack.c.l.b16 %v210
      %v284 = vunpack.c.l.b16 %v211
      %v285 = vunpack.c.l.b16 %v212
      %v286 = vunpack.c.l.b16 %v213
      %v287 = vunpack.c.l.b16 %v214
      %v288 = vunpack.c.l.b16 %v215
      %v289 = vunpack.c.l.b16 %v216
      %v290 = vunpack.c.l.b16 %v217
      %v291 = vunpack.c.l.b16 %v218
      %v292 = vunpack.c.l.b16 %v219
      %v293 = vunpack.c.l.b16 %v220
      %v294 = vunpack.c.l.b16 %v221
      %v295 = vunpack.c.l.b16 %v222
      %v296 = vunpack.c.l.b16 %v223
      %v297 = vunpack.c.l.b16 %v224
      %v298 = vunpack.c.l.b16 %v225
      %v299 = vunpack.c.l.b16 %v226
      %v300 = vunpack.c.l.b16 %v227
      %v301 = vunpack.c.l.b16 %v228
      %v302 = vunpack.c.l.b16 %v229
      %v303 = vunpack.c.l.b16 %v230
      %v304 = vunpack.c.l.b16 %v231
      %v305 = vunpack.c.l.b16 %v232
      %v306 = vunpack.c.l.b16 %v233
      %v307 = vpack.c.b16 %v276, %v275
      %v308 = vpack.c.b16 %v278, %v277
      %v309 = vpack.c.b16 %v280, %v279
      %v310 = vpack.c.b16 %v282, %v281
      %v311 = vpack.c.b16 %v284, %v283
      %v312 = vpack.c.b16 %v286, %v285
      %v313 = vpack.c.b16 %v288, %v287
      %v314 = vpack.c.b16 %v290, %v289
      %v315 = vpack.c.b16 %v292, %v291
      %v316 = vpack.c.b16 %v294, %v293
      %v317 = vpack.c.b16 %v296, %v295
      %v318 = vpack.c.b16 %v298, %v297
      %v319 = vpack.c.b16 %v300, %v299
      %v320 = vpack.c.b16 %v302, %v301
      %v321 = vpack.c.b16 %v304, %v303
      %v322 = vpack.c.b16 %v306, %v305
      %v332 = vunpack.c.l.b16 %v234
      %v333 = vunpack.c.l.b16 %v235
      %v334 = vunpack.c.l.b16 %v236
      %v335 = vunpack.c.l.b16 %v237
      %v336 = vunpack.c.l.b16 %v238
      %v337 = vunpack.c.l.b16 %v239
      %v338 = vunpack.c.l.b16 %v240
      %v339 = vunpack.c.l.b16 %v241
      %v340 = vunpack.c.l.b16 %v242
      %v341 = vpack.c.b16 %v333, %v332
      %v342 = vpack.c.b16 %v335, %v334
      %v343 = vpack.c.b16 %v337, %v336
      %v344 = vpack.c.b16 %v339, %v338
      %v345 = vpack.c.b16 %v340, %v340
      %vm350 = vcmask 588800
      %v352 = vsel %vm350, %v307, 0
      %v355 = vsel %vm350, %v308, 0
      %v358 = vsel %vm350, %v309, 0
      %v361 = vsel %vm350, %v310, 0
      %v364 = vsel %vm350, %v311, 0
      %v367 = vsel %vm350, %v312, 0
      %v370 = vsel %vm350, %v313, 0
      %v373 = vsel %vm350, %v314, 0
      %v376 = vsel %vm350, %v315, 0
      %v379 = vsel %vm350, %v316, 0
      %v382 = vsel %vm350, %v317, 0
      %v385 = vsel %vm350, %v318, 0
      %v388 = vsel %vm350, %v319, 0
      %v391 = vsel %vm350, %v320, 0
      %v394 = vsel %vm350, %v321, 0
      %v397 = vsel %vm350, %v322, 0
      %vm399 = vcmask 1043456
      %v401 = vsel %vm399, %v345, 0
      %403 = vmatprep.subr.bf16.mxu0 0
      %404 = vmatpush1.bf16.msra.mxu0 %v341
      %405 = vmatprep.subr.bf16.mxu0 0
      %406 = vmatpush1.bf16.msra.mxu0 %v342
      %407 = vmatprep.subr.bf16.mxu0 0
      %408 = vmatpush1.bf16.msra.mxu0 %v343
      %409 = vmatprep.subr.bf16.mxu0 0
      %410 = vmatpush1.bf16.msra.mxu0 %v344
      %411 = vmatprep.subr.bf16.mxu0 0
      %412 = vmatpush1.bf16.msra.mxu0 %v401
      %413 = vmatprep.subr.bf16.mxu0 0
      %414 = vmatpush1.bf16.msra.mxu0 0
      %415 = vmatprep.subr.bf16.mxu0 0
      %416 = vmatpush1.bf16.msra.mxu0 0
      %417 = vmatprep.subr.bf16.mxu0 0
      %418 = vmatpush1.bf16.msra.mxu0 0
      %419 = vmatprep.subr.bf16.mxu0 0
      %420 = vmatpush1.bf16.msra.mxu0 0
      %421 = vmatprep.subr.bf16.mxu0 0
      %422 = vmatpush1.bf16.msra.mxu0 0
      %423 = vmatprep.subr.bf16.mxu0 0
      %424 = vmatpush1.bf16.msra.mxu0 0
      %425 = vmatprep.subr.bf16.mxu0 0
      %426 = vmatpush1.bf16.msra.mxu0 0
      %427 = vmatprep.subr.bf16.mxu0 0
      %428 = vmatpush1.bf16.msra.mxu0 0
      %429 = vmatprep.subr.bf16.mxu0 0
      %430 = vmatpush1.bf16.msra.mxu0 0
      %431 = vmatprep.subr.bf16.mxu0 0
      %432 = vmatpush1.bf16.msra.mxu0 0
      %433 = vmatprep.subr.bf16.mxu0 0
      %434 = vmatpush1.bf16.msra.mxu0 0
      %435 = vmatprep.mubr.bf16.mxu0 0
      %436 = vmatmul.mubr.bf16.gmra.mrb[0].mxu0 %v352
      %v437 = vpop.f32.mrb[0].mxu0
      %v438 = vadd.f32 0.0, %v437
      %v439 = vpop.f32.mrb[0].mxu0
      %v440 = vpop.f32.mrb[0].mxu0
      %v441 = vadd.f32 0.0, %v440
      %v442 = vpop.f32.mrb[0].mxu0
      %443 = vmatprep.mubr.bf16.mxu0 0
      %444 = vmatmul.mubr.bf16.gmra.mrb[0].mxu0 %v355
      %v445 = vpop.f32.mrb[0].mxu0
      %v446 = vadd.f32 0.0, %v445
      %v447 = vpop.f32.mrb[0].mxu0
      %v448 = vpop.f32.mrb[0].mxu0
      %v449 = vadd.f32 0.0, %v448
      %v450 = vpop.f32.mrb[0].mxu0
      %451 = vmatprep.mubr.bf16.mxu0 0
      %452 = vmatmul.mubr.bf16.gmra.mrb[0].mxu0 %v358
      %v453 = vpop.f32.mrb[0].mxu0
      %v454 = vadd.f32 0.0, %v453
      %v455 = vpop.f32.mrb[0].mxu0
      %v456 = vpop.f32.mrb[0].mxu0
      %v457 = vadd.f32 0.0, %v456
      %v458 = vpop.f32.mrb[0].mxu0
      %459 = vmatprep.mubr.bf16.mxu0 0
      %460 = vmatmul.mubr.bf16.gmra.mrb[0].mxu0 %v361
      %v461 = vpop.f32.mrb[0].mxu0
      %v462 = vadd.f32 0.0, %v461
      %v463 = vpop.f32.mrb[0].mxu0
      %v464 = vpop.f32.mrb[0].mxu0
      %v465 = vadd.f32 0.0, %v464
      %v466 = vpop.f32.mrb[0].mxu0
      %467 = vmatprep.mubr.bf16.mxu0 0
      %468 = vmatmul.mubr.bf16.gmra.mrb[0].mxu0 %v364
      %v469 = vpop.f32.mrb[0].mxu0
      %v470 = vadd.f32 0.0, %v469
      %v471 = vpop.f32.mrb[0].mxu0
      %v472 = vpop.f32.mrb[0].mxu0
      %v473 = vadd.f32 0.0, %v472
      %v474 = vpop.f32.mrb[0].mxu0
      %475 = vmatprep.mubr.bf16.mxu0 0
      %476 = vmatmul.mubr.bf16.gmra.mrb[0].mxu0 %v367
      %v477 = vpop.f32.mrb[0].mxu0
      %v478 = vadd.f32 0.0, %v477
      %v479 = vpop.f32.mrb[0].mxu0
      %v480 = vpop.f32.mrb[0].mxu0
      %v481 = vadd.f32 0.0, %v480
      %v482 = vpop.f32.mrb[0].mxu0
      %483 = vmatprep.mubr.bf16.mxu0 0
      %484 = vmatmul.mubr.bf16.gmra.mrb[0].mxu0 %v370
      %v485 = vpop.f32.mrb[0].mxu0
      %v486 = vadd.f32 0.0, %v485
      %v487 = vpop.f32.mrb[0].mxu0
      %v488 = vpop.f32.mrb[0].mxu0
      %v489 = vadd.f32 0.0, %v488
      %v490 = vpop.f32.mrb[0].mxu0
      %491 = vmatprep.mubr.bf16.mxu0 0
      %492 = vmatmul.mubr.bf16.gmra.mrb[0].mxu0 %v373
      %v493 = vpop.f32.mrb[0].mxu0
      %v494 = vadd.f32 0.0, %v493
      %v495 = vpop.f32.mrb[0].mxu0
      %v496 = vpop.f32.mrb[0].mxu0
      %v497 = vadd.f32 0.0, %v496
      %v498 = vpop.f32.mrb[0].mxu0
      %499 = vmatprep.mubr.bf16.mxu0 0
      %500 = vmatmul.mubr.bf16.gmra.mrb[0].mxu0 %v376
      %v501 = vpop.f32.mrb[0].mxu0
      %v502 = vadd.f32 0.0, %v501
      %v503 = vpop.f32.mrb[0].mxu0
      %v504 = vpop.f32.mrb[0].mxu0
      %v505 = vadd.f32 0.0, %v504
      %v506 = vpop.f32.mrb[0].mxu0
      %507 = vmatprep.mubr.bf16.mxu0 0
      %508 = vmatmul.mubr.bf16.gmra.mrb[0].mxu0 %v379
      %v509 = vpop.f32.mrb[0].mxu0
      %v510 = vadd.f32 0.0, %v509
      %v511 = vpop.f32.mrb[0].mxu0
      %v512 = vpop.f32.mrb[0].mxu0
      %v513 = vadd.f32 0.0, %v512
      %v514 = vpop.f32.mrb[0].mxu0
      %515 = vmatprep.mubr.bf16.mxu0 0
      %516 = vmatmul.mubr.bf16.gmra.mrb[0].mxu0 %v382
      %v517 = vpop.f32.mrb[0].mxu0
      %v518 = vadd.f32 0.0, %v517
      %v519 = vpop.f32.mrb[0].mxu0
      %v520 = vpop.f32.mrb[0].mxu0
      %v521 = vadd.f32 0.0, %v520
      %v522 = vpop.f32.mrb[0].mxu0
      %523 = vmatprep.mubr.bf16.mxu0 0
      %524 = vmatmul.mubr.bf16.gmra.mrb[0].mxu0 %v385
      %v525 = vpop.f32.mrb[0].mxu0
      %v526 = vadd.f32 0.0, %v525
      %v527 = vpop.f32.mrb[0].mxu0
      %v528 = vpop.f32.mrb[0].mxu0
      %v529 = vadd.f32 0.0, %v528
      %v530 = vpop.f32.mrb[0].mxu0
      %531 = vmatprep.mubr.bf16.mxu0 0
      %532 = vmatmul.mubr.bf16.gmra.mrb[0].mxu0 %v388
      %v533 = vpop.f32.mrb[0].mxu0
      %v534 = vadd.f32 0.0, %v533
      %v535 = vpop.f32.mrb[0].mxu0
      %v536 = vpop.f32.mrb[0].mxu0
      %v537 = vadd.f32 0.0, %v536
      %v538 = vpop.f32.mrb[0].mxu0
      %539 = vmatprep.mubr.bf16.mxu0 0
      %540 = vmatmul.mubr.bf16.gmra.mrb[0].mxu0 %v391
      %v541 = vpop.f32.mrb[0].mxu0
      %v542 = vadd.f32 0.0, %v541
      %v543 = vpop.f32.mrb[0].mxu0
      %v544 = vpop.f32.mrb[0].mxu0
      %v545 = vadd.f32 0.0, %v544
      %v546 = vpop.f32.mrb[0].mxu0
      %547 = vmatprep.mubr.bf16.mxu0 0
      %548 = vmatmul.mubr.bf16.gmra.mrb[0].mxu0 %v394
      %v549 = vpop.f32.mrb[0].mxu0
      %v550 = vadd.f32 0.0, %v549
      %v551 = vpop.f32.mrb[0].mxu0
      %v552 = vpop.f32.mrb[0].mxu0
      %v553 = vadd.f32 0.0, %v552
      %v554 = vpop.f32.mrb[0].mxu0
      %555 = vmatprep.mubr.bf16.mxu0 0
      %556 = vmatmul.mubr.bf16.gmra.mrb[0].mxu0 %v397
      %v557 = vpop.f32.mrb[0].mxu0
      %v558 = vadd.f32 0.0, %v557
      %v559 = vpop.f32.mrb[0].mxu0
      %v560 = vpop.f32.mrb[0].mxu0
      %v561 = vadd.f32 0.0, %v560
      %v562 = vpop.f32.mrb[0].mxu0
      %563 = vdwg.mxu0
      %v564 = vld [vmem:[%s2] sm:$0x1]
      %v566 = vlaneseq
      %v567 = vshrl.u32 %v566, 7
      %v568 = vsub.s32 0, %v567
      %v569 = vrot.slane %v564, %v568
      %v571 = vmul.f32 %v438, %v569
      %v572 = vmul.f32 %v441, %v569
      %v573 = vmul.f32 %v446, %v569
      %v574 = vmul.f32 %v449, %v569
      %v575 = vmul.f32 %v454, %v569
      %v576 = vmul.f32 %v457, %v569
      %v577 = vmul.f32 %v462, %v569
      %v578 = vmul.f32 %v465, %v569
      %v579 = vmul.f32 %v470, %v569
      %v580 = vmul.f32 %v473, %v569
      %v581 = vmul.f32 %v478, %v569
      %v582 = vmul.f32 %v481, %v569
      %v583 = vmul.f32 %v486, %v569
      %v584 = vmul.f32 %v489, %v569
      %v585 = vmul.f32 %v494, %v569
      %v586 = vmul.f32 %v497, %v569
      %v587 = vmul.f32 %v502, %v569
      %v588 = vmul.f32 %v505, %v569
      %v589 = vmul.f32 %v510, %v569
      %v590 = vmul.f32 %v513, %v569
      %v591 = vmul.f32 %v518, %v569
      %v592 = vmul.f32 %v521, %v569
      %v593 = vmul.f32 %v526, %v569
      %v594 = vmul.f32 %v529, %v569
      %v595 = vmul.f32 %v534, %v569
      %v596 = vmul.f32 %v537, %v569
      %v597 = vmul.f32 %v542, %v569
      %v598 = vmul.f32 %v545, %v569
      %v599 = vmul.f32 %v550, %v569
      %v600 = vmul.f32 %v553, %v569
      %v601 = vmul.f32 %v558, %v569
      %v602 = vmul.f32 %v561, %v569
      %v603 = vld [vmem:[%s3] sm:$0x1]
      %v605 = vlaneseq
      %v606 = vshrl.u32 %v605, 7
      %v607 = vsub.s32 0, %v606
      %v608 = vrot.slane %v603, %v607
      %v610 = vadd.f32 %v571, %v608
      %v611 = vadd.f32 %v572, %v608
      %v612 = vadd.f32 %v573, %v608
      %v613 = vadd.f32 %v574, %v608
      %v614 = vadd.f32 %v575, %v608
      %v615 = vadd.f32 %v576, %v608
      %v616 = vadd.f32 %v577, %v608
      %v617 = vadd.f32 %v578, %v608
      %v618 = vadd.f32 %v579, %v608
      %v619 = vadd.f32 %v580, %v608
      %v620 = vadd.f32 %v581, %v608
      %v621 = vadd.f32 %v582, %v608
      %v622 = vadd.f32 %v583, %v608
      %v623 = vadd.f32 %v584, %v608
      %v624 = vadd.f32 %v585, %v608
      %v625 = vadd.f32 %v586, %v608
      %v626 = vadd.f32 %v587, %v608
      %v627 = vadd.f32 %v588, %v608
      %v628 = vadd.f32 %v589, %v608
      %v629 = vadd.f32 %v590, %v608
      %v630 = vadd.f32 %v591, %v608
      %v631 = vadd.f32 %v592, %v608
      %v632 = vadd.f32 %v593, %v608
      %v633 = vadd.f32 %v594, %v608
      %v634 = vadd.f32 %v595, %v608
      %v635 = vadd.f32 %v596, %v608
      %v636 = vadd.f32 %v597, %v608
      %v637 = vadd.f32 %v598, %v608
      %v638 = vadd.f32 %v599, %v608
      %v639 = vadd.f32 %v600, %v608
      %v640 = vadd.f32 %v601, %v608
      %v641 = vadd.f32 %v602, %v608
      %v642 = vmax.f32 %v610, 0.0
      %v643 = vmax.f32 %v611, 0.0
      %v644 = vmax.f32 %v612, 0.0
      %v645 = vmax.f32 %v613, 0.0
      %v646 = vmax.f32 %v614, 0.0
      %v647 = vmax.f32 %v615, 0.0
      %v648 = vmax.f32 %v616, 0.0
      %v649 = vmax.f32 %v617, 0.0
      %v650 = vmax.f32 %v618, 0.0
      %v651 = vmax.f32 %v619, 0.0
      %v652 = vmax.f32 %v620, 0.0
      %v653 = vmax.f32 %v621, 0.0
      %v654 = vmax.f32 %v622, 0.0
      %v655 = vmax.f32 %v623, 0.0
      %v656 = vmax.f32 %v624, 0.0
      %v657 = vmax.f32 %v625, 0.0
      %v658 = vmax.f32 %v626, 0.0
      %v659 = vmax.f32 %v627, 0.0
      %v660 = vmax.f32 %v628, 0.0
      %v661 = vmax.f32 %v629, 0.0
      %v662 = vmax.f32 %v630, 0.0
      %v663 = vmax.f32 %v631, 0.0
      %v664 = vmax.f32 %v632, 0.0
      %v665 = vmax.f32 %v633, 0.0
      %v666 = vmax.f32 %v634, 0.0
      %v667 = vmax.f32 %v635, 0.0
      %v668 = vmax.f32 %v636, 0.0
      %v669 = vmax.f32 %v637, 0.0
      %v670 = vmax.f32 %v638, 0.0
      %v671 = vmax.f32 %v639, 0.0
      %v672 = vmax.f32 %v640, 0.0
      %v673 = vmax.f32 %v641, 0.0
      %v674 = vpack.c.bf16 %v643, %v642
      %v675 = vpack.c.bf16 %v645, %v644
      %v676 = vpack.c.bf16 %v647, %v646
      %v677 = vpack.c.bf16 %v649, %v648
      %v678 = vpack.c.bf16 %v651, %v650
      %v679 = vpack.c.bf16 %v653, %v652
      %v680 = vpack.c.bf16 %v655, %v654
      %v681 = vpack.c.bf16 %v657, %v656
      %v682 = vpack.c.bf16 %v659, %v658
      %v683 = vpack.c.bf16 %v661, %v660
      %v684 = vpack.c.bf16 %v663, %v662
      %v685 = vpack.c.bf16 %v665, %v664
      %v686 = vpack.c.bf16 %v667, %v666
      %v687 = vpack.c.bf16 %v669, %v668
      %v688 = vpack.c.bf16 %v671, %v670
      %v689 = vpack.c.bf16 %v673, %v672
      %v706 = vunpack.c.l.b16 %v674
      %v707 = vunpack.c.h.b16 %v674
      %v708 = vunpack.c.l.b16 %v675
      %v709 = vunpack.c.h.b16 %v675
      %v710 = vunpack.c.l.b16 %v676
      %v711 = vunpack.c.h.b16 %v676
      %v712 = vunpack.c.l.b16 %v677
      %v713 = vunpack.c.h.b16 %v677
      %v714 = vunpack.c.l.b16 %v678
      %v715 = vunpack.c.h.b16 %v678
      %v716 = vunpack.c.l.b16 %v679
      %v717 = vunpack.c.h.b16 %v679
      %v718 = vunpack.c.l.b16 %v680
      %v719 = vunpack.c.h.b16 %v680
      %v720 = vunpack.c.l.b16 %v681
      %v721 = vunpack.c.h.b16 %v681
      %v722 = vunpack.c.l.b16 %v682
      %v723 = vunpack.c.h.b16 %v682
      %v724 = vunpack.c.l.b16 %v683
      %v725 = vunpack.c.h.b16 %v683
      %v726 = vunpack.c.l.b16 %v684
      %v727 = vunpack.c.h.b16 %v684
      %v728 = vunpack.c.l.b16 %v685
      %v729 = vunpack.c.h.b16 %v685
      %v730 = vunpack.c.l.b16 %v686
      %v731 = vunpack.c.h.b16 %v686
      %v732 = vunpack.c.l.b16 %v687
      %v733 = vunpack.c.h.b16 %v687
      %v734 = vunpack.c.l.b16 %v688
      %v735 = vunpack.c.h.b16 %v688
      %v736 = vunpack.c.l.b16 %v689
      %v737 = vunpack.c.h.b16 %v689
      %v738 = vpack.c.b16 %v706, %v706
      %v739 = vpack.c.b16 %v707, %v707
      %v740 = vpack.c.b16 %v708, %v708
      %v741 = vpack.c.b16 %v709, %v709
      %v742 = vpack.c.b16 %v710, %v710
      %v743 = vpack.c.b16 %v711, %v711
      %v744 = vpack.c.b16 %v712, %v712
      %v745 = vpack.c.b16 %v713, %v713
      %v746 = vpack.c.b16 %v714, %v714
      %v747 = vpack.c.b16 %v715, %v715
      %v748 = vpack.c.b16 %v716, %v716
      %v749 = vpack.c.b16 %v717, %v717
      %v750 = vpack.c.b16 %v718, %v718
      %v751 = vpack.c.b16 %v719, %v719
      %v752 = vpack.c.b16 %v720, %v720
      %v753 = vpack.c.b16 %v721, %v721
      %v754 = vpack.c.b16 %v722, %v722
      %v755 = vpack.c.b16 %v723, %v723
      %v756 = vpack.c.b16 %v724, %v724
      %v757 = vpack.c.b16 %v725, %v725
      %v758 = vpack.c.b16 %v726, %v726
      %v759 = vpack.c.b16 %v727, %v727
      %v760 = vpack.c.b16 %v728, %v728
      %v761 = vpack.c.b16 %v729, %v729
      %v762 = vpack.c.b16 %v730, %v730
      %v763 = vpack.c.b16 %v731, %v731
      %v764 = vpack.c.b16 %v732, %v732
      %v765 = vpack.c.b16 %v733, %v733
      %v766 = vpack.c.b16 %v734, %v734
      %v767 = vpack.c.b16 %v735, %v735
      %v768 = vpack.c.b16 %v736, %v736
      %v769 = vpack.c.b16 %v737, %v737
      %vm802 = vcmask 125952
      %803 = vst.msk [vmem:[%s199] sm:$0xf] %vm802, %v738
      %804 = vst.msk [vmem:[%s199 + $0x4] sm:$0xf] %vm802, %v739
      %805 = vst.msk [vmem:[%s199 + $0x8] sm:$0xf] %vm802, %v740
      %806 = vst.msk [vmem:[%s199 + $0xc] sm:$0xf] %vm802, %v741
      %807 = vst.msk [vmem:[%s199 + $0x10] sm:$0xf] %vm802, %v742
      %808 = vst.msk [vmem:[%s199 + $0x14] sm:$0xf] %vm802, %v743
      %809 = vst.msk [vmem:[%s199 + $0x18] sm:$0xf] %vm802, %v744
      %810 = vst.msk [vmem:[%s199 + $0x1c] sm:$0xf] %vm802, %v745
      %811 = vst.msk [vmem:[%s199 + $0x20] sm:$0xf] %vm802, %v746
      %812 = vst.msk [vmem:[%s199 + $0x24] sm:$0xf] %vm802, %v747
      %813 = vst.msk [vmem:[%s199 + $0x28] sm:$0xf] %vm802, %v748
      %814 = vst.msk [vmem:[%s199 + $0x2c] sm:$0xf] %vm802, %v749
      %815 = vst.msk [vmem:[%s199 + $0x30] sm:$0xf] %vm802, %v750
      %816 = vst.msk [vmem:[%s199 + $0x34] sm:$0xf] %vm802, %v751
      %817 = vst.msk [vmem:[%s199 + $0x38] sm:$0xf] %vm802, %v752
      %818 = vst.msk [vmem:[%s199 + $0x3c] sm:$0xf] %vm802, %v753
      %819 = vst.msk [vmem:[%s199 + $0x40] sm:$0xf] %vm802, %v754
      %820 = vst.msk [vmem:[%s199 + $0x44] sm:$0xf] %vm802, %v755
      %821 = vst.msk [vmem:[%s199 + $0x48] sm:$0xf] %vm802, %v756
      %822 = vst.msk [vmem:[%s199 + $0x4c] sm:$0xf] %vm802, %v757
      %823 = vst.msk [vmem:[%s199 + $0x50] sm:$0xf] %vm802, %v758
      %824 = vst.msk [vmem:[%s199 + $0x54] sm:$0xf] %vm802, %v759
      %825 = vst.msk [vmem:[%s199 + $0x58] sm:$0xf] %vm802, %v760
      %826 = vst.msk [vmem:[%s199 + $0x5c] sm:$0xf] %vm802, %v761
      %827 = vst.msk [vmem:[%s199 + $0x60] sm:$0xf] %vm802, %v762
      %828 = vst.msk [vmem:[%s199 + $0x64] sm:$0xf] %vm802, %v763
      %829 = vst.msk [vmem:[%s199 + $0x68] sm:$0xf] %vm802, %v764
      %830 = vst.msk [vmem:[%s199 + $0x6c] sm:$0xf] %vm802, %v765
      %831 = vst.msk [vmem:[%s199 + $0x70] sm:$0xf] %vm802, %v766
      %832 = vst.msk [vmem:[%s199 + $0x74] sm:$0xf] %vm802, %v767
      %833 = vst.msk [vmem:[%s199 + $0x78] sm:$0xf] %vm802, %v768
      %834 = vst.msk [vmem:[%s199 + $0x7c] sm:$0xf] %vm802, %v769
      %s835 = smul.u32 32, %s15
      %p836 = scmp.lt.s32.totalorder %s835, 63
      %s837 = scalar_select %p836, %s835, 63
      %s838 = smul.addr %s837, 4
      %s839 = scalar_lea.vmem %s4, %s838
      // Predicated region
      $region37: #{_lambda_.18} parent=35 // pred_check
        %p840 = pneg %p122
      $region38: #{_lambda_.18} parent=35 // pred_check_branch
        %842 = sbr.rel (%p840) target = $region40
      $region39: #{_lambda_.18} parent=35 // pred_region
        %s843 = smul.u32 32, %s15
      $region40: #{_lambda_.18} parent=35 // pred_fallthru
        _
    $region36: #{_lambda_.18} parent=5 // pred_fallthru
      _
    %p844 = scmp.le.s32.totalorder 2, %s10
    // Predicated region
    $region41: #{_lambda_.18} parent=5 // pred_check
      %p845 = pneg %p844
    $region42: #{_lambda_.18} parent=5 // pred_check_branch
      %847 = sbr.rel (%p845) target = $region44
    $region43: #{_lambda_.18} parent=5 // pred_region
      %s848 = ssub.s32 %s10, 2
      // Predicated region
      $region45: #{_lambda_.18} parent=43 // pred_check
        %p849 = pneg %p128
      $region46: #{_lambda_.18} parent=43 // pred_check_branch
        %851 = sbr.rel (%p849) target = $region48
      $region47: #{_lambda_.18} parent=43 // pred_region
        %s852 = smul.u32 32, %s16
        %p853 = scmp.lt.s32.totalorder %s852, 63
        %s854 = scalar_select %p853, %s852, 63
        %s855 = smul.addr %s854, 4
        %s856 = scalar_lea.vmem %s4, %s855
      $region48: #{_lambda_.18} parent=43 // pred_fallthru
        _
    $region44: #{_lambda_.18} parent=5 // pred_fallthru
      _
  $region6: #{_lambda_.18} parent=0 // loop_footer
    %s14 = sadd.s32 1, %s10
  $region7: #{_lambda_.18} parent=0 // loop_footer_branch
    %9 = sbr.rel target = $region3
  $region8: #{_lambda_.18} parent=0 // loop_exit
    _

// kernel: _lambda_.19
$region0: #{_lambda_.19}
  #allocation0 [shape = 'u32[]', space=smem, size = 0x4, offset = 0x4, fixed_abs, tag = 'smem constant byte address 0x4 - core index']
  #allocation1 [shape = 'u32[144,128]{1,0:T(1,128)}', space=vmem, size = 0x12000, scoped, tag = 'internal scratch']
  %s0 = inlined_call_operand.vmem [shape: bf16[128,144], index: 0, kind: input, shape index: {}]
  %s1 = inlined_call_operand.vmem [shape: bf16[144,16], index: 1, kind: input, shape index: {}]
  %s2 = inlined_call_operand.vmem [shape: f32[128,16], index: 2, kind: input, shape index: {}]
  %s3 = inlined_call_operand.vmem [shape: f32[1,16], index: 3, kind: input, shape index: {}]
  %s4 = inlined_call_operand.vmem [shape: f32[1,16], index: 4, kind: input, shape index: {}]
  %s5 = inlined_call_operand.vmem [shape: f32[128,16], index: 5, kind: output, shape index: {0}]
  %s6 = inlined_call_operand.vmem [shape: bf16[128,16], index: 6, kind: output, shape index: {1}]
  %7 = xla_tuple %s5, %s6
  %s8 = sld [smem:[#allocation0]]
  $region61: #{_lambda_.19} parent=0
    _
  %s10 = ssub.s32 1, %s8
  %s11 = scalar_select 0, %s10, %s8
  loop: start=0, step=1, limit=4
  $region2: #{_lambda_.19} parent=0 // loop_pre_header
    _
  $region3: #{_lambda_.19} parent=0 // loop_header
    %s13 = sphi 0, %s17
    %p14 = scmp.ge.s32.totalorder %s13, 4
    %s23 = sphi 0, %s25
    %s26 = sphi 0, %s23
    %s27 = sphi 0, %s26
    %s43 = sphi 0, %s27
    %s47 = sphi 0, %s47
    %s49 = sphi 0, %s47
    %s50 = sphi 0, %s49
    %s64 = sphi 0, %s50
    %s70 = sphi 0, %s72
    %s73 = sphi 0, %s70
    %s74 = sphi 0, %s73
    %s90 = sphi 0, %s74
    %s94 = sphi 0, %s94
    %s96 = sphi 0, %s94
    %s97 = sphi 0, %s96
    %s111 = sphi 0, %s97
    %s115 = sphi 0, %s115
    %s117 = sphi 0, %s115
    %s118 = sphi 0, %s117
    %s132 = sphi 0, %s118
    %s138 = sphi 0, %s140
    %s141 = sphi 0, %s138
    %s142 = sphi 0, %s141
    %s158 = sphi 0, %s142
    %s164 = sphi 0, %s166
    %s167 = sphi 0, %s164
    %s168 = sphi 0, %s167
    %s184 = sphi 0, %s168
  $region4: #{_lambda_.19} parent=0 // loop_header_branch
    %16 = sbr.rel (%p14) target = $region8
  $region5: #{_lambda_.19} parent=0 // loop_body
    %s18 = ssub.s32 %s13, 1
    %s19 = ssub.s32 %s13, 2
    %s20 = sadd.s32 %s13, 1
    %s21 = ssub.s32 %s13, %s20
    %p22 = scmp.eq.s32.totalorder %s21, 0
    %s24 = sadd.s32 %s23, 1
    %s25 = scalar_select %p22, %s23, %s24
    %p28 = pneg %p22
    %p29 = scmp.eq.s32.totalorder %s13, 1
    %p30 = por %p28, %p29
    %p31 = scmp.ne.s32.totalorder %s23, %s26
    %p32 = scmp.eq.s32.totalorder %s13, 0
    %p33 = por %p31, %p32
    %p34 = scmp.ne.s32.totalorder %s23, %s26
    %p35 = scmp.eq.s32.totalorder %s18, 1
    %p36 = por %p34, %p35
    %p37 = scmp.ne.s32.totalorder %s26, %s27
    %p38 = scmp.eq.s32.totalorder %s18, 0
    %p39 = por %p37, %p38
    %p40 = scmp.ne.s32.totalorder %s26, %s27
    %p41 = scmp.eq.s32.totalorder %s19, 1
    %p42 = por %p40, %p41
    %p44 = scmp.ne.s32.totalorder %s27, %s43
    %p45 = scmp.eq.s32.totalorder %s19, 0
    %p46 = por %p44, %p45
    %s48 = sadd.s32 %s47, 1
    %p51 = scmp.eq.s32.totalorder %s13, 1
    %p52 = scmp.ne.s32.totalorder %s47, %s49
    %p53 = scmp.eq.s32.totalorder %s13, 0
    %p54 = por %p52, %p53
    %p55 = scmp.ne.s32.totalorder %s47, %s49
    %p56 = scmp.eq.s32.totalorder %s18, 1
    %p57 = por %p55, %p56
    %p58 = scmp.ne.s32.totalorder %s49, %s50
    %p59 = scmp.eq.s32.totalorder %s18, 0
    %p60 = por %p58, %p59
    %p61 = scmp.ne.s32.totalorder %s49, %s50
    %p62 = scmp.eq.s32.totalorder %s19, 1
    %p63 = por %p61, %p62
    %p65 = scmp.ne.s32.totalorder %s50, %s64
    %p66 = scmp.eq.s32.totalorder %s19, 0
    %p67 = por %p65, %p66
    %s68 = ssub.s32 %s13, %s20
    %p69 = scmp.eq.s32.totalorder %s68, 0
    %s71 = sadd.s32 %s70, 1
    %s72 = scalar_select %p69, %s70, %s71
    %p75 = pneg %p69
    %p76 = scmp.eq.s32.totalorder %s13, 1
    %p77 = por %p75, %p76
    %p78 = scmp.ne.s32.totalorder %s70, %s73
    %p79 = scmp.eq.s32.totalorder %s13, 0
    %p80 = por %p78, %p79
    %p81 = scmp.ne.s32.totalorder %s70, %s73
    %p82 = scmp.eq.s32.totalorder %s18, 1
    %p83 = por %p81, %p82
    %p84 = scmp.ne.s32.totalorder %s73, %s74
    %p85 = scmp.eq.s32.totalorder %s18, 0
    %p86 = por %p84, %p85
    %p87 = scmp.ne.s32.totalorder %s73, %s74
    %p88 = scmp.eq.s32.totalorder %s19, 1
    %p89 = por %p87, %p88
    %p91 = scmp.ne.s32.totalorder %s74, %s90
    %p92 = scmp.eq.s32.totalorder %s19, 0
    %p93 = por %p91, %p92
    %s95 = sadd.s32 %s94, 1
    %p98 = scmp.eq.s32.totalorder %s13, 1
    %p99 = scmp.ne.s32.totalorder %s94, %s96
    %p100 = scmp.eq.s32.totalorder %s13, 0
    %p101 = por %p99, %p100
    %p102 = scmp.ne.s32.totalorder %s94, %s96
    %p103 = scmp.eq.s32.totalorder %s18, 1
    %p104 = por %p102, %p103
    %p105 = scmp.ne.s32.totalorder %s96, %s97
    %p106 = scmp.eq.s32.totalorder %s18, 0
    %p107 = por %p105, %p106
    %p108 = scmp.ne.s32.totalorder %s96, %s97
    %p109 = scmp.eq.s32.totalorder %s19, 1
    %p110 = por %p108, %p109
    %p112 = scmp.ne.s32.totalorder %s97, %s111
    %p113 = scmp.eq.s32.totalorder %s19, 0
    %p114 = por %p112, %p113
    %s116 = sadd.s32 %s115, 1
    %p119 = scmp.eq.s32.totalorder %s13, 1
    %p120 = scmp.ne.s32.totalorder %s115, %s117
    %p121 = scmp.eq.s32.totalorder %s13, 0
    %p122 = por %p120, %p121
    %p123 = scmp.ne.s32.totalorder %s115, %s117
    %p124 = scmp.eq.s32.totalorder %s18, 1
    %p125 = por %p123, %p124
    %p126 = scmp.ne.s32.totalorder %s117, %s118
    %p127 = scmp.eq.s32.totalorder %s18, 0
    %p128 = por %p126, %p127
    %p129 = scmp.ne.s32.totalorder %s117, %s118
    %p130 = scmp.eq.s32.totalorder %s19, 1
    %p131 = por %p129, %p130
    %p133 = scmp.ne.s32.totalorder %s118, %s132
    %p134 = scmp.eq.s32.totalorder %s19, 0
    %p135 = por %p133, %p134
    %s136 = ssub.s32 %s13, %s20
    %p137 = scmp.eq.s32.totalorder %s136, 0
    %s139 = sadd.s32 %s138, 1
    %s140 = scalar_select %p137, %s138, %s139
    %p143 = pneg %p137
    %p144 = scmp.eq.s32.totalorder %s13, 1
    %p145 = por %p143, %p144
    %p146 = scmp.ne.s32.totalorder %s138, %s141
    %p147 = scmp.eq.s32.totalorder %s13, 0
    %p148 = por %p146, %p147
    %p149 = scmp.ne.s32.totalorder %s138, %s141
    %p150 = scmp.eq.s32.totalorder %s18, 1
    %p151 = por %p149, %p150
    %p152 = scmp.ne.s32.totalorder %s141, %s142
    %p153 = scmp.eq.s32.totalorder %s18, 0
    %p154 = por %p152, %p153
    %p155 = scmp.ne.s32.totalorder %s141, %s142
    %p156 = scmp.eq.s32.totalorder %s19, 1
    %p157 = por %p155, %p156
    %p159 = scmp.ne.s32.totalorder %s142, %s158
    %p160 = scmp.eq.s32.totalorder %s19, 0
    %p161 = por %p159, %p160
    %s162 = ssub.s32 %s13, %s20
    %p163 = scmp.eq.s32.totalorder %s162, 0
    %s165 = sadd.s32 %s164, 1
    %s166 = scalar_select %p163, %s164, %s165
    %p169 = pneg %p163
    %p170 = scmp.eq.s32.totalorder %s13, 1
    %p171 = por %p169, %p170
    %p172 = scmp.ne.s32.totalorder %s164, %s167
    %p173 = scmp.eq.s32.totalorder %s13, 0
    %p174 = por %p172, %p173
    %p175 = scmp.ne.s32.totalorder %s164, %s167
    %p176 = scmp.eq.s32.totalorder %s18, 1
    %p177 = por %p175, %p176
    %p178 = scmp.ne.s32.totalorder %s167, %s168
    %p179 = scmp.eq.s32.totalorder %s18, 0
    %p180 = por %p178, %p179
    %p181 = scmp.ne.s32.totalorder %s167, %s168
    %p182 = scmp.eq.s32.totalorder %s19, 1
    %p183 = por %p181, %p182
    %p185 = scmp.ne.s32.totalorder %s168, %s184
    %p186 = scmp.eq.s32.totalorder %s19, 0
    %p187 = por %p185, %p186
    %p188 = scmp.le.s32.totalorder 1, %s13
    %p189 = scmp.lt.s32.totalorder %s13, 3
    %p190 = pnand %p188, %p189
    %p191 = pneg %p190
    // Predicated region
    $region9: #{_lambda_.19} parent=5 // pred_check
      _
    $region10: #{_lambda_.19} parent=5 // pred_check_branch
      %193 = sbr.rel (%p190) target = $region12
    $region11: #{_lambda_.19} parent=5 // pred_region
      %s194 = ssub.s32 %s13, 1
      // Predicated region
      $region13: #{_lambda_.19} parent=11 // pred_check
        %p195 = pneg %p60
      $region14: #{_lambda_.19} parent=11 // pred_check_branch
        %197 = sbr.rel (%p195) target = $region16
      $region15: #{_lambda_.19} parent=11 // pred_region
        _
      $region16: #{_lambda_.19} parent=11 // pred_fallthru
        _
      // Predicated region
      $region17: #{_lambda_.19} parent=11 // pred_check
        %p198 = pneg %p107
      $region18: #{_lambda_.19} parent=11 // pred_check_branch
        %200 = sbr.rel (%p198) target = $region20
      $region19: #{_lambda_.19} parent=11 // pred_region
        _
      $region20: #{_lambda_.19} parent=11 // pred_fallthru
        _
      // Predicated region
      $region21: #{_lambda_.19} parent=11 // pred_check
        %p201 = pneg %p128
      $region22: #{_lambda_.19} parent=11 // pred_check_branch
        %203 = sbr.rel (%p201) target = $region24
      $region23: #{_lambda_.19} parent=11 // pred_region
        _
      $region24: #{_lambda_.19} parent=11 // pred_fallthru
        _
    $region12: #{_lambda_.19} parent=5 // pred_fallthru
      _
    %p204 = scmp.lt.s32.totalorder %s13, 2
    // Predicated region
    $region25: #{_lambda_.19} parent=5 // pred_check
      %p205 = pneg %p204
    $region26: #{_lambda_.19} parent=5 // pred_check_branch
      %207 = sbr.rel (%p205) target = $region28
    $region27: #{_lambda_.19} parent=5 // pred_region
      // Predicated region
      $region29: #{_lambda_.19} parent=27 // pred_check
        %p208 = pneg %p33
      $region30: #{_lambda_.19} parent=27 // pred_check_branch
        %210 = sbr.rel (%p208) target = $region32
      $region31: #{_lambda_.19} parent=27 // pred_region
        %s211 = smul.u32 8, %s13
        %p212 = scmp.lt.s32.totalorder %s211, 15
        %s213 = scalar_select %p212, %s211, 15
        %s214 = smul.addr %s213, 2
        %s215 = smul.addr %s214, 4
        %s216 = scalar_lea.vmem %s0, %s215
        %s217 = smul.u32 8, %s13
      $region32: #{_lambda_.19} parent=27 // pred_fallthru
        _
      // Predicated region
      $region33: #{_lambda_.19} parent=27 // pred_check
        %p218 = pneg %p80
      $region34: #{_lambda_.19} parent=27 // pred_check_branch
        %220 = sbr.rel (%p218) target = $region36
      $region35: #{_lambda_.19} parent=27 // pred_region
        %s221 = smul.u32 8, %s13
        %p222 = scmp.lt.s32.totalorder %s221, 15
        %s223 = scalar_select %p222, %s221, 15
        %s224 = smul.addr %s223, 8
        %s225 = scalar_lea.vmem %s2, %s224
        %s226 = smul.u32 8, %s13
      $region36: #{_lambda_.19} parent=27 // pred_fallthru
        _
    $region28: #{_lambda_.19} parent=5 // pred_fallthru
      _
    %p227 = scmp.le.s32.totalorder 1, %s13
    %p228 = scmp.lt.s32.totalorder %s13, 3
    %p229 = pnand %p227, %p228
    %p230 = pneg %p229
    // Predicated region
    $region37: #{_lambda_.19} parent=5 // pred_check
      _
    $region38: #{_lambda_.19} parent=5 // pred_check_branch
      %232 = sbr.rel (%p229) target = $region40
    $region39: #{_lambda_.19} parent=5 // pred_region
      %s233 = ssub.s32 %s13, 1
      %s234 = smul.u32 8, %s18
      %p235 = scmp.lt.s32.totalorder %s234, 15
      %s236 = scalar_select %p235, %s234, 15
      %s237 = smul.addr %s236, 2
      %s238 = smul.addr %s237, 4
      %s239 = scalar_lea.vmem %s0, %s238
      %p240 = pneg %p39
      %p241 = pneg %p36
      %p242 = pneg %p60
      %p243 = pneg %p57
      %s244 = smul.u32 8, %s18
      %p245 = scmp.lt.s32.totalorder %s244, 15
      %s246 = scalar_select %p245, %s244, 15
      %s247 = smul.addr %s246, 8
      %s248 = scalar_lea.vmem %s2, %s247
      %p249 = pneg %p86
      %p250 = pneg %p83
      %p251 = pneg %p107
      %p252 = pneg %p104
      %p253 = pneg %p128
      %p254 = pneg %p125
      %p255 = pneg %p154
      %p256 = pneg %p151
      %s257 = smul.u32 8, %s18
      %p258 = scmp.lt.s32.totalorder %s257, 15
      %s259 = scalar_select %p258, %s257, 15
      %s260 = smul.addr %s259, 8
      %s261 = scalar_lea.vmem %s5, %s260
      %p262 = pneg %p180
      %p263 = pneg %p177
      %s264 = smul.u32 8, %s18
      %p265 = scmp.lt.s32.totalorder %s264, 15
      %s266 = scalar_select %p265, %s264, 15
      %s267 = smul.addr %s266, 4
      %s268 = scalar_lea.vmem %s6, %s267
      %s269 = smul.u32 8, %s18
      %p270 = scmp.lt.s32.totalorder %s269, 15
      %s271 = scalar_select %p270, %s269, 15
      %s272 = smul.addr %s271, 2
      %s273 = smul.addr %s272, 4
      %s274 = scalar_lea.vmem %s0, %s273
      %s275 = smul.u32 8, %s18
      %s276 = smul.u32 8, %s18
      %p277 = scmp.lt.s32.totalorder %s276, 15
      %s278 = scalar_select %p277, %s276, 15
      %s279 = smul.addr %s278, 8
      %s280 = scalar_lea.vmem %s2, %s279
      %s281 = smul.u32 8, %s18
      %s282 = smul.u32 8, %s18
      %p283 = scmp.lt.s32.totalorder %s282, 15
      %s284 = scalar_select %p283, %s282, 15
      %s285 = smul.addr %s284, 8
      %s286 = scalar_lea.vmem %s5, %s285
      %s287 = smul.u32 8, %s18
      %s288 = smul.u32 8, %s18
      %p289 = scmp.lt.s32.totalorder %s288, 15
      %s290 = scalar_select %p289, %s288, 15
      %s291 = smul.addr %s290, 4
      %s292 = scalar_lea.vmem %s6, %s291
      %s293 = smul.u32 8, %s18
      %v295 = vld [vmem:[%s274] sm:$0xff]
      %v296 = vld [vmem:[%s274 + $0x8] sm:$0xff]
      %v297 = vld [vmem:[%s274 + $0x10] sm:$0xff]
      %v298 = vld [vmem:[%s274 + $0x18] sm:$0xff]
      %v299 = vld [vmem:[%s274 + $0x20] sm:$0xff]
      %v300 = vld [vmem:[%s274 + $0x28] sm:$0xff]
      %v301 = vld [vmem:[%s274 + $0x30] sm:$0xff]
      %v302 = vld [vmem:[%s274 + $0x38] sm:$0xff]
      %v303 = vld [vmem:[%s1] sm:$0xf]
      %v304 = vld [vmem:[%s1 + $0x4] sm:$0xf]
      %v305 = vld [vmem:[%s1 + $0x8] sm:$0xf]
      %v306 = vld [vmem:[%s1 + $0xc] sm:$0xf]
      %v307 = vld [vmem:[%s1 + $0x10] sm:$0xf]
      %v308 = vld [vmem:[%s1 + $0x14] sm:$0xf]
      %v309 = vld [vmem:[%s1 + $0x18] sm:$0xf]
      %v310 = vld [vmem:[%s1 + $0x1c] sm:$0xf]
      %v311 = vld [vmem:[%s1 + $0x20] sm:$0xf]
      %v312 = vld [vmem:[%s1 + $0x24] sm:$0xf]
      %v313 = vld [vmem:[%s1 + $0x28] sm:$0xf]
      %v314 = vld [vmem:[%s1 + $0x2c] sm:$0xf]
      %v315 = vld [vmem:[%s1 + $0x30] sm:$0xf]
      %v316 = vld [vmem:[%s1 + $0x34] sm:$0xf]
      %v317 = vld [vmem:[%s1 + $0x38] sm:$0xf]
      %v318 = vld [vmem:[%s1 + $0x3c] sm:$0xf]
      %v319 = vld [vmem:[%s1 + $0x40] sm:$0xf]
      %v320 = vld [vmem:[%s1 + $0x44] sm:$0xf]
      %v321 = vld [vmem:[%s280] sm:$0xff]
      %v322 = vld [vmem:[%s280 + $0x8] sm:$0xff]
      %v323 = vld [vmem:[%s280 + $0x10] sm:$0xff]
      %v324 = vld [vmem:[%s280 + $0x18] sm:$0xff]
      %v325 = vld [vmem:[%s280 + $0x20] sm:$0xff]
      %v326 = vld [vmem:[%s280 + $0x28] sm:$0xff]
      %v327 = vld [vmem:[%s280 + $0x30] sm:$0xff]
      %v328 = vld [vmem:[%s280 + $0x38] sm:$0xff]
      %v337 = vunpack.c.l.b16 %v295
      %v338 = vunpack.c.h.b16 %v295
      %v339 = vunpack.c.l.b16 %v296
      %v340 = vunpack.c.h.b16 %v296
      %v341 = vunpack.c.l.b16 %v297
      %v342 = vunpack.c.h.b16 %v297
      %v343 = vunpack.c.l.b16 %v298
      %v344 = vunpack.c.h.b16 %v298
      %v345 = vunpack.c.l.b16 %v299
      %v346 = vunpack.c.h.b16 %v299
      %v347 = vunpack.c.l.b16 %v300
      %v348 = vunpack.c.h.b16 %v300
      %v349 = vunpack.c.l.b16 %v301
      %v350 = vunpack.c.h.b16 %v301
      %v351 = vunpack.c.l.b16 %v302
      %v352 = vunpack.c.h.b16 %v302
      %v353 = vpack.c.b16 %v339, %v337
      %v354 = vpack.c.b16 %v340, %v338
      %v355 = vpack.c.b16 %v343, %v341
      %v356 = vpack.c.b16 %v344, %v342
      %v357 = vpack.c.b16 %v347, %v345
      %v358 = vpack.c.b16 %v348, %v346
      %v359 = vpack.c.b16 %v351, %v349
      %v360 = vpack.c.b16 %v352, %v350
      %v383 = vunpack.c.l.b16 %v303
      %v384 = vunpack.c.l.b16 %v304
      %v385 = vunpack.c.l.b16 %v305
      %v386 = vunpack.c.l.b16 %v306
      %v387 = vunpack.c.l.b16 %v307
      %v388 = vunpack.c.l.b16 %v308
      %v389 = vunpack.c.l.b16 %v309
      %v390 = vunpack.c.l.b16 %v310
      %v391 = vunpack.c.l.b16 %v311
      %v392 = vunpack.c.l.b16 %v312
      %v393 = vunpack.c.l.b16 %v313
      %v394 = vunpack.c.l.b16 %v314
      %v395 = vunpack.c.l.b16 %v315
      %v396 = vunpack.c.l.b16 %v316
      %v397 = vunpack.c.l.b16 %v317
      %v398 = vunpack.c.l.b16 %v318
      %v399 = vunpack.c.l.b16 %v319
      %v400 = vunpack.c.l.b16 %v320
      %v401 = vpack.c.b16 %v384, %v383
      %v402 = vpack.c.b16 %v386, %v385
      %v403 = vpack.c.b16 %v388, %v387
      %v404 = vpack.c.b16 %v390, %v389
      %v405 = vpack.c.b16 %v392, %v391
      %v406 = vpack.c.b16 %v394, %v393
      %v407 = vpack.c.b16 %v396, %v395
      %v408 = vpack.c.b16 %v398, %v397
      %v409 = vpack.c.b16 %v400, %v399
      %vm419 = vcmask 130048
      %v421 = vsel %vm419, %v354, 0
      %v424 = vsel %vm419, %v356, 0
      %v427 = vsel %vm419, %v358, 0
      %v430 = vsel %vm419, %v360, 0
      %432 = vmatprep.subr.bf16.mxu0 0
      %433 = vmatpush1.bf16.msra.mxu0 %v401
      %434 = vmatprep.subr.bf16.mxu0 0
      %435 = vmatpush1.bf16.msra.mxu0 %v402
      %436 = vmatprep.subr.bf16.mxu0 0
      %437 = vmatpush1.bf16.msra.mxu0 %v403
      %438 = vmatprep.subr.bf16.mxu0 0
      %439 = vmatpush1.bf16.msra.mxu0 %v404
      %440 = vmatprep.subr.bf16.mxu0 0
      %441 = vmatpush1.bf16.msra.mxu0 %v405
      %442 = vmatprep.subr.bf16.mxu0 0
      %443 = vmatpush1.bf16.msra.mxu0 %v406
      %444 = vmatprep.subr.bf16.mxu0 0
      %445 = vmatpush1.bf16.msra.mxu0 %v407
      %446 = vmatprep.subr.bf16.mxu0 0
      %447 = vmatpush1.bf16.msra.mxu0 %v408
      %448 = vmatprep.subr.bf16.mxu0 0
      %449 = vmatpush1.bf16.msra.mxu0 %v409
      %450 = vmatprep.subr.bf16.mxu0 0
      %451 = vmatpush1.bf16.msra.mxu0 0
      %452 = vmatprep.subr.bf16.mxu0 0
      %453 = vmatpush1.bf16.msra.mxu0 0
      %454 = vmatprep.subr.bf16.mxu0 0
      %455 = vmatpush1.bf16.msra.mxu0 0
      %456 = vmatprep.subr.bf16.mxu0 0
      %457 = vmatpush1.bf16.msra.mxu0 0
      %458 = vmatprep.subr.bf16.mxu0 0
      %459 = vmatpush1.bf16.msra.mxu0 0
      %460 = vmatprep.subr.bf16.mxu0 0
      %461 = vmatpush1.bf16.msra.mxu0 0
      %462 = vmatprep.subr.bf16.mxu0 0
      %463 = vmatpush1.bf16.msra.mxu0 0
      %464 = vmatprep.mubr.bf16.mxu0 %v421
      %465 = vmatmul.mubr.bf16.gmra.mrb[0].mxu0 %v353
      %v466 = vpop.f32.mrb[0].mxu0
      %v467 = vadd.f32 %v321, %v466
      %v468 = vpop.f32.mrb[0].mxu0
      %v469 = vpop.f32.mrb[0].mxu0
      %v470 = vadd.f32 %v322, %v469
      %v471 = vpop.f32.mrb[0].mxu0
      %472 = vmatprep.mubr.bf16.mxu0 %v424
      %473 = vmatmul.mubr.bf16.gmra.mrb[0].mxu0 %v355
      %v474 = vpop.f32.mrb[0].mxu0
      %v475 = vadd.f32 %v323, %v474
      %v476 = vpop.f32.mrb[0].mxu0
      %v477 = vpop.f32.mrb[0].mxu0
      %v478 = vadd.f32 %v324, %v477
      %v479 = vpop.f32.mrb[0].mxu0
      %480 = vmatprep.mubr.bf16.mxu0 %v427
      %481 = vmatmul.mubr.bf16.gmra.mrb[0].mxu0 %v357
      %v482 = vpop.f32.mrb[0].mxu0
      %v483 = vadd.f32 %v325, %v482
      %v484 = vpop.f32.mrb[0].mxu0
      %v485 = vpop.f32.mrb[0].mxu0
      %v486 = vadd.f32 %v326, %v485
      %v487 = vpop.f32.mrb[0].mxu0
      %488 = vmatprep.mubr.bf16.mxu0 %v430
      %489 = vmatmul.mubr.bf16.gmra.mrb[0].mxu0 %v359
      %v490 = vpop.f32.mrb[0].mxu0
      %v491 = vadd.f32 %v327, %v490
      %v492 = vpop.f32.mrb[0].mxu0
      %v493 = vpop.f32.mrb[0].mxu0
      %v494 = vadd.f32 %v328, %v493
      %v495 = vpop.f32.mrb[0].mxu0
      %496 = vdwg.mxu0
      %497 = vst.msk [vmem:[%s286] sm:$0xff] %vm419, %v467
      %498 = vst.msk [vmem:[%s286 + $0x8] sm:$0xff] %vm419, %v470
      %499 = vst.msk [vmem:[%s286 + $0x10] sm:$0xff] %vm419, %v475
      %500 = vst.msk [vmem:[%s286 + $0x18] sm:$0xff] %vm419, %v478
      %501 = vst.msk [vmem:[%s286 + $0x20] sm:$0xff] %vm419, %v483
      %502 = vst.msk [vmem:[%s286 + $0x28] sm:$0xff] %vm419, %v486
      %503 = vst.msk [vmem:[%s286 + $0x30] sm:$0xff] %vm419, %v491
      %504 = vst.msk [vmem:[%s286 + $0x38] sm:$0xff] %vm419, %v494
      %v505 = vld [vmem:[%s3] sm:$0x1]
      %v507 = vlaneseq
      %v508 = vshrl.u32 %v507, 7
      %v509 = vsub.s32 0, %v508
      %v510 = vrot.slane %v505, %v509
      %v512 = vmul.f32 %v467, %v510
      %v513 = vmul.f32 %v470, %v510
      %v514 = vmul.f32 %v475, %v510
      %v515 = vmul.f32 %v478, %v510
      %v516 = vmul.f32 %v483, %v510
      %v517 = vmul.f32 %v486, %v510
      %v518 = vmul.f32 %v491, %v510
      %v519 = vmul.f32 %v494, %v510
      %v520 = vld [vmem:[%s4] sm:$0x1]
      %v522 = vlaneseq
      %v523 = vshrl.u32 %v522, 7
      %v524 = vsub.s32 0, %v523
      %v525 = vrot.slane %v520, %v524
      %v527 = vadd.f32 %v512, %v525
      %v528 = vadd.f32 %v513, %v525
      %v529 = vadd.f32 %v514, %v525
      %v530 = vadd.f32 %v515, %v525
      %v531 = vadd.f32 %v516, %v525
      %v532 = vadd.f32 %v517, %v525
      %v533 = vadd.f32 %v518, %v525
      %v534 = vadd.f32 %v519, %v525
      %v535 = vmax.f32 %v527, 0.0
      %v536 = vmax.f32 %v528, 0.0
      %v537 = vmax.f32 %v529, 0.0
      %v538 = vmax.f32 %v530, 0.0
      %v539 = vmax.f32 %v531, 0.0
      %v540 = vmax.f32 %v532, 0.0
      %v541 = vmax.f32 %v533, 0.0
      %v542 = vmax.f32 %v534, 0.0
      %v543 = vpack.c.bf16 %v536, %v535
      %v544 = vpack.c.bf16 %v538, %v537
      %v545 = vpack.c.bf16 %v540, %v539
      %v546 = vpack.c.bf16 %v542, %v541
      %v551 = vunpack.c.l.b16 %v543
      %v552 = vunpack.c.h.b16 %v543
      %v553 = vunpack.c.l.b16 %v544
      %v554 = vunpack.c.h.b16 %v544
      %v555 = vunpack.c.l.b16 %v545
      %v556 = vunpack.c.h.b16 %v545
      %v557 = vunpack.c.l.b16 %v546
      %v558 = vunpack.c.h.b16 %v546
      %v559 = vpack.c.b16 %v551, %v551
      %v560 = vpack.c.b16 %v552, %v552
      %v561 = vpack.c.b16 %v553, %v553
      %v562 = vpack.c.b16 %v554, %v554
      %v563 = vpack.c.b16 %v555, %v555
      %v564 = vpack.c.b16 %v556, %v556
      %v565 = vpack.c.b16 %v557, %v557
      %v566 = vpack.c.b16 %v558, %v558
      %vm575 = vcmask 125952
      %576 = vst.msk [vmem:[%s292] sm:$0xf] %vm575, %v559
      %577 = vst.msk [vmem:[%s292 + $0x4] sm:$0xf] %vm575, %v560
      %578 = vst.msk [vmem:[%s292 + $0x8] sm:$0xf] %vm575, %v561
      %579 = vst.msk [vmem:[%s292 + $0xc] sm:$0xf] %vm575, %v562
      %580 = vst.msk [vmem:[%s292 + $0x10] sm:$0xf] %vm575, %v563
      %581 = vst.msk [vmem:[%s292 + $0x14] sm:$0xf] %vm575, %v564
      %582 = vst.msk [vmem:[%s292 + $0x18] sm:$0xf] %vm575, %v565
      %583 = vst.msk [vmem:[%s292 + $0x1c] sm:$0xf] %vm575, %v566
      %s584 = smul.u32 8, %s18
      %p585 = scmp.lt.s32.totalorder %s584, 15
      %s586 = scalar_select %p585, %s584, 15
      %s587 = smul.addr %s586, 8
      %s588 = scalar_lea.vmem %s5, %s587
      %s589 = smul.u32 8, %s18
      %p590 = scmp.lt.s32.totalorder %s589, 15
      %s591 = scalar_select %p590, %s589, 15
      %s592 = smul.addr %s591, 4
      %s593 = scalar_lea.vmem %s6, %s592
      // Predicated region
      $region41: #{_lambda_.19} parent=39 // pred_check
        %p594 = pneg %p151
      $region42: #{_lambda_.19} parent=39 // pred_check_branch
        %596 = sbr.rel (%p594) target = $region44
      $region43: #{_lambda_.19} parent=39 // pred_region
        %s597 = smul.u32 8, %s18
      $region44: #{_lambda_.19} parent=39 // pred_fallthru
        _
      // Predicated region
      $region45: #{_lambda_.19} parent=39 // pred_check
        %p598 = pneg %p177
      $region46: #{_lambda_.19} parent=39 // pred_check_branch
        %600 = sbr.rel (%p598) target = $region48
      $region47: #{_lambda_.19} parent=39 // pred_region
        %s601 = smul.u32 8, %s18
      $region48: #{_lambda_.19} parent=39 // pred_fallthru
        _
    $region40: #{_lambda_.19} parent=5 // pred_fallthru
      _
    %p602 = scmp.le.s32.totalorder 2, %s13
    // Predicated region
    $region49: #{_lambda_.19} parent=5 // pred_check
      %p603 = pneg %p602
    $region50: #{_lambda_.19} parent=5 // pred_check_branch
      %605 = sbr.rel (%p603) target = $region52
    $region51: #{_lambda_.19} parent=5 // pred_region
      %s606 = ssub.s32 %s13, 2
      // Predicated region
      $region53: #{_lambda_.19} parent=51 // pred_check
        %p607 = pneg %p157
      $region54: #{_lambda_.19} parent=51 // pred_check_branch
        %609 = sbr.rel (%p607) target = $region56
      $region55: #{_lambda_.19} parent=51 // pred_region
        %s610 = smul.u32 8, %s19
        %p611 = scmp.lt.s32.totalorder %s610, 15
        %s612 = scalar_select %p611, %s610, 15
        %s613 = smul.addr %s612, 8
        %s614 = scalar_lea.vmem %s5, %s613
      $region56: #{_lambda_.19} parent=51 // pred_fallthru
        _
      // Predicated region
      $region57: #{_lambda_.19} parent=51 // pred_check
        %p615 = pneg %p183
      $region58: #{_lambda_.19} parent=51 // pred_check_branch
        %617 = sbr.rel (%p615) target = $region60
      $region59: #{_lambda_.19} parent=51 // pred_region
        %s618 = smul.u32 8, %s19
        %p619 = scmp.lt.s32.totalorder %s618, 15
        %s620 = scalar_select %p619, %s618, 15
        %s621 = smul.addr %s620, 4
        %s622 = scalar_lea.vmem %s6, %s621
      $region60: #{_lambda_.19} parent=51 // pred_fallthru
        _
    $region52: #{_lambda_.19} parent=5 // pred_fallthru
      _
  $region6: #{_lambda_.19} parent=0 // loop_footer
    %s17 = sadd.s32 1, %s13
  $region7: #{_lambda_.19} parent=0 // loop_footer_branch
    %12 = sbr.rel target = $region3
  $region8: #{_lambda_.19} parent=0 // loop_exit
    _

// kernel: _lambda_.20
$region0: #{_lambda_.20}
  #allocation0 [shape = 'u32[]', space=smem, size = 0x4, offset = 0x4, fixed_abs, tag = 'smem constant byte address 0x4 - core index']
  #allocation1 [shape = 'u32[144,128]{1,0:T(1,128)}', space=vmem, size = 0x12000, scoped, tag = 'internal scratch']
  %s0 = inlined_call_operand.vmem [shape: bf16[128,144], index: 0, kind: input, shape index: {}]
  %s1 = inlined_call_operand.vmem [shape: bf16[144,16], index: 1, kind: input, shape index: {}]
  %s2 = inlined_call_operand.vmem [shape: f32[1,16], index: 2, kind: input, shape index: {}]
  %s3 = inlined_call_operand.vmem [shape: f32[1,16], index: 3, kind: input, shape index: {}]
  %s4 = inlined_call_operand.vmem [shape: bf16[128,16], index: 4, kind: output, shape index: {}]
  %s5 = sld [smem:[#allocation0]]
  $region49: #{_lambda_.20} parent=0
    _
  %s7 = ssub.s32 1, %s5
  %s8 = scalar_select 0, %s7, %s5
  loop: start=0, step=1, limit=4
  $region2: #{_lambda_.20} parent=0 // loop_pre_header
    _
  $region3: #{_lambda_.20} parent=0 // loop_header
    %s10 = sphi 0, %s14
    %p11 = scmp.ge.s32.totalorder %s10, 4
    %s20 = sphi 0, %s22
    %s23 = sphi 0, %s20
    %s24 = sphi 0, %s23
    %s40 = sphi 0, %s24
    %s44 = sphi 0, %s44
    %s46 = sphi 0, %s44
    %s47 = sphi 0, %s46
    %s61 = sphi 0, %s47
    %s65 = sphi 0, %s65
    %s67 = sphi 0, %s65
    %s68 = sphi 0, %s67
    %s82 = sphi 0, %s68
    %s86 = sphi 0, %s86
    %s88 = sphi 0, %s86
    %s89 = sphi 0, %s88
    %s103 = sphi 0, %s89
    %s109 = sphi 0, %s111
    %s112 = sphi 0, %s109
    %s113 = sphi 0, %s112
    %s129 = sphi 0, %s113
  $region4: #{_lambda_.20} parent=0 // loop_header_branch
    %13 = sbr.rel (%p11) target = $region8
  $region5: #{_lambda_.20} parent=0 // loop_body
    %s15 = ssub.s32 %s10, 1
    %s16 = ssub.s32 %s10, 2
    %s17 = sadd.s32 %s10, 1
    %s18 = ssub.s32 %s10, %s17
    %p19 = scmp.eq.s32.totalorder %s18, 0
    %s21 = sadd.s32 %s20, 1
    %s22 = scalar_select %p19, %s20, %s21
    %p25 = pneg %p19
    %p26 = scmp.eq.s32.totalorder %s10, 1
    %p27 = por %p25, %p26
    %p28 = scmp.ne.s32.totalorder %s20, %s23
    %p29 = scmp.eq.s32.totalorder %s10, 0
    %p30 = por %p28, %p29
    %p31 = scmp.ne.s32.totalorder %s20, %s23
    %p32 = scmp.eq.s32.totalorder %s15, 1
    %p33 = por %p31, %p32
    %p34 = scmp.ne.s32.totalorder %s23, %s24
    %p35 = scmp.eq.s32.totalorder %s15, 0
    %p36 = por %p34, %p35
    %p37 = scmp.ne.s32.totalorder %s23, %s24
    %p38 = scmp.eq.s32.totalorder %s16, 1
    %p39 = por %p37, %p38
    %p41 = scmp.ne.s32.totalorder %s24, %s40
    %p42 = scmp.eq.s32.totalorder %s16, 0
    %p43 = por %p41, %p42
    %s45 = sadd.s32 %s44, 1
    %p48 = scmp.eq.s32.totalorder %s10, 1
    %p49 = scmp.ne.s32.totalorder %s44, %s46
    %p50 = scmp.eq.s32.totalorder %s10, 0
    %p51 = por %p49, %p50
    %p52 = scmp.ne.s32.totalorder %s44, %s46
    %p53 = scmp.eq.s32.totalorder %s15, 1
    %p54 = por %p52, %p53
    %p55 = scmp.ne.s32.totalorder %s46, %s47
    %p56 = scmp.eq.s32.totalorder %s15, 0
    %p57 = por %p55, %p56
    %p58 = scmp.ne.s32.totalorder %s46, %s47
    %p59 = scmp.eq.s32.totalorder %s16, 1
    %p60 = por %p58, %p59
    %p62 = scmp.ne.s32.totalorder %s47, %s61
    %p63 = scmp.eq.s32.totalorder %s16, 0
    %p64 = por %p62, %p63
    %s66 = sadd.s32 %s65, 1
    %p69 = scmp.eq.s32.totalorder %s10, 1
    %p70 = scmp.ne.s32.totalorder %s65, %s67
    %p71 = scmp.eq.s32.totalorder %s10, 0
    %p72 = por %p70, %p71
    %p73 = scmp.ne.s32.totalorder %s65, %s67
    %p74 = scmp.eq.s32.totalorder %s15, 1
    %p75 = por %p73, %p74
    %p76 = scmp.ne.s32.totalorder %s67, %s68
    %p77 = scmp.eq.s32.totalorder %s15, 0
    %p78 = por %p76, %p77
    %p79 = scmp.ne.s32.totalorder %s67, %s68
    %p80 = scmp.eq.s32.totalorder %s16, 1
    %p81 = por %p79, %p80
    %p83 = scmp.ne.s32.totalorder %s68, %s82
    %p84 = scmp.eq.s32.totalorder %s16, 0
    %p85 = por %p83, %p84
    %s87 = sadd.s32 %s86, 1
    %p90 = scmp.eq.s32.totalorder %s10, 1
    %p91 = scmp.ne.s32.totalorder %s86, %s88
    %p92 = scmp.eq.s32.totalorder %s10, 0
    %p93 = por %p91, %p92
    %p94 = scmp.ne.s32.totalorder %s86, %s88
    %p95 = scmp.eq.s32.totalorder %s15, 1
    %p96 = por %p94, %p95
    %p97 = scmp.ne.s32.totalorder %s88, %s89
    %p98 = scmp.eq.s32.totalorder %s15, 0
    %p99 = por %p97, %p98
    %p100 = scmp.ne.s32.totalorder %s88, %s89
    %p101 = scmp.eq.s32.totalorder %s16, 1
    %p102 = por %p100, %p101
    %p104 = scmp.ne.s32.totalorder %s89, %s103
    %p105 = scmp.eq.s32.totalorder %s16, 0
    %p106 = por %p104, %p105
    %s107 = ssub.s32 %s10, %s17
    %p108 = scmp.eq.s32.totalorder %s107, 0
    %s110 = sadd.s32 %s109, 1
    %s111 = scalar_select %p108, %s109, %s110
    %p114 = pneg %p108
    %p115 = scmp.eq.s32.totalorder %s10, 1
    %p116 = por %p114, %p115
    %p117 = scmp.ne.s32.totalorder %s109, %s112
    %p118 = scmp.eq.s32.totalorder %s10, 0
    %p119 = por %p117, %p118
    %p120 = scmp.ne.s32.totalorder %s109, %s112
    %p121 = scmp.eq.s32.totalorder %s15, 1
    %p122 = por %p120, %p121
    %p123 = scmp.ne.s32.totalorder %s112, %s113
    %p124 = scmp.eq.s32.totalorder %s15, 0
    %p125 = por %p123, %p124
    %p126 = scmp.ne.s32.totalorder %s112, %s113
    %p127 = scmp.eq.s32.totalorder %s16, 1
    %p128 = por %p126, %p127
    %p130 = scmp.ne.s32.totalorder %s113, %s129
    %p131 = scmp.eq.s32.totalorder %s16, 0
    %p132 = por %p130, %p131
    %p133 = scmp.le.s32.totalorder 1, %s10
    %p134 = scmp.lt.s32.totalorder %s10, 3
    %p135 = pnand %p133, %p134
    %p136 = pneg %p135
    // Predicated region
    $region9: #{_lambda_.20} parent=5 // pred_check
      _
    $region10: #{_lambda_.20} parent=5 // pred_check_branch
      %138 = sbr.rel (%p135) target = $region12
    $region11: #{_lambda_.20} parent=5 // pred_region
      %s139 = ssub.s32 %s10, 1
      // Predicated region
      $region13: #{_lambda_.20} parent=11 // pred_check
        %p140 = pneg %p57
      $region14: #{_lambda_.20} parent=11 // pred_check_branch
        %142 = sbr.rel (%p140) target = $region16
      $region15: #{_lambda_.20} parent=11 // pred_region
        _
      $region16: #{_lambda_.20} parent=11 // pred_fallthru
        _
      // Predicated region
      $region17: #{_lambda_.20} parent=11 // pred_check
        %p143 = pneg %p78
      $region18: #{_lambda_.20} parent=11 // pred_check_branch
        %145 = sbr.rel (%p143) target = $region20
      $region19: #{_lambda_.20} parent=11 // pred_region
        _
      $region20: #{_lambda_.20} parent=11 // pred_fallthru
        _
      // Predicated region
      $region21: #{_lambda_.20} parent=11 // pred_check
        %p146 = pneg %p99
      $region22: #{_lambda_.20} parent=11 // pred_check_branch
        %148 = sbr.rel (%p146) target = $region24
      $region23: #{_lambda_.20} parent=11 // pred_region
        _
      $region24: #{_lambda_.20} parent=11 // pred_fallthru
        _
    $region12: #{_lambda_.20} parent=5 // pred_fallthru
      _
    %p149 = scmp.lt.s32.totalorder %s10, 2
    // Predicated region
    $region25: #{_lambda_.20} parent=5 // pred_check
      %p150 = pneg %p149
    $region26: #{_lambda_.20} parent=5 // pred_check_branch
      %152 = sbr.rel (%p150) target = $region28
    $region27: #{_lambda_.20} parent=5 // pred_region
      // Predicated region
      $region29: #{_lambda_.20} parent=27 // pred_check
        %p153 = pneg %p30
      $region30: #{_lambda_.20} parent=27 // pred_check_branch
        %155 = sbr.rel (%p153) target = $region32
      $region31: #{_lambda_.20} parent=27 // pred_region
        %s156 = smul.u32 8, %s10
        %p157 = scmp.lt.s32.totalorder %s156, 15
        %s158 = scalar_select %p157, %s156, 15
        %s159 = smul.addr %s158, 2
        %s160 = smul.addr %s159, 4
        %s161 = scalar_lea.vmem %s0, %s160
        %s162 = smul.u32 8, %s10
      $region32: #{_lambda_.20} parent=27 // pred_fallthru
        _
    $region28: #{_lambda_.20} parent=5 // pred_fallthru
      _
    %p163 = scmp.le.s32.totalorder 1, %s10
    %p164 = scmp.lt.s32.totalorder %s10, 3
    %p165 = pnand %p163, %p164
    %p166 = pneg %p165
    // Predicated region
    $region33: #{_lambda_.20} parent=5 // pred_check
      _
    $region34: #{_lambda_.20} parent=5 // pred_check_branch
      %168 = sbr.rel (%p165) target = $region36
    $region35: #{_lambda_.20} parent=5 // pred_region
      %s169 = ssub.s32 %s10, 1
      %s170 = smul.u32 8, %s15
      %p171 = scmp.lt.s32.totalorder %s170, 15
      %s172 = scalar_select %p171, %s170, 15
      %s173 = smul.addr %s172, 2
      %s174 = smul.addr %s173, 4
      %s175 = scalar_lea.vmem %s0, %s174
      %p176 = pneg %p36
      %p177 = pneg %p33
      %p178 = pneg %p57
      %p179 = pneg %p54
      %p180 = pneg %p78
      %p181 = pneg %p75
      %p182 = pneg %p99
      %p183 = pneg %p96
      %p184 = pneg %p125
      %p185 = pneg %p122
      %s186 = smul.u32 8, %s15
      %p187 = scmp.lt.s32.totalorder %s186, 15
      %s188 = scalar_select %p187, %s186, 15
      %s189 = smul.addr %s188, 4
      %s190 = scalar_lea.vmem %s4, %s189
      %s191 = smul.u32 8, %s15
      %p192 = scmp.lt.s32.totalorder %s191, 15
      %s193 = scalar_select %p192, %s191, 15
      %s194 = smul.addr %s193, 2
      %s195 = smul.addr %s194, 4
      %s196 = scalar_lea.vmem %s0, %s195
      %s197 = smul.u32 8, %s15
      %s198 = smul.u32 8, %s15
      %p199 = scmp.lt.s32.totalorder %s198, 15
      %s200 = scalar_select %p199, %s198, 15
      %s201 = smul.addr %s200, 4
      %s202 = scalar_lea.vmem %s4, %s201
      %s203 = smul.u32 8, %s15
      %v205 = vld [vmem:[%s196] sm:$0xff]
      %v206 = vld [vmem:[%s196 + $0x8] sm:$0xff]
      %v207 = vld [vmem:[%s196 + $0x10] sm:$0xff]
      %v208 = vld [vmem:[%s196 + $0x18] sm:$0xff]
      %v209 = vld [vmem:[%s196 + $0x20] sm:$0xff]
      %v210 = vld [vmem:[%s196 + $0x28] sm:$0xff]
      %v211 = vld [vmem:[%s196 + $0x30] sm:$0xff]
      %v212 = vld [vmem:[%s196 + $0x38] sm:$0xff]
      %v213 = vld [vmem:[%s1] sm:$0xf]
      %v214 = vld [vmem:[%s1 + $0x4] sm:$0xf]
      %v215 = vld [vmem:[%s1 + $0x8] sm:$0xf]
      %v216 = vld [vmem:[%s1 + $0xc] sm:$0xf]
      %v217 = vld [vmem:[%s1 + $0x10] sm:$0xf]
      %v218 = vld [vmem:[%s1 + $0x14] sm:$0xf]
      %v219 = vld [vmem:[%s1 + $0x18] sm:$0xf]
      %v220 = vld [vmem:[%s1 + $0x1c] sm:$0xf]
      %v221 = vld [vmem:[%s1 + $0x20] sm:$0xf]
      %v222 = vld [vmem:[%s1 + $0x24] sm:$0xf]
      %v223 = vld [vmem:[%s1 + $0x28] sm:$0xf]
      %v224 = vld [vmem:[%s1 + $0x2c] sm:$0xf]
      %v225 = vld [vmem:[%s1 + $0x30] sm:$0xf]
      %v226 = vld [vmem:[%s1 + $0x34] sm:$0xf]
      %v227 = vld [vmem:[%s1 + $0x38] sm:$0xf]
      %v228 = vld [vmem:[%s1 + $0x3c] sm:$0xf]
      %v229 = vld [vmem:[%s1 + $0x40] sm:$0xf]
      %v230 = vld [vmem:[%s1 + $0x44] sm:$0xf]
      %v239 = vunpack.c.l.b16 %v205
      %v240 = vunpack.c.h.b16 %v205
      %v241 = vunpack.c.l.b16 %v206
      %v242 = vunpack.c.h.b16 %v206
      %v243 = vunpack.c.l.b16 %v207
      %v244 = vunpack.c.h.b16 %v207
      %v245 = vunpack.c.l.b16 %v208
      %v246 = vunpack.c.h.b16 %v208
      %v247 = vunpack.c.l.b16 %v209
      %v248 = vunpack.c.h.b16 %v209
      %v249 = vunpack.c.l.b16 %v210
      %v250 = vunpack.c.h.b16 %v210
      %v251 = vunpack.c.l.b16 %v211
      %v252 = vunpack.c.h.b16 %v211
      %v253 = vunpack.c.l.b16 %v212
      %v254 = vunpack.c.h.b16 %v212
      %v255 = vpack.c.b16 %v241, %v239
      %v256 = vpack.c.b16 %v242, %v240
      %v257 = vpack.c.b16 %v245, %v243
      %v258 = vpack.c.b16 %v246, %v244
      %v259 = vpack.c.b16 %v249, %v247
      %v260 = vpack.c.b16 %v250, %v248
      %v261 = vpack.c.b16 %v253, %v251
      %v262 = vpack.c.b16 %v254, %v252
      %v285 = vunpack.c.l.b16 %v213
      %v286 = vunpack.c.l.b16 %v214
      %v287 = vunpack.c.l.b16 %v215
      %v288 = vunpack.c.l.b16 %v216
      %v289 = vunpack.c.l.b16 %v217
      %v290 = vunpack.c.l.b16 %v218
      %v291 = vunpack.c.l.b16 %v219
      %v292 = vunpack.c.l.b16 %v220
      %v293 = vunpack.c.l.b16 %v221
      %v294 = vunpack.c.l.b16 %v222
      %v295 = vunpack.c.l.b16 %v223
      %v296 = vunpack.c.l.b16 %v224
      %v297 = vunpack.c.l.b16 %v225
      %v298 = vunpack.c.l.b16 %v226
      %v299 = vunpack.c.l.b16 %v227
      %v300 = vunpack.c.l.b16 %v228
      %v301 = vunpack.c.l.b16 %v229
      %v302 = vunpack.c.l.b16 %v230
      %v303 = vpack.c.b16 %v286, %v285
      %v304 = vpack.c.b16 %v288, %v287
      %v305 = vpack.c.b16 %v290, %v289
      %v306 = vpack.c.b16 %v292, %v291
      %v307 = vpack.c.b16 %v294, %v293
      %v308 = vpack.c.b16 %v296, %v295
      %v309 = vpack.c.b16 %v298, %v297
      %v310 = vpack.c.b16 %v300, %v299
      %v311 = vpack.c.b16 %v302, %v301
      %vm321 = vcmask 130048
      %v323 = vsel %vm321, %v256, 0
      %v326 = vsel %vm321, %v258, 0
      %v329 = vsel %vm321, %v260, 0
      %v332 = vsel %vm321, %v262, 0
      %334 = vmatprep.subr.bf16.mxu0 0
      %335 = vmatpush1.bf16.msra.mxu0 %v303
      %336 = vmatprep.subr.bf16.mxu0 0
      %337 = vmatpush1.bf16.msra.mxu0 %v304
      %338 = vmatprep.subr.bf16.mxu0 0
      %339 = vmatpush1.bf16.msra.mxu0 %v305
      %340 = vmatprep.subr.bf16.mxu0 0
      %341 = vmatpush1.bf16.msra.mxu0 %v306
      %342 = vmatprep.subr.bf16.mxu0 0
      %343 = vmatpush1.bf16.msra.mxu0 %v307
      %344 = vmatprep.subr.bf16.mxu0 0
      %345 = vmatpush1.bf16.msra.mxu0 %v308
      %346 = vmatprep.subr.bf16.mxu0 0
      %347 = vmatpush1.bf16.msra.mxu0 %v309
      %348 = vmatprep.subr.bf16.mxu0 0
      %349 = vmatpush1.bf16.msra.mxu0 %v310
      %350 = vmatprep.subr.bf16.mxu0 0
      %351 = vmatpush1.bf16.msra.mxu0 %v311
      %352 = vmatprep.subr.bf16.mxu0 0
      %353 = vmatpush1.bf16.msra.mxu0 0
      %354 = vmatprep.subr.bf16.mxu0 0
      %355 = vmatpush1.bf16.msra.mxu0 0
      %356 = vmatprep.subr.bf16.mxu0 0
      %357 = vmatpush1.bf16.msra.mxu0 0
      %358 = vmatprep.subr.bf16.mxu0 0
      %359 = vmatpush1.bf16.msra.mxu0 0
      %360 = vmatprep.subr.bf16.mxu0 0
      %361 = vmatpush1.bf16.msra.mxu0 0
      %362 = vmatprep.subr.bf16.mxu0 0
      %363 = vmatpush1.bf16.msra.mxu0 0
      %364 = vmatprep.subr.bf16.mxu0 0
      %365 = vmatpush1.bf16.msra.mxu0 0
      %366 = vmatprep.mubr.bf16.mxu0 %v323
      %367 = vmatmul.mubr.bf16.gmra.mrb[0].mxu0 %v255
      %v368 = vpop.f32.mrb[0].mxu0
      %v369 = vadd.f32 0.0, %v368
      %v370 = vpop.f32.mrb[0].mxu0
      %v371 = vpop.f32.mrb[0].mxu0
      %v372 = vadd.f32 0.0, %v371
      %v373 = vpop.f32.mrb[0].mxu0
      %374 = vmatprep.mubr.bf16.mxu0 %v326
      %375 = vmatmul.mubr.bf16.gmra.mrb[0].mxu0 %v257
      %v376 = vpop.f32.mrb[0].mxu0
      %v377 = vadd.f32 0.0, %v376
      %v378 = vpop.f32.mrb[0].mxu0
      %v379 = vpop.f32.mrb[0].mxu0
      %v380 = vadd.f32 0.0, %v379
      %v381 = vpop.f32.mrb[0].mxu0
      %382 = vmatprep.mubr.bf16.mxu0 %v329
      %383 = vmatmul.mubr.bf16.gmra.mrb[0].mxu0 %v259
      %v384 = vpop.f32.mrb[0].mxu0
      %v385 = vadd.f32 0.0, %v384
      %v386 = vpop.f32.mrb[0].mxu0
      %v387 = vpop.f32.mrb[0].mxu0
      %v388 = vadd.f32 0.0, %v387
      %v389 = vpop.f32.mrb[0].mxu0
      %390 = vmatprep.mubr.bf16.mxu0 %v332
      %391 = vmatmul.mubr.bf16.gmra.mrb[0].mxu0 %v261
      %v392 = vpop.f32.mrb[0].mxu0
      %v393 = vadd.f32 0.0, %v392
      %v394 = vpop.f32.mrb[0].mxu0
      %v395 = vpop.f32.mrb[0].mxu0
      %v396 = vadd.f32 0.0, %v395
      %v397 = vpop.f32.mrb[0].mxu0
      %398 = vdwg.mxu0
      %v399 = vld [vmem:[%s2] sm:$0x1]
      %v401 = vlaneseq
      %v402 = vshrl.u32 %v401, 7
      %v403 = vsub.s32 0, %v402
      %v404 = vrot.slane %v399, %v403
      %v406 = vmul.f32 %v369, %v404
      %v407 = vmul.f32 %v372, %v404
      %v408 = vmul.f32 %v377, %v404
      %v409 = vmul.f32 %v380, %v404
      %v410 = vmul.f32 %v385, %v404
      %v411 = vmul.f32 %v388, %v404
      %v412 = vmul.f32 %v393, %v404
      %v413 = vmul.f32 %v396, %v404
      %v414 = vld [vmem:[%s3] sm:$0x1]
      %v416 = vlaneseq
      %v417 = vshrl.u32 %v416, 7
      %v418 = vsub.s32 0, %v417
      %v419 = vrot.slane %v414, %v418
      %v421 = vadd.f32 %v406, %v419
      %v422 = vadd.f32 %v407, %v419
      %v423 = vadd.f32 %v408, %v419
      %v424 = vadd.f32 %v409, %v419
      %v425 = vadd.f32 %v410, %v419
      %v426 = vadd.f32 %v411, %v419
      %v427 = vadd.f32 %v412, %v419
      %v428 = vadd.f32 %v413, %v419
      %v429 = vmax.f32 %v421, 0.0
      %v430 = vmax.f32 %v422, 0.0
      %v431 = vmax.f32 %v423, 0.0
      %v432 = vmax.f32 %v424, 0.0
      %v433 = vmax.f32 %v425, 0.0
      %v434 = vmax.f32 %v426, 0.0
      %v435 = vmax.f32 %v427, 0.0
      %v436 = vmax.f32 %v428, 0.0
      %v437 = vpack.c.bf16 %v430, %v429
      %v438 = vpack.c.bf16 %v432, %v431
      %v439 = vpack.c.bf16 %v434, %v433
      %v440 = vpack.c.bf16 %v436, %v435
      %v445 = vunpack.c.l.b16 %v437
      %v446 = vunpack.c.h.b16 %v437
      %v447 = vunpack.c.l.b16 %v438
      %v448 = vunpack.c.h.b16 %v438
      %v449 = vunpack.c.l.b16 %v439
      %v450 = vunpack.c.h.b16 %v439
      %v451 = vunpack.c.l.b16 %v440
      %v452 = vunpack.c.h.b16 %v440
      %v453 = vpack.c.b16 %v445, %v445
      %v454 = vpack.c.b16 %v446, %v446
      %v455 = vpack.c.b16 %v447, %v447
      %v456 = vpack.c.b16 %v448, %v448
      %v457 = vpack.c.b16 %v449, %v449
      %v458 = vpack.c.b16 %v450, %v450
      %v459 = vpack.c.b16 %v451, %v451
      %v460 = vpack.c.b16 %v452, %v452
      %vm469 = vcmask 125952
      %470 = vst.msk [vmem:[%s202] sm:$0xf] %vm469, %v453
      %471 = vst.msk [vmem:[%s202 + $0x4] sm:$0xf] %vm469, %v454
      %472 = vst.msk [vmem:[%s202 + $0x8] sm:$0xf] %vm469, %v455
      %473 = vst.msk [vmem:[%s202 + $0xc] sm:$0xf] %vm469, %v456
      %474 = vst.msk [vmem:[%s202 + $0x10] sm:$0xf] %vm469, %v457
      %475 = vst.msk [vmem:[%s202 + $0x14] sm:$0xf] %vm469, %v458
      %476 = vst.msk [vmem:[%s202 + $0x18] sm:$0xf] %vm469, %v459
      %477 = vst.msk [vmem:[%s202 + $0x1c] sm:$0xf] %vm469, %v460
      %s478 = smul.u32 8, %s15
      %p479 = scmp.lt.s32.totalorder %s478, 15
      %s480 = scalar_select %p479, %s478, 15
      %s481 = smul.addr %s480, 4
      %s482 = scalar_lea.vmem %s4, %s481
      // Predicated region
      $region37: #{_lambda_.20} parent=35 // pred_check
        %p483 = pneg %p122
      $region38: #{_lambda_.20} parent=35 // pred_check_branch
        %485 = sbr.rel (%p483) target = $region40
      $region39: #{_lambda_.20} parent=35 // pred_region
        %s486 = smul.u32 8, %s15
      $region40: #{_lambda_.20} parent=35 // pred_fallthru
        _
    $region36: #{_lambda_.20} parent=5 // pred_fallthru
      _
    %p487 = scmp.le.s32.totalorder 2, %s10
    // Predicated region
    $region41: #{_lambda_.20} parent=5 // pred_check
      %p488 = pneg %p487
    $region42: #{_lambda_.20} parent=5 // pred_check_branch
      %490 = sbr.rel (%p488) target = $region44
    $region43: #{_lambda_.20} parent=5 // pred_region
      %s491 = ssub.s32 %s10, 2
      // Predicated region
      $region45: #{_lambda_.20} parent=43 // pred_check
        %p492 = pneg %p128
      $region46: #{_lambda_.20} parent=43 // pred_check_branch
        %494 = sbr.rel (%p492) target = $region48
      $region47: #{_lambda_.20} parent=43 // pred_region
        %s495 = smul.u32 8, %s16
        %p496 = scmp.lt.s32.totalorder %s495, 15
        %s497 = scalar_select %p496, %s495, 15
        %s498 = smul.addr %s497, 4
        %s499 = scalar_lea.vmem %s4, %s498
      $region48: #{_lambda_.20} parent=43 // pred_fallthru
        _
    $region44: #{_lambda_.20} parent=5 // pred_fallthru
      _
  $region6: #{_lambda_.20} parent=0 // loop_footer
    %s14 = sadd.s32 1, %s10
  $region7: #{_lambda_.20} parent=0 // loop_footer_branch
    %9 = sbr.rel target = $region3
  $region8: #{_lambda_.20} parent=0 // loop_exit
    _

// kernel: _lambda_.23
$region0: #{_lambda_.23}
  #allocation0 [shape = 'u32[]', space=smem, size = 0x4, offset = 0x4, fixed_abs, tag = 'smem constant byte address 0x4 - core index']
  #allocation1 [shape = 'u32[144,128]{1,0:T(1,128)}', space=vmem, size = 0x12000, scoped, tag = 'internal scratch']
  %s0 = inlined_call_operand.vmem [shape: f32[2,16], index: 0, kind: input, shape index: {}]
  %s1 = inlined_call_operand.vmem [shape: f32[16,10], index: 1, kind: input, shape index: {}]
  %s2 = inlined_call_operand.vmem [shape: f32[1,10], index: 2, kind: input, shape index: {}]
  %s3 = inlined_call_operand.hbm [shape: f32[2,10], index: 3, kind: output, shape index: {}]
  %s4 = sld [smem:[#allocation0]]
  $region22: #{_lambda_.23} parent=0
    _
  %s6 = ssub.s32 1, %s4
  %s7 = scalar_select 0, %s6, %s4
  $region1: #{_lambda_.23} parent=0
    #allocation2 [shape = 'u8[1024]{0}', space=vmem, size = 0x400, scoped, tag = 'output window, operand 0, single buffered']
    #allocation3 [shape = 's32[1]{0}', space=sflag, size = 0x4, scoped, tag = 'scoped memory for _lambda_.23']
    %8 = vsyncpa [#allocation3], 0
    // Predicated region
    $region2: #{_lambda_.23} parent=1 // pred_check
      _
    $region3: #{_lambda_.23} parent=1 // pred_check_branch
      %10 = sbr.rel (0) target = $region5
    $region4: #{_lambda_.23} parent=1 // pred_region
      _
    $region5: #{_lambda_.23} parent=1 // pred_fallthru
      _
    // Predicated region
    $region6: #{_lambda_.23} parent=1 // pred_check
      _
    $region7: #{_lambda_.23} parent=1 // pred_check_branch
      %12 = sbr.rel (0) target = $region9
    $region8: #{_lambda_.23} parent=1 // pred_region
      _
    $region9: #{_lambda_.23} parent=1 // pred_fallthru
      _
    // Predicated region
    $region10: #{_lambda_.23} parent=1 // pred_check
      _
    $region11: #{_lambda_.23} parent=1 // pred_check_branch
      %14 = sbr.rel (0) target = $region13
    $region12: #{_lambda_.23} parent=1 // pred_region
      _
    $region13: #{_lambda_.23} parent=1 // pred_fallthru
      _
    %v15 = vld [vmem:[%s0] sm:$0x3]
    %v16 = vld [vmem:[%s1] sm:$0xff]
    %v17 = vld [vmem:[%s1 + $0x8] sm:$0xff]
    %v18 = vld [vmem:[%s2] sm:$0x1]
    %v20 = vlaneseq
    %v21 = vshrl.u32 %v20, 7
    %v22 = vsub.s32 0, %v21
    %v23 = vrot.slane %v18, %v22
    %vm25 = vcmask 130048
    %v27 = vsel %vm25, %v15, 0
    %29 = vmatprep.subr.mxu0 0.0
    %30 = vmatpush1.msra.mxu0 %v16
    %31 = vmatprep.subr.mxu0 0.0
    %32 = vmatpush1.msra.mxu0 %v17
    %33 = vmatprep.subr.mxu0 0.0
    %34 = vmatpush1.msra.mxu0 0.0
    %35 = vmatprep.subr.mxu0 0.0
    %36 = vmatpush1.msra.mxu0 0.0
    %37 = vmatprep.subr.mxu0 0.0
    %38 = vmatpush1.msra.mxu0 0.0
    %39 = vmatprep.subr.mxu0 0.0
    %40 = vmatpush1.msra.mxu0 0.0
    %41 = vmatprep.subr.mxu0 0.0
    %42 = vmatpush1.msra.mxu0 0.0
    %43 = vmatprep.subr.mxu0 0.0
    %44 = vmatpush1.msra.mxu0 0.0
    %45 = vmatprep.subr.mxu0 0.0
    %46 = vmatpush1.msra.mxu0 0.0
    %47 = vmatprep.subr.mxu0 0.0
    %48 = vmatpush1.msra.mxu0 0.0
    %49 = vmatprep.subr.mxu0 0.0
    %50 = vmatpush1.msra.mxu0 0.0
    %51 = vmatprep.subr.mxu0 0.0
    %52 = vmatpush1.msra.mxu0 0.0
    %53 = vmatprep.subr.mxu0 0.0
    %54 = vmatpush1.msra.mxu0 0.0
    %55 = vmatprep.subr.mxu0 0.0
    %56 = vmatpush1.msra.mxu0 0.0
    %57 = vmatprep.subr.mxu0 0.0
    %58 = vmatpush1.msra.mxu0 0.0
    %59 = vmatprep.subr.mxu0 0.0
    %60 = vmatpush1.msra.mxu0 0.0
    %61 = vmatprep.subr.mxu0 0.0
    %62 = vmatpush1.msra.mxu0 0.0
    %63 = vmatprep.subr.mxu0 0.0
    %64 = vmatpush1.msra.mxu0 0.0
    %65 = vmatprep.subr.mxu0 0.0
    %66 = vmatpush1.msra.mxu0 0.0
    %67 = vmatprep.subr.mxu0 0.0
    %68 = vmatpush1.msra.mxu0 0.0
    %69 = vmatprep.subr.mxu0 0.0
    %70 = vmatpush1.msra.mxu0 0.0
    %71 = vmatprep.subr.mxu0 0.0
    %72 = vmatpush1.msra.mxu0 0.0
    %73 = vmatprep.subr.mxu0 0.0
    %74 = vmatpush1.msra.mxu0 0.0
    %75 = vmatprep.subr.mxu0 0.0
    %76 = vmatpush1.msra.mxu0 0.0
    %77 = vmatprep.subr.mxu0 0.0
    %78 = vmatpush1.msra.mxu0 0.0
    %79 = vmatprep.subr.mxu0 0.0
    %80 = vmatpush1.msra.mxu0 0.0
    %81 = vmatprep.subr.mxu0 0.0
    %82 = vmatpush1.msra.mxu0 0.0
    %83 = vmatprep.subr.mxu0 0.0
    %84 = vmatpush1.msra.mxu0 0.0
    %85 = vmatprep.subr.mxu0 0.0
    %86 = vmatpush1.msra.mxu0 0.0
    %87 = vmatprep.subr.mxu0 0.0
    %88 = vmatpush1.msra.mxu0 0.0
    %89 = vmatprep.subr.mxu0 0.0
    %90 = vmatpush1.msra.mxu0 0.0
    %91 = vmatprep.subr.mxu0 0.0
    %92 = vmatpush1.msra.mxu0 0.0
    %93 = vmatprep.mubr.f32.mxu0 0.0
    %94 = vmatmul.mubr.f32.gmra.mrb[0].mxu0 %v27
    %v95 = vpop.f32.mrb[0].mxu0
    %v96 = vadd.f32 %v23, %v95
    %v97 = vpop.f32.mrb[0].mxu0
    %98 = vdwg.mxu0
    %vm99 = vcmask 74752
    %100 = vst.msk [vmem:[#allocation2] sm:$0x3] %vm99, %v96
    // Predicated region
    $region14: #{_lambda_.23} parent=1 // pred_check
      _
    $region15: #{_lambda_.23} parent=1 // pred_check_branch
      %102 = sbr.rel (0) target = $region17
    $region16: #{_lambda_.23} parent=1 // pred_region
      %s104 = ssub.s32 32, 32
      %105 = vsyncadd [#allocation3], %s104
      %s107 = sshll.u32 [#allocation2], 4
      %s108 = int_to_ptr.vmem [resolvable:$true] %s107
      %110 = dma.vmem_to_hbm [thread:$0]  %s108, 32, %s3, [#allocation3]
    $region17: #{_lambda_.23} parent=1 // pred_fallthru
      _
    // Predicated region
    $region18: #{_lambda_.23} parent=1 // pred_check
      _
    $region19: #{_lambda_.23} parent=1 // pred_check_branch
      %112 = sbr.rel (0) target = $region21
    $region20: #{_lambda_.23} parent=1 // pred_region
      %113 = dma.done [#allocation3], 32
    $region21: #{_lambda_.23} parent=1 // pred_fallthru
      _
    %114 = vsyncpa [#allocation3], 1

// kernel: _lambda_.22
$region0: #{_lambda_.22}
  #allocation0 [shape = 'u32[]', space=smem, size = 0x4, offset = 0x4, fixed_abs, tag = 'smem constant byte address 0x4 - core index']
  #allocation1 [shape = 'u32[144,128]{1,0:T(1,128)}', space=vmem, size = 0x12000, scoped, tag = 'internal scratch']
  #allocation2 [shape = 'f32[2,16]{1,0:T(2,128)}', space=vmem, size = 0x400, scoped, tag = 'scratch operand']
  %s0 = inlined_call_operand.vmem [shape: bf16[2,64,16], index: 0, kind: input, shape index: {}]
  %s1 = inlined_call_operand.vmem [shape: f32[2,16], index: 1, kind: output, shape index: {}]
  %s2 = sld [smem:[#allocation0]]
  $region22: #{_lambda_.22} parent=0
    _
  %s4 = ssub.s32 1, %s2
  %s5 = scalar_select 0, %s4, %s2
  // Predicated region
  $region2: #{_lambda_.22} parent=0 // pred_check
    _
  $region3: #{_lambda_.22} parent=0 // pred_check_branch
    %7 = sbr.rel (0) target = $region5
  $region4: #{_lambda_.22} parent=0 // pred_region
    _
  $region5: #{_lambda_.22} parent=0 // pred_fallthru
    _
  %p8 = scmp.eq.s32.totalorder 0, 0
  // Predicated region
  $region6: #{_lambda_.22} parent=0 // pred_check
    %p9 = pneg %p8
  $region7: #{_lambda_.22} parent=0 // pred_check_branch
    %11 = sbr.rel (%p9) target = $region9
  $region8: #{_lambda_.22} parent=0 // pred_region
    %vm12 = vcmask 123904
    %13 = vst.msk [vmem:[#allocation2] sm:$0x3] %vm12, 0.0
  $region9: #{_lambda_.22} parent=0 // pred_fallthru
    _
  %v14 = vld [vmem:[#allocation2] sm:$0x3]
  %v15 = vld [vmem:[%s0] sm:$0xf]
  %v16 = vld [vmem:[%s0 + $0x4] sm:$0xf]
  %v17 = vld [vmem:[%s0 + $0x8] sm:$0xf]
  %v18 = vld [vmem:[%s0 + $0xc] sm:$0xf]
  %v19 = vld [vmem:[%s0 + $0x10] sm:$0xf]
  %v20 = vld [vmem:[%s0 + $0x14] sm:$0xf]
  %v21 = vld [vmem:[%s0 + $0x18] sm:$0xf]
  %v22 = vld [vmem:[%s0 + $0x1c] sm:$0xf]
  %v23 = vld [vmem:[%s0 + $0x20] sm:$0xf]
  %v24 = vld [vmem:[%s0 + $0x24] sm:$0xf]
  %v25 = vld [vmem:[%s0 + $0x28] sm:$0xf]
  %v26 = vld [vmem:[%s0 + $0x2c] sm:$0xf]
  %v27 = vld [vmem:[%s0 + $0x30] sm:$0xf]
  %v28 = vld [vmem:[%s0 + $0x34] sm:$0xf]
  %v29 = vld [vmem:[%s0 + $0x38] sm:$0xf]
  %v30 = vld [vmem:[%s0 + $0x3c] sm:$0xf]
  %v31 = vunpack.c.l.bf16 %v15
  %v32 = vunpack.c.l.bf16 %v16
  %v33 = vunpack.c.l.bf16 %v17
  %v34 = vunpack.c.l.bf16 %v18
  %v35 = vunpack.c.l.bf16 %v19
  %v36 = vunpack.c.l.bf16 %v20
  %v37 = vunpack.c.l.bf16 %v21
  %v38 = vunpack.c.l.bf16 %v22
  %v39 = vunpack.c.l.bf16 %v23
  %v40 = vunpack.c.l.bf16 %v24
  %v41 = vunpack.c.l.bf16 %v25
  %v42 = vunpack.c.l.bf16 %v26
  %v43 = vunpack.c.l.bf16 %v27
  %v44 = vunpack.c.l.bf16 %v28
  %v45 = vunpack.c.l.bf16 %v29
  %v46 = vunpack.c.l.bf16 %v30
  %vm47 = vcmask 130048
  %v48 = vsel %vm47, %v31, 0.0
  %v49 = vsel %vm47, %v32, 0.0
  %v50 = vadd.f32 %v48, %v49
  %v51 = vsel %vm47, %v33, 0.0
  %v52 = vadd.f32 %v50, %v51
  %v53 = vsel %vm47, %v34, 0.0
  %v54 = vadd.f32 %v52, %v53
  %v55 = vsel %vm47, %v35, 0.0
  %v56 = vadd.f32 %v54, %v55
  %v57 = vsel %vm47, %v36, 0.0
  %v58 = vadd.f32 %v56, %v57
  %v59 = vsel %vm47, %v37, 0.0
  %v60 = vadd.f32 %v58, %v59
  %v61 = vsel %vm47, %v38, 0.0
  %v62 = vadd.f32 %v60, %v61
  %v63 = vrot.slane %v62, 4
  %v64 = vadd.f32 %v62, %v63
  %v65 = vrot.slane %v64, 2
  %v66 = vadd.f32 %v64, %v65
  %v67 = vrot.slane %v66, 1
  %v68 = vadd.f32 %v66, %v67
  %v69 = vsel %vm47, %v39, 0.0
  %v70 = vsel %vm47, %v40, 0.0
  %v71 = vadd.f32 %v69, %v70
  %v72 = vsel %vm47, %v41, 0.0
  %v73 = vadd.f32 %v71, %v72
  %v74 = vsel %vm47, %v42, 0.0
  %v75 = vadd.f32 %v73, %v74
  %v76 = vsel %vm47, %v43, 0.0
  %v77 = vadd.f32 %v75, %v76
  %v78 = vsel %vm47, %v44, 0.0
  %v79 = vadd.f32 %v77, %v78
  %v80 = vsel %vm47, %v45, 0.0
  %v81 = vadd.f32 %v79, %v80
  %v82 = vsel %vm47, %v46, 0.0
  %v83 = vadd.f32 %v81, %v82
  %v84 = vrot.slane %v83, 4
  %v85 = vadd.f32 %v83, %v84
  %v86 = vrot.slane %v85, 2
  %v87 = vadd.f32 %v85, %v86
  %v88 = vrot.slane %v87, 1
  %v89 = vadd.f32 %v87, %v88
  %vm92 = vcmask 1041409
  %v93 = vsel %vm92, %v89, %v68
  %v95 = vadd.f32 %v14, %v93
  %vm96 = vcmask 123904
  %97 = vst.msk [vmem:[#allocation2] sm:$0x3] %vm96, %v95
  // Predicated region
  $region10: #{_lambda_.22} parent=0 // pred_check
    %p98 = pneg %p8
  $region11: #{_lambda_.22} parent=0 // pred_check_branch
    %100 = sbr.rel (%p98) target = $region13
  $region12: #{_lambda_.22} parent=0 // pred_region
    %v101 = vld [vmem:[#allocation2] sm:$0x3]
    %v102 = vmul.f32 %v101, 0.015625
    %103 = vst.msk [vmem:[%s1] sm:$0x3] %vm96, %v102
  $region13: #{_lambda_.22} parent=0 // pred_fallthru
    _
  // Predicated region
  $region14: #{_lambda_.22} parent=0 // pred_check
    _
  $region15: #{_lambda_.22} parent=0 // pred_check_branch
    %105 = sbr.rel (0) target = $region17
  $region16: #{_lambda_.22} parent=0 // pred_region
    _
  $region17: #{_lambda_.22} parent=0 // pred_fallthru
    _
  // Predicated region
  $region18: #{_lambda_.22} parent=0 // pred_check
    _
  $region19: #{_lambda_.22} parent=0 // pred_check_branch
    %107 = sbr.rel (0) target = $region21
  $region20: #{_lambda_.22} parent=0 // pred_region
    _
  $region21: #{_lambda_.22} parent=0 // pred_fallthru
    _

// kernel: _lambda_.21
$region0: #{_lambda_.21}
  #allocation0 [shape = 'u32[]', space=smem, size = 0x4, offset = 0x4, fixed_abs, tag = 'smem constant byte address 0x4 - core index']
  #allocation1 [shape = 'u32[144,128]{1,0:T(1,128)}', space=vmem, size = 0x12000, scoped, tag = 'internal scratch']
  %s0 = inlined_call_operand.vmem [shape: bf16[128,144], index: 0, kind: input, shape index: {}]
  %s1 = inlined_call_operand.vmem [shape: bf16[144,16], index: 1, kind: input, shape index: {}]
  %s2 = inlined_call_operand.vmem [shape: f32[128,16], index: 2, kind: input, shape index: {}]
  %s3 = inlined_call_operand.vmem [shape: f32[1,16], index: 3, kind: input, shape index: {}]
  %s4 = inlined_call_operand.vmem [shape: f32[1,16], index: 4, kind: input, shape index: {}]
  %s5 = inlined_call_operand.hbm [shape: f32[128,16], index: 5, kind: output, shape index: {0}]
  %s6 = inlined_call_operand.vmem [shape: bf16[128,16], index: 6, kind: output, shape index: {1}]
  %7 = xla_tuple %s5, %s6
  %s8 = sld [smem:[#allocation0]]
  $region61: #{_lambda_.21} parent=0
    _
  %s10 = ssub.s32 1, %s8
  %s11 = scalar_select 0, %s10, %s8
  $region1: #{_lambda_.21} parent=0
    #allocation2 [shape = 'u8[65536]{0}', space=vmem, size = 0x10000, scoped, tag = 'output window, operand 0']
    #allocation3 [shape = 's32[2]{0}', space=sflag, size = 0x8, scoped, tag = 'scoped memory for _lambda_.21']
    %12 = vsyncpa [#allocation3], 0
    %s13 = scalar_lea.sflag [#allocation3], 1
    %14 = vsyncpa %s13, 0
    loop: start=0, step=1, limit=4
    $region2: #{_lambda_.21} parent=1 // loop_pre_header
      _
    $region3: #{_lambda_.21} parent=1 // loop_header
      %s16 = sphi 0, %s20
      %p17 = scmp.ge.s32.totalorder %s16, 4
      %s26 = sphi 0, %s28
      %s29 = sphi 0, %s26
      %s30 = sphi 0, %s29
      %s46 = sphi 0, %s30
      %s50 = sphi 0, %s50
      %s52 = sphi 0, %s50
      %s53 = sphi 0, %s52
      %s67 = sphi 0, %s53
      %s73 = sphi 0, %s75
      %s76 = sphi 0, %s73
      %s77 = sphi 0, %s76
      %s93 = sphi 0, %s77
      %s97 = sphi 0, %s97
      %s99 = sphi 0, %s97
      %s100 = sphi 0, %s99
      %s114 = sphi 0, %s100
      %s118 = sphi 0, %s118
      %s120 = sphi 0, %s118
      %s121 = sphi 0, %s120
      %s135 = sphi 0, %s121
      %s141 = sphi 0, %s143
      %s144 = sphi 0, %s141
      %s145 = sphi 0, %s144
      %s161 = sphi 0, %s145
      %s167 = sphi 0, %s169
      %s170 = sphi 0, %s167
      %s171 = sphi 0, %s170
      %s187 = sphi 0, %s171
    $region4: #{_lambda_.21} parent=1 // loop_header_branch
      %19 = sbr.rel (%p17) target = $region8
    $region5: #{_lambda_.21} parent=1 // loop_body
      %s21 = ssub.s32 %s16, 1
      %s22 = ssub.s32 %s16, 2
      %s23 = sadd.s32 %s16, 1
      %s24 = ssub.s32 %s16, %s23
      %p25 = scmp.eq.s32.totalorder %s24, 0
      %s27 = sadd.s32 %s26, 1
      %s28 = scalar_select %p25, %s26, %s27
      %p31 = pneg %p25
      %p32 = scmp.eq.s32.totalorder %s16, 1
      %p33 = por %p31, %p32
      %p34 = scmp.ne.s32.totalorder %s26, %s29
      %p35 = scmp.eq.s32.totalorder %s16, 0
      %p36 = por %p34, %p35
      %p37 = scmp.ne.s32.totalorder %s26, %s29
      %p38 = scmp.eq.s32.totalorder %s21, 1
      %p39 = por %p37, %p38
      %p40 = scmp.ne.s32.totalorder %s29, %s30
      %p41 = scmp.eq.s32.totalorder %s21, 0
      %p42 = por %p40, %p41
      %p43 = scmp.ne.s32.totalorder %s29, %s30
      %p44 = scmp.eq.s32.totalorder %s22, 1
      %p45 = por %p43, %p44
      %p47 = scmp.ne.s32.totalorder %s30, %s46
      %p48 = scmp.eq.s32.totalorder %s22, 0
      %p49 = por %p47, %p48
      %s51 = sadd.s32 %s50, 1
      %p54 = scmp.eq.s32.totalorder %s16, 1
      %p55 = scmp.ne.s32.totalorder %s50, %s52
      %p56 = scmp.eq.s32.totalorder %s16, 0
      %p57 = por %p55, %p56
      %p58 = scmp.ne.s32.totalorder %s50, %s52
      %p59 = scmp.eq.s32.totalorder %s21, 1
      %p60 = por %p58, %p59
      %p61 = scmp.ne.s32.totalorder %s52, %s53
      %p62 = scmp.eq.s32.totalorder %s21, 0
      %p63 = por %p61, %p62
      %p64 = scmp.ne.s32.totalorder %s52, %s53
      %p65 = scmp.eq.s32.totalorder %s22, 1
      %p66 = por %p64, %p65
      %p68 = scmp.ne.s32.totalorder %s53, %s67
      %p69 = scmp.eq.s32.totalorder %s22, 0
      %p70 = por %p68, %p69
      %s71 = ssub.s32 %s16, %s23
      %p72 = scmp.eq.s32.totalorder %s71, 0
      %s74 = sadd.s32 %s73, 1
      %s75 = scalar_select %p72, %s73, %s74
      %p78 = pneg %p72
      %p79 = scmp.eq.s32.totalorder %s16, 1
      %p80 = por %p78, %p79
      %p81 = scmp.ne.s32.totalorder %s73, %s76
      %p82 = scmp.eq.s32.totalorder %s16, 0
      %p83 = por %p81, %p82
      %p84 = scmp.ne.s32.totalorder %s73, %s76
      %p85 = scmp.eq.s32.totalorder %s21, 1
      %p86 = por %p84, %p85
      %p87 = scmp.ne.s32.totalorder %s76, %s77
      %p88 = scmp.eq.s32.totalorder %s21, 0
      %p89 = por %p87, %p88
      %p90 = scmp.ne.s32.totalorder %s76, %s77
      %p91 = scmp.eq.s32.totalorder %s22, 1
      %p92 = por %p90, %p91
      %p94 = scmp.ne.s32.totalorder %s77, %s93
      %p95 = scmp.eq.s32.totalorder %s22, 0
      %p96 = por %p94, %p95
      %s98 = sadd.s32 %s97, 1
      %p101 = scmp.eq.s32.totalorder %s16, 1
      %p102 = scmp.ne.s32.totalorder %s97, %s99
      %p103 = scmp.eq.s32.totalorder %s16, 0
      %p104 = por %p102, %p103
      %p105 = scmp.ne.s32.totalorder %s97, %s99
      %p106 = scmp.eq.s32.totalorder %s21, 1
      %p107 = por %p105, %p106
      %p108 = scmp.ne.s32.totalorder %s99, %s100
      %p109 = scmp.eq.s32.totalorder %s21, 0
      %p110 = por %p108, %p109
      %p111 = scmp.ne.s32.totalorder %s99, %s100
      %p112 = scmp.eq.s32.totalorder %s22, 1
      %p113 = por %p111, %p112
      %p115 = scmp.ne.s32.totalorder %s100, %s114
      %p116 = scmp.eq.s32.totalorder %s22, 0
      %p117 = por %p115, %p116
      %s119 = sadd.s32 %s118, 1
      %p122 = scmp.eq.s32.totalorder %s16, 1
      %p123 = scmp.ne.s32.totalorder %s118, %s120
      %p124 = scmp.eq.s32.totalorder %s16, 0
      %p125 = por %p123, %p124
      %p126 = scmp.ne.s32.totalorder %s118, %s120
      %p127 = scmp.eq.s32.totalorder %s21, 1
      %p128 = por %p126, %p127
      %p129 = scmp.ne.s32.totalorder %s120, %s121
      %p130 = scmp.eq.s32.totalorder %s21, 0
      %p131 = por %p129, %p130
      %p132 = scmp.ne.s32.totalorder %s120, %s121
      %p133 = scmp.eq.s32.totalorder %s22, 1
      %p134 = por %p132, %p133
      %p136 = scmp.ne.s32.totalorder %s121, %s135
      %p137 = scmp.eq.s32.totalorder %s22, 0
      %p138 = por %p136, %p137
      %s139 = ssub.s32 %s16, %s23
      %p140 = scmp.eq.s32.totalorder %s139, 0
      %s142 = sadd.s32 %s141, 1
      %s143 = scalar_select %p140, %s141, %s142
      %p146 = pneg %p140
      %p147 = scmp.eq.s32.totalorder %s16, 1
      %p148 = por %p146, %p147
      %p149 = scmp.ne.s32.totalorder %s141, %s144
      %p150 = scmp.eq.s32.totalorder %s16, 0
      %p151 = por %p149, %p150
      %p152 = scmp.ne.s32.totalorder %s141, %s144
      %p153 = scmp.eq.s32.totalorder %s21, 1
      %p154 = por %p152, %p153
      %p155 = scmp.ne.s32.totalorder %s144, %s145
      %p156 = scmp.eq.s32.totalorder %s21, 0
      %p157 = por %p155, %p156
      %p158 = scmp.ne.s32.totalorder %s144, %s145
      %p159 = scmp.eq.s32.totalorder %s22, 1
      %p160 = por %p158, %p159
      %p162 = scmp.ne.s32.totalorder %s145, %s161
      %p163 = scmp.eq.s32.totalorder %s22, 0
      %p164 = por %p162, %p163
      %s165 = ssub.s32 %s16, %s23
      %p166 = scmp.eq.s32.totalorder %s165, 0
      %s168 = sadd.s32 %s167, 1
      %s169 = scalar_select %p166, %s167, %s168
      %p172 = pneg %p166
      %p173 = scmp.eq.s32.totalorder %s16, 1
      %p174 = por %p172, %p173
      %p175 = scmp.ne.s32.totalorder %s167, %s170
      %p176 = scmp.eq.s32.totalorder %s16, 0
      %p177 = por %p175, %p176
      %p178 = scmp.ne.s32.totalorder %s167, %s170
      %p179 = scmp.eq.s32.totalorder %s21, 1
      %p180 = por %p178, %p179
      %p181 = scmp.ne.s32.totalorder %s170, %s171
      %p182 = scmp.eq.s32.totalorder %s21, 0
      %p183 = por %p181, %p182
      %p184 = scmp.ne.s32.totalorder %s170, %s171
      %p185 = scmp.eq.s32.totalorder %s22, 1
      %p186 = por %p184, %p185
      %p188 = scmp.ne.s32.totalorder %s171, %s187
      %p189 = scmp.eq.s32.totalorder %s22, 0
      %p190 = por %p188, %p189
      %p191 = scmp.le.s32.totalorder 1, %s16
      %p192 = scmp.lt.s32.totalorder %s16, 3
      %p193 = pnand %p191, %p192
      %p194 = pneg %p193
      // Predicated region
      $region9: #{_lambda_.21} parent=5 // pred_check
        _
      $region10: #{_lambda_.21} parent=5 // pred_check_branch
        %196 = sbr.rel (%p193) target = $region12
      $region11: #{_lambda_.21} parent=5 // pred_region
        %s197 = ssub.s32 %s16, 1
        // Predicated region
        $region13: #{_lambda_.21} parent=11 // pred_check
          %p198 = pneg %p63
        $region14: #{_lambda_.21} parent=11 // pred_check_branch
          %200 = sbr.rel (%p198) target = $region16
        $region15: #{_lambda_.21} parent=11 // pred_region
          _
        $region16: #{_lambda_.21} parent=11 // pred_fallthru
          _
        // Predicated region
        $region17: #{_lambda_.21} parent=11 // pred_check
          %p201 = pneg %p110
        $region18: #{_lambda_.21} parent=11 // pred_check_branch
          %203 = sbr.rel (%p201) target = $region20
        $region19: #{_lambda_.21} parent=11 // pred_region
          _
        $region20: #{_lambda_.21} parent=11 // pred_fallthru
          _
        // Predicated region
        $region21: #{_lambda_.21} parent=11 // pred_check
          %p204 = pneg %p131
        $region22: #{_lambda_.21} parent=11 // pred_check_branch
          %206 = sbr.rel (%p204) target = $region24
        $region23: #{_lambda_.21} parent=11 // pred_region
          _
        $region24: #{_lambda_.21} parent=11 // pred_fallthru
          _
      $region12: #{_lambda_.21} parent=5 // pred_fallthru
        _
      %p207 = scmp.lt.s32.totalorder %s16, 2
      // Predicated region
      $region25: #{_lambda_.21} parent=5 // pred_check
        %p208 = pneg %p207
      $region26: #{_lambda_.21} parent=5 // pred_check_branch
        %210 = sbr.rel (%p208) target = $region28
      $region27: #{_lambda_.21} parent=5 // pred_region
        // Predicated region
        $region29: #{_lambda_.21} parent=27 // pred_check
          %p211 = pneg %p36
        $region30: #{_lambda_.21} parent=27 // pred_check_branch
          %213 = sbr.rel (%p211) target = $region32
        $region31: #{_lambda_.21} parent=27 // pred_region
          %s214 = smul.u32 8, %s16
          %p215 = scmp.lt.s32.totalorder %s214, 15
          %s216 = scalar_select %p215, %s214, 15
          %s217 = smul.addr %s216, 2
          %s218 = smul.addr %s217, 4
          %s219 = scalar_lea.vmem %s0, %s218
          %s220 = smul.u32 8, %s16
        $region32: #{_lambda_.21} parent=27 // pred_fallthru
          _
        // Predicated region
        $region33: #{_lambda_.21} parent=27 // pred_check
          %p221 = pneg %p83
        $region34: #{_lambda_.21} parent=27 // pred_check_branch
          %223 = sbr.rel (%p221) target = $region36
        $region35: #{_lambda_.21} parent=27 // pred_region
          %s224 = smul.u32 8, %s16
          %p225 = scmp.lt.s32.totalorder %s224, 15
          %s226 = scalar_select %p225, %s224, 15
          %s227 = smul.addr %s226, 8
          %s228 = scalar_lea.vmem %s2, %s227
          %s229 = smul.u32 8, %s16
        $region36: #{_lambda_.21} parent=27 // pred_fallthru
          _
      $region28: #{_lambda_.21} parent=5 // pred_fallthru
        _
      %p230 = scmp.le.s32.totalorder 1, %s16
      %p231 = scmp.lt.s32.totalorder %s16, 3
      %p232 = pnand %p230, %p231
      %p233 = pneg %p232
      // Predicated region
      $region37: #{_lambda_.21} parent=5 // pred_check
        _
      $region38: #{_lambda_.21} parent=5 // pred_check_branch
        %235 = sbr.rel (%p232) target = $region40
      $region39: #{_lambda_.21} parent=5 // pred_region
        %s236 = ssub.s32 %s16, 1
        %s237 = smul.u32 8, %s21
        %p238 = scmp.lt.s32.totalorder %s237, 15
        %s239 = scalar_select %p238, %s237, 15
        %s240 = smul.addr %s239, 2
        %s241 = smul.addr %s240, 4
        %s242 = scalar_lea.vmem %s0, %s241
        %p243 = pneg %p42
        %p244 = pneg %p39
        %p245 = pneg %p63
        %p246 = pneg %p60
        %s247 = smul.u32 8, %s21
        %p248 = scmp.lt.s32.totalorder %s247, 15
        %s249 = scalar_select %p248, %s247, 15
        %s250 = smul.addr %s249, 8
        %s251 = scalar_lea.vmem %s2, %s250
        %p252 = pneg %p89
        %p253 = pneg %p86
        %p254 = pneg %p110
        %p255 = pneg %p107
        %p256 = pneg %p131
        %p257 = pneg %p128
        %p258 = pneg %p157
        %p259 = pneg %p154
        %s260 = sand.u32 %s144, 1
        %s261 = scalar_lea.sflag [#allocation3], %s260
        %s262 = sand.u32 %s144, 1
        %s263 = smul.addr %s262, 64
        %s264 = scalar_lea.vmem [#allocation2], %s263
        %p265 = pneg %p183
        %p266 = pneg %p180
        %s267 = smul.u32 8, %s21
        %p268 = scmp.lt.s32.totalorder %s267, 15
        %s269 = scalar_select %p268, %s267, 15
        %s270 = smul.addr %s269, 4
        %s271 = scalar_lea.vmem %s6, %s270
        %s272 = smul.u32 8, %s21
        %p273 = scmp.lt.s32.totalorder %s272, 15
        %s274 = scalar_select %p273, %s272, 15
        %s275 = smul.addr %s274, 2
        %s276 = smul.addr %s275, 4
        %s277 = scalar_lea.vmem %s0, %s276
        %s278 = smul.u32 8, %s21
        %s279 = smul.u32 8, %s21
        %p280 = scmp.lt.s32.totalorder %s279, 15
        %s281 = scalar_select %p280, %s279, 15
        %s282 = smul.addr %s281, 8
        %s283 = scalar_lea.vmem %s2, %s282
        %s284 = smul.u32 8, %s21
        %s285 = smul.u32 8, %s21
        %s286 = smul.u32 8, %s21
        %p287 = scmp.lt.s32.totalorder %s286, 15
        %s288 = scalar_select %p287, %s286, 15
        %s289 = smul.addr %s288, 4
        %s290 = scalar_lea.vmem %s6, %s289
        %s291 = smul.u32 8, %s21
        %v293 = vld [vmem:[%s277] sm:$0xff]
        %v294 = vld [vmem:[%s277 + $0x8] sm:$0xff]
        %v295 = vld [vmem:[%s277 + $0x10] sm:$0xff]
        %v296 = vld [vmem:[%s277 + $0x18] sm:$0xff]
        %v297 = vld [vmem:[%s277 + $0x20] sm:$0xff]
        %v298 = vld [vmem:[%s277 + $0x28] sm:$0xff]
        %v299 = vld [vmem:[%s277 + $0x30] sm:$0xff]
        %v300 = vld [vmem:[%s277 + $0x38] sm:$0xff]
        %v301 = vld [vmem:[%s1] sm:$0xf]
        %v302 = vld [vmem:[%s1 + $0x4] sm:$0xf]
        %v303 = vld [vmem:[%s1 + $0x8] sm:$0xf]
        %v304 = vld [vmem:[%s1 + $0xc] sm:$0xf]
        %v305 = vld [vmem:[%s1 + $0x10] sm:$0xf]
        %v306 = vld [vmem:[%s1 + $0x14] sm:$0xf]
        %v307 = vld [vmem:[%s1 + $0x18] sm:$0xf]
        %v308 = vld [vmem:[%s1 + $0x1c] sm:$0xf]
        %v309 = vld [vmem:[%s1 + $0x20] sm:$0xf]
        %v310 = vld [vmem:[%s1 + $0x24] sm:$0xf]
        %v311 = vld [vmem:[%s1 + $0x28] sm:$0xf]
        %v312 = vld [vmem:[%s1 + $0x2c] sm:$0xf]
        %v313 = vld [vmem:[%s1 + $0x30] sm:$0xf]
        %v314 = vld [vmem:[%s1 + $0x34] sm:$0xf]
        %v315 = vld [vmem:[%s1 + $0x38] sm:$0xf]
        %v316 = vld [vmem:[%s1 + $0x3c] sm:$0xf]
        %v317 = vld [vmem:[%s1 + $0x40] sm:$0xf]
        %v318 = vld [vmem:[%s1 + $0x44] sm:$0xf]
        %v319 = vld [vmem:[%s283] sm:$0xff]
        %v320 = vld [vmem:[%s283 + $0x8] sm:$0xff]
        %v321 = vld [vmem:[%s283 + $0x10] sm:$0xff]
        %v322 = vld [vmem:[%s283 + $0x18] sm:$0xff]
        %v323 = vld [vmem:[%s283 + $0x20] sm:$0xff]
        %v324 = vld [vmem:[%s283 + $0x28] sm:$0xff]
        %v325 = vld [vmem:[%s283 + $0x30] sm:$0xff]
        %v326 = vld [vmem:[%s283 + $0x38] sm:$0xff]
        %v335 = vunpack.c.l.b16 %v293
        %v336 = vunpack.c.h.b16 %v293
        %v337 = vunpack.c.l.b16 %v294
        %v338 = vunpack.c.h.b16 %v294
        %v339 = vunpack.c.l.b16 %v295
        %v340 = vunpack.c.h.b16 %v295
        %v341 = vunpack.c.l.b16 %v296
        %v342 = vunpack.c.h.b16 %v296
        %v343 = vunpack.c.l.b16 %v297
        %v344 = vunpack.c.h.b16 %v297
        %v345 = vunpack.c.l.b16 %v298
        %v346 = vunpack.c.h.b16 %v298
        %v347 = vunpack.c.l.b16 %v299
        %v348 = vunpack.c.h.b16 %v299
        %v349 = vunpack.c.l.b16 %v300
        %v350 = vunpack.c.h.b16 %v300
        %v351 = vpack.c.b16 %v337, %v335
        %v352 = vpack.c.b16 %v338, %v336
        %v353 = vpack.c.b16 %v341, %v339
        %v354 = vpack.c.b16 %v342, %v340
        %v355 = vpack.c.b16 %v345, %v343
        %v356 = vpack.c.b16 %v346, %v344
        %v357 = vpack.c.b16 %v349, %v347
        %v358 = vpack.c.b16 %v350, %v348
        %v381 = vunpack.c.l.b16 %v301
        %v382 = vunpack.c.l.b16 %v302
        %v383 = vunpack.c.l.b16 %v303
        %v384 = vunpack.c.l.b16 %v304
        %v385 = vunpack.c.l.b16 %v305
        %v386 = vunpack.c.l.b16 %v306
        %v387 = vunpack.c.l.b16 %v307
        %v388 = vunpack.c.l.b16 %v308
        %v389 = vunpack.c.l.b16 %v309
        %v390 = vunpack.c.l.b16 %v310
        %v391 = vunpack.c.l.b16 %v311
        %v392 = vunpack.c.l.b16 %v312
        %v393 = vunpack.c.l.b16 %v313
        %v394 = vunpack.c.l.b16 %v314
        %v395 = vunpack.c.l.b16 %v315
        %v396 = vunpack.c.l.b16 %v316
        %v397 = vunpack.c.l.b16 %v317
        %v398 = vunpack.c.l.b16 %v318
        %v399 = vpack.c.b16 %v382, %v381
        %v400 = vpack.c.b16 %v384, %v383
        %v401 = vpack.c.b16 %v386, %v385
        %v402 = vpack.c.b16 %v388, %v387
        %v403 = vpack.c.b16 %v390, %v389
        %v404 = vpack.c.b16 %v392, %v391
        %v405 = vpack.c.b16 %v394, %v393
        %v406 = vpack.c.b16 %v396, %v395
        %v407 = vpack.c.b16 %v398, %v397
        %vm417 = vcmask 130048
        %v419 = vsel %vm417, %v352, 0
        %v422 = vsel %vm417, %v354, 0
        %v425 = vsel %vm417, %v356, 0
        %v428 = vsel %vm417, %v358, 0
        %430 = vmatprep.subr.bf16.mxu0 0
        %431 = vmatpush1.bf16.msra.mxu0 %v399
        %432 = vmatprep.subr.bf16.mxu0 0
        %433 = vmatpush1.bf16.msra.mxu0 %v400
        %434 = vmatprep.subr.bf16.mxu0 0
        %435 = vmatpush1.bf16.msra.mxu0 %v401
        %436 = vmatprep.subr.bf16.mxu0 0
        %437 = vmatpush1.bf16.msra.mxu0 %v402
        %438 = vmatprep.subr.bf16.mxu0 0
        %439 = vmatpush1.bf16.msra.mxu0 %v403
        %440 = vmatprep.subr.bf16.mxu0 0
        %441 = vmatpush1.bf16.msra.mxu0 %v404
        %442 = vmatprep.subr.bf16.mxu0 0
        %443 = vmatpush1.bf16.msra.mxu0 %v405
        %444 = vmatprep.subr.bf16.mxu0 0
        %445 = vmatpush1.bf16.msra.mxu0 %v406
        %446 = vmatprep.subr.bf16.mxu0 0
        %447 = vmatpush1.bf16.msra.mxu0 %v407
        %448 = vmatprep.subr.bf16.mxu0 0
        %449 = vmatpush1.bf16.msra.mxu0 0
        %450 = vmatprep.subr.bf16.mxu0 0
        %451 = vmatpush1.bf16.msra.mxu0 0
        %452 = vmatprep.subr.bf16.mxu0 0
        %453 = vmatpush1.bf16.msra.mxu0 0
        %454 = vmatprep.subr.bf16.mxu0 0
        %455 = vmatpush1.bf16.msra.mxu0 0
        %456 = vmatprep.subr.bf16.mxu0 0
        %457 = vmatpush1.bf16.msra.mxu0 0
        %458 = vmatprep.subr.bf16.mxu0 0
        %459 = vmatpush1.bf16.msra.mxu0 0
        %460 = vmatprep.subr.bf16.mxu0 0
        %461 = vmatpush1.bf16.msra.mxu0 0
        %462 = vmatprep.mubr.bf16.mxu0 %v419
        %463 = vmatmul.mubr.bf16.gmra.mrb[0].mxu0 %v351
        %v464 = vpop.f32.mrb[0].mxu0
        %v465 = vadd.f32 %v319, %v464
        %v466 = vpop.f32.mrb[0].mxu0
        %v467 = vpop.f32.mrb[0].mxu0
        %v468 = vadd.f32 %v320, %v467
        %v469 = vpop.f32.mrb[0].mxu0
        %470 = vmatprep.mubr.bf16.mxu0 %v422
        %471 = vmatmul.mubr.bf16.gmra.mrb[0].mxu0 %v353
        %v472 = vpop.f32.mrb[0].mxu0
        %v473 = vadd.f32 %v321, %v472
        %v474 = vpop.f32.mrb[0].mxu0
        %v475 = vpop.f32.mrb[0].mxu0
        %v476 = vadd.f32 %v322, %v475
        %v477 = vpop.f32.mrb[0].mxu0
        %478 = vmatprep.mubr.bf16.mxu0 %v425
        %479 = vmatmul.mubr.bf16.gmra.mrb[0].mxu0 %v355
        %v480 = vpop.f32.mrb[0].mxu0
        %v481 = vadd.f32 %v323, %v480
        %v482 = vpop.f32.mrb[0].mxu0
        %v483 = vpop.f32.mrb[0].mxu0
        %v484 = vadd.f32 %v324, %v483
        %v485 = vpop.f32.mrb[0].mxu0
        %486 = vmatprep.mubr.bf16.mxu0 %v428
        %487 = vmatmul.mubr.bf16.gmra.mrb[0].mxu0 %v357
        %v488 = vpop.f32.mrb[0].mxu0
        %v489 = vadd.f32 %v325, %v488
        %v490 = vpop.f32.mrb[0].mxu0
        %v491 = vpop.f32.mrb[0].mxu0
        %v492 = vadd.f32 %v326, %v491
        %v493 = vpop.f32.mrb[0].mxu0
        %494 = vdwg.mxu0
        %495 = vst.msk [vmem:[%s264] sm:$0xff] %vm417, %v465
        %496 = vst.msk [vmem:[%s264 + $0x8] sm:$0xff] %vm417, %v468
        %497 = vst.msk [vmem:[%s264 + $0x10] sm:$0xff] %vm417, %v473
        %498 = vst.msk [vmem:[%s264 + $0x18] sm:$0xff] %vm417, %v476
        %499 = vst.msk [vmem:[%s264 + $0x20] sm:$0xff] %vm417, %v481
        %500 = vst.msk [vmem:[%s264 + $0x28] sm:$0xff] %vm417, %v484
        %501 = vst.msk [vmem:[%s264 + $0x30] sm:$0xff] %vm417, %v489
        %502 = vst.msk [vmem:[%s264 + $0x38] sm:$0xff] %vm417, %v492
        %v503 = vld [vmem:[%s3] sm:$0x1]
        %v505 = vlaneseq
        %v506 = vshrl.u32 %v505, 7
        %v507 = vsub.s32 0, %v506
        %v508 = vrot.slane %v503, %v507
        %v510 = vmul.f32 %v465, %v508
        %v511 = vmul.f32 %v468, %v508
        %v512 = vmul.f32 %v473, %v508
        %v513 = vmul.f32 %v476, %v508
        %v514 = vmul.f32 %v481, %v508
        %v515 = vmul.f32 %v484, %v508
        %v516 = vmul.f32 %v489, %v508
        %v517 = vmul.f32 %v492, %v508
        %v518 = vld [vmem:[%s4] sm:$0x1]
        %v520 = vlaneseq
        %v521 = vshrl.u32 %v520, 7
        %v522 = vsub.s32 0, %v521
        %v523 = vrot.slane %v518, %v522
        %v525 = vadd.f32 %v510, %v523
        %v526 = vadd.f32 %v511, %v523
        %v527 = vadd.f32 %v512, %v523
        %v528 = vadd.f32 %v513, %v523
        %v529 = vadd.f32 %v514, %v523
        %v530 = vadd.f32 %v515, %v523
        %v531 = vadd.f32 %v516, %v523
        %v532 = vadd.f32 %v517, %v523
        %v533 = vmax.f32 %v525, 0.0
        %v534 = vmax.f32 %v526, 0.0
        %v535 = vmax.f32 %v527, 0.0
        %v536 = vmax.f32 %v528, 0.0
        %v537 = vmax.f32 %v529, 0.0
        %v538 = vmax.f32 %v530, 0.0
        %v539 = vmax.f32 %v531, 0.0
        %v540 = vmax.f32 %v532, 0.0
        %v541 = vpack.c.bf16 %v534, %v533
        %v542 = vpack.c.bf16 %v536, %v535
        %v543 = vpack.c.bf16 %v538, %v537
        %v544 = vpack.c.bf16 %v540, %v539
        %v549 = vunpack.c.l.b16 %v541
        %v550 = vunpack.c.h.b16 %v541
        %v551 = vunpack.c.l.b16 %v542
        %v552 = vunpack.c.h.b16 %v542
        %v553 = vunpack.c.l.b16 %v543
        %v554 = vunpack.c.h.b16 %v543
        %v555 = vunpack.c.l.b16 %v544
        %v556 = vunpack.c.h.b16 %v544
        %v557 = vpack.c.b16 %v549, %v549
        %v558 = vpack.c.b16 %v550, %v550
        %v559 = vpack.c.b16 %v551, %v551
        %v560 = vpack.c.b16 %v552, %v552
        %v561 = vpack.c.b16 %v553, %v553
        %v562 = vpack.c.b16 %v554, %v554
        %v563 = vpack.c.b16 %v555, %v555
        %v564 = vpack.c.b16 %v556, %v556
        %vm573 = vcmask 125952
        %574 = vst.msk [vmem:[%s290] sm:$0xf] %vm573, %v557
        %575 = vst.msk [vmem:[%s290 + $0x4] sm:$0xf] %vm573, %v558
        %576 = vst.msk [vmem:[%s290 + $0x8] sm:$0xf] %vm573, %v559
        %577 = vst.msk [vmem:[%s290 + $0xc] sm:$0xf] %vm573, %v560
        %578 = vst.msk [vmem:[%s290 + $0x10] sm:$0xf] %vm573, %v561
        %579 = vst.msk [vmem:[%s290 + $0x14] sm:$0xf] %vm573, %v562
        %580 = vst.msk [vmem:[%s290 + $0x18] sm:$0xf] %vm573, %v563
        %581 = vst.msk [vmem:[%s290 + $0x1c] sm:$0xf] %vm573, %v564
        %s582 = sand.u32 %s144, 1
        %s583 = scalar_lea.sflag [#allocation3], %s582
        %s584 = sand.u32 %s144, 1
        %s585 = smul.addr %s584, 64
        %s586 = scalar_lea.vmem [#allocation2], %s585
        %s587 = smul.u32 8, %s21
        %p588 = scmp.lt.s32.totalorder %s587, 15
        %s589 = scalar_select %p588, %s587, 15
        %s590 = smul.addr %s589, 4
        %s591 = scalar_lea.vmem %s6, %s590
        // Predicated region
        $region41: #{_lambda_.21} parent=39 // pred_check
          %p592 = pneg %p154
        $region42: #{_lambda_.21} parent=39 // pred_check_branch
          %594 = sbr.rel (%p592) target = $region44
        $region43: #{_lambda_.21} parent=39 // pred_region
          %s595 = smul.u32 8, %s21
          %s597 = ssub.s32 1024, 1024
          %598 = vsyncadd %s583, %s597
          %s599 = smul.addr %s595, 128
          %s600 = scalar_lea.hbm %s5, %s599
          %s601 = sshll.u32 %s586, 4
          %s602 = int_to_ptr.vmem [resolvable:$true] %s601
          %607 = dma.vmem_to_hbm [thread:$0]  %s602, 1024, %s600, %s583, 128, 128, 8
        $region44: #{_lambda_.21} parent=39 // pred_fallthru
          _
        // Predicated region
        $region45: #{_lambda_.21} parent=39 // pred_check
          %p608 = pneg %p180
        $region46: #{_lambda_.21} parent=39 // pred_check_branch
          %610 = sbr.rel (%p608) target = $region48
        $region47: #{_lambda_.21} parent=39 // pred_region
          %s611 = smul.u32 8, %s21
        $region48: #{_lambda_.21} parent=39 // pred_fallthru
          _
      $region40: #{_lambda_.21} parent=5 // pred_fallthru
        _
      %p612 = scmp.le.s32.totalorder 2, %s16
      // Predicated region
      $region49: #{_lambda_.21} parent=5 // pred_check
        %p613 = pneg %p612
      $region50: #{_lambda_.21} parent=5 // pred_check_branch
        %615 = sbr.rel (%p613) target = $region52
      $region51: #{_lambda_.21} parent=5 // pred_region
        %s616 = ssub.s32 %s16, 2
        // Predicated region
        $region53: #{_lambda_.21} parent=51 // pred_check
          %p617 = pneg %p160
        $region54: #{_lambda_.21} parent=51 // pred_check_branch
          %619 = sbr.rel (%p617) target = $region56
        $region55: #{_lambda_.21} parent=51 // pred_region
          %s620 = sand.u32 %s145, 1
          %s621 = scalar_lea.sflag [#allocation3], %s620
          %s622 = sand.u32 %s145, 1
          %s623 = smul.addr %s622, 64
          %s624 = scalar_lea.vmem [#allocation2], %s623
          %625 = dma.done %s621, 1024
        $region56: #{_lambda_.21} parent=51 // pred_fallthru
          _
        // Predicated region
        $region57: #{_lambda_.21} parent=51 // pred_check
          %p626 = pneg %p186
        $region58: #{_lambda_.21} parent=51 // pred_check_branch
          %628 = sbr.rel (%p626) target = $region60
        $region59: #{_lambda_.21} parent=51 // pred_region
          %s629 = smul.u32 8, %s22
          %p630 = scmp.lt.s32.totalorder %s629, 15
          %s631 = scalar_select %p630, %s629, 15
          %s632 = smul.addr %s631, 4
          %s633 = scalar_lea.vmem %s6, %s632
        $region60: #{_lambda_.21} parent=51 // pred_fallthru
          _
      $region52: #{_lambda_.21} parent=5 // pred_fallthru
        _
    $region6: #{_lambda_.21} parent=1 // loop_footer
      %s20 = sadd.s32 1, %s16
    $region7: #{_lambda_.21} parent=1 // loop_footer_branch
      %15 = sbr.rel target = $region3
    $region8: #{_lambda_.21} parent=1 // loop_exit
      _
    %634 = vsyncpa [#allocation3], 1
    %s635 = scalar_lea.sflag [#allocation3], 1
    %636 = vsyncpa %s635, 1

</llo_original>
